<compile_context>
chip_gen: v5e
topology: v5e:2x2
jax: 0.10.0
libtpu: 0.0.40
codegen_flags: <defaults>
</compile_context>

<pallas_src>
import functools

import numpy as np
import jax
import jax.numpy as jnp
from jax.experimental import pallas as pl
from jax.experimental.pallas import tpu as pltpu

_LANE = 128
_SUBLANE = 8


def _ceil_to(n, m):
    return ((n + m - 1) // m) * m


def _gru_decode_kernel(T, Bp, L, Hp, *refs):
    # refs = [z2d, h0, (wx, wh, bx, bhn) * L, wfc, bfc,
    #         out (T*Bp, Ap), hT (L, Bp, Hp),
    #         gi_scratch (T*Bp, 3*Hp), x_scratch_a, x_scratch_b (T*Bp, Hp)]
    z_ref, h0_ref = refs[0], refs[1]
    layer_refs = refs[2:2 + 4 * L]
    wfc_ref = refs[2 + 4 * L]
    bfc_ref = refs[3 + 4 * L]
    out_ref = refs[4 + 4 * L]
    hT_ref = refs[5 + 4 * L]
    gi_ref = refs[6 + 4 * L]
    xa_ref = refs[7 + 4 * L]
    xb_ref = refs[8 + 4 * L]

    TB = T * Bp
    H3 = 3 * Hp
    Ap = out_ref.shape[1]
    x_slabs = [xa_ref, xb_ref]

    for l in range(L):
        wx_ref, wh_ref, bx_ref, bhn_ref = layer_refs[4 * l:4 * l + 4]

        # Hoisted input contribution for the whole layer: one batched matmul
        # (off the serial critical path).  Gate column blocks: [r | z | n_in].
        xin = z_ref[...] if l == 0 else x_slabs[(l - 1) % 2][...]
        gi_ref[...] = (
            jnp.dot(xin.astype(jnp.bfloat16), wx_ref[...],
                    preferred_element_type=jnp.float32)
            + jnp.broadcast_to(bx_ref[...], (TB, H3)))

        # Hoist per-layer recurrent weight load and bias broadcast.
        wh = wh_ref[...]                                   # (Hp, 3*Hp) bf16
        bhn_b = jnp.broadcast_to(bhn_ref[...], (Bp, Hp))   # b_hn, f32
        x_out = x_slabs[l % 2]
        h = h0_ref[l]                                      # (Bp, Hp) f32

        # Serial time recurrence: per-step critical path is one K=128 bf16
        # dot + one fused sigmoid + one tanh + a few VPU ops.
        for t in range(T):
            r0 = t * Bp                                    # sublane-aligned
            gi_t = gi_ref[r0:r0 + Bp, :]                   # (Bp, 3*Hp)
            gh = jnp.dot(h.astype(jnp.bfloat16), wh,
                         preferred_element_type=jnp.float32)
            rz = jax.nn.sigmoid(gi_t[:, 0:2 * Hp] + gh[:, 0:2 * Hp])
            r = rz[:, 0:Hp]
            zg = rz[:, Hp:2 * Hp]
            n = jnp.tanh(gi_t[:, 2 * Hp:H3] + r * (gh[:, 2 * Hp:H3] + bhn_b))
            h = (1.0 - zg) * n + zg * h
            x_out[r0:r0 + Bp, :] = h                       # tile-aligned vst

        hT_ref[l] = h

    # Batched lane-dense Linear head: one (T*Bp, Hp) @ (Hp, Ap) matmul.
    top = x_slabs[(L - 1) % 2][...]
    out_ref[...] = (
        jnp.dot(top.astype(jnp.bfloat16), wfc_ref[...],
                preferred_element_type=jnp.float32)
        + jnp.broadcast_to(bfc_ref[...], (TB, Ap)))


def prepare_decoder_params(params, latent_dim, hidden_size, n_layers,
                           len_alphabet):
    """Build padded / transposed / bf16 weights ONCE at model-load time.

    Returned pytree is passed straight to the jitted decode call, so the
    per-call path does zero weight preparation work.
    Layouts:
      wx[l]: (Kp, 3*Hp) bf16, gate column blocks [r | z | n_input]
      wh[l]: (Hp, 3*Hp) bf16, gate column blocks [r | z | n_hidden]
      bx[l]: (1, 3*Hp) f32   = [b_ir+b_hr | b_iz+b_hz | b_in]
      bhn[l]:(1, Hp)   f32   = b_hn (scaled by r inside the n gate)
      wfc:   (Hp, Ap)  bf16, bfc: (1, Ap) f32
    """
    H, L, A = hidden_size, n_layers, len_alphabet
    Hp = _ceil_to(H, _LANE)
    Dp = _ceil_to(latent_dim, _LANE)
    Ap = _ceil_to(A, _LANE)

    layers = []
    for l in range(L):
        w_ih, w_hh, b_ih, b_hh = params["layers"][l]
        k_in = latent_dim if l == 0 else H
        Kp = Dp if l == 0 else Hp
        # PyTorch gate row order in w_ih / w_hh / b_ih / b_hh is r, z, n.
        wx = jnp.zeros((Kp, 3 * Hp), jnp.float32)
        wx = wx.at[:k_in, 0:H].set(w_ih[0:H].T)                       # x -> r
        wx = wx.at[:k_in, Hp:Hp + H].set(w_ih[H:2 * H].T)             # x -> z
        wx = wx.at[:k_in, 2 * Hp:2 * Hp + H].set(w_ih[2 * H:3 * H].T)  # x -> n
        wh = jnp.zeros((Hp, 3 * Hp), jnp.float32)
        wh = wh.at[:H, 0:H].set(w_hh[0:H].T)                          # h -> r
        wh = wh.at[:H, Hp:Hp + H].set(w_hh[H:2 * H].T)                # h -> z
        wh = wh.at[:H, 2 * Hp:2 * Hp + H].set(w_hh[2 * H:3 * H].T)    # h -> n
        bx = jnp.zeros((1, 3 * Hp), jnp.float32)
        bx = bx.at[0, 0:H].set(b_ih[0:H] + b_hh[0:H])
        bx = bx.at[0, Hp:Hp + H].set(b_ih[H:2 * H] + b_hh[H:2 * H])
        bx = bx.at[0, 2 * Hp:2 * Hp + H].set(b_ih[2 * H:3 * H])
        bhn = jnp.zeros((1, Hp), jnp.float32).at[0, 0:H].set(b_hh[2 * H:3 * H])
        layers.append((wx.astype(jnp.bfloat16), wh.astype(jnp.bfloat16),
                       bx, bhn))

    w_fc, b_fc = params["fc"]
    wfc = (jnp.zeros((Hp, Ap), jnp.float32)
           .at[:H, :A].set(w_fc.T).astype(jnp.bfloat16))
    bfc = jnp.zeros((1, Ap), jnp.float32).at[0, :A].set(b_fc)

    prep = {"layers": layers, "fc": (wfc, bfc)}
    return jax.tree_util.tree_map(jnp.asarray, prep)


@functools.partial(jax.jit, static_argnums=(3,))
def vae_decode_pallas(z, hidden, prep, len_alphabet):
    """z: (T, B, D) f32, hidden: (L, B, H) f32 -> (decoded (T,B,A), hidden (L,B,H))."""
    T, B, D = z.shape
    L, _, H = hidden.shape
    A = len_alphabet

    Dp = prep["layers"][0][0].shape[0]
    Hp = prep["layers"][0][1].shape[0]
    Ap = prep["fc"][0].shape[1]
    Bp = _ceil_to(B, _SUBLANE)

    # Per-call activation padding only (a few KiB); weights are pre-built.
    z_p = jnp.pad(z.astype(jnp.float32),
                  ((0, 0), (0, Bp - B), (0, Dp - D))).reshape(T * Bp, Dp)
    h0_p = jnp.pad(hidden.astype(jnp.float32),
                   ((0, 0), (0, Bp - B), (0, Hp - H)))

    flat = [z_p, h0_p]
    for (wx, wh, bx, bhn) in prep["layers"]:
        flat += [wx, wh, bx, bhn]
    flat += list(prep["fc"])

    vmem = pl.BlockSpec(memory_space=pltpu.MemorySpace.VMEM)
    out2d, hT = pl.pallas_call(
        functools.partial(_gru_decode_kernel, T, Bp, L, Hp),
        out_shape=(
            jax.ShapeDtypeStruct((T * Bp, Ap), jnp.float32),   # lane-dense head
            jax.ShapeDtypeStruct((L, Bp, Hp), jnp.float32),    # final hidden
        ),
        in_specs=[vmem] * len(flat),
        out_specs=(vmem, vmem),
        scratch_shapes=[
            pltpu.VMEM((T * Bp, 3 * Hp), jnp.float32),  # per-layer input gates
            pltpu.VMEM((T * Bp, Hp), jnp.float32),      # layer outputs (ping)
            pltpu.VMEM((T * Bp, Hp), jnp.float32),      # layer outputs (pong)
        ],
    )(*flat)

    decoded = out2d.reshape(T, Bp, Ap)[:, :B, :A]
    hidden_out = hT[:, :B, :H]
    return decoded, hidden_out


def vae_decode_ref(z, hidden, params, len_alphabet):
    """Pure-JAX f32 reference matching torch.nn.GRU + Linear semantics."""
    T, B, D = z.shape
    L, _, H = hidden.shape
    hs = [hidden[l] for l in range(L)]
    outs = []
    w_fc, b_fc = params["fc"]
    for t in range(T):
        x = z[t]
        for l in range(L):
            w_ih, w_hh, b_ih, b_hh = params["layers"][l]
            gi = x @ w_ih.T + b_ih
            gh = hs[l] @ w_hh.T + b_hh
            i_r, i_z, i_n = gi[:, :H], gi[:, H:2 * H], gi[:, 2 * H:]
            h_r, h_z, h_n = gh[:, :H], gh[:, H:2 * H], gh[:, 2 * H:]
            r = jax.nn.sigmoid(i_r + h_r)
            zg = jax.nn.sigmoid(i_z + h_z)
            n = jnp.tanh(i_n + r * h_n)
            hs[l] = (1.0 - zg) * n + zg * hs[l]
            x = hs[l]
        outs.append(x @ w_fc.T + b_fc)
    return jnp.stack(outs), jnp.stack(hs)


def init_params(key, latent_dim, hidden_size, n_layers, len_alphabet):
    """Deterministic synthetic parameters with PyTorch-GRU-like shapes."""
    scale = 1.0 / np.sqrt(hidden_size)
    layers = []
    for l in range(n_layers):
        in_dim = latent_dim if l == 0 else hidden_size
        key, k1, k2, k3, k4 = jax.random.split(key, 5)
        w_ih = jax.random.uniform(k1, (3 * hidden_size, in_dim),
                                  minval=-scale, maxval=scale, dtype=jnp.float32)
        w_hh = jax.random.uniform(k2, (3 * hidden_size, hidden_size),
                                  minval=-scale, maxval=scale, dtype=jnp.float32)
        b_ih = jax.random.uniform(k3, (3 * hidden_size,),
                                  minval=-scale, maxval=scale, dtype=jnp.float32)
        b_hh = jax.random.uniform(k4, (3 * hidden_size,),
                                  minval=-scale, maxval=scale, dtype=jnp.float32)
        layers.append((w_ih, w_hh, b_ih, b_hh))
    key, k1, k2 = jax.random.split(key, 3)
    w_fc = jax.random.uniform(k1, (len_alphabet, hidden_size),
                              minval=-scale, maxval=scale, dtype=jnp.float32)
    b_fc = jax.random.uniform(k2, (len_alphabet,),
                              minval=-scale, maxval=scale, dtype=jnp.float32)
    return {"layers": layers, "fc": (w_fc, b_fc)}


if __name__ == "__main__":
    # Small shapes consistent with the module:
    seq_len = 8
    batch = 2
    latent_dimension = 32
    gru_neurons_num = 32
    gru_stack_size = 2
    len_alphabet = 16

    key = jax.random.PRNGKey(0)
    key, kz = jax.random.split(key)
    z = jax.random.normal(kz, (seq_len, batch, latent_dimension), dtype=jnp.float32)
    hidden = jnp.zeros((gru_stack_size, batch, gru_neurons_num), dtype=jnp.float32)

    params = init_params(key, latent_dimension, gru_neurons_num,
                         gru_stack_size, len_alphabet)

    # Model-load-time weight preparation (once, outside the per-call path).
    prep = prepare_decoder_params(params, latent_dimension, gru_neurons_num,
                                  gru_stack_size, len_alphabet)
    prep = jax.block_until_ready(prep)

    decoded, hidden_out = vae_decode_pallas(z, hidden, prep, len_alphabet)
    decoded = jax.block_until_ready(decoded)
    hidden_out = jax.block_until_ready(hidden_out)

    dec_ref, hid_ref = vae_decode_ref(z, hidden, params, len_alphabet)
    # Tolerance loosened vs. the pure-f32 version: kernel matmul weights are
    # bf16 (MXU single-pass); reference is f32.
    np.testing.assert_allclose(np.asarray(decoded), np.asarray(dec_ref),
                               rtol=3e-2, atol=3e-2)
    np.testing.assert_allclose(np.asarray(hidden_out), np.asarray(hid_ref),
                               rtol=3e-2, atol=3e-2)

    print("KERNEL_OK")
</pallas_src>

<mosaic_0001>
module attributes {stable_mosaic.version = 11 : i64} {
  func.func @_gru_decode_kernel(%arg0: memref<64x128xf32, #tpu.memory_space<vmem>>, %arg1: memref<2x8x128xf32, #tpu.memory_space<vmem>>, %arg2: memref<128x384xbf16, #tpu.memory_space<vmem>>, %arg3: memref<128x384xbf16, #tpu.memory_space<vmem>>, %arg4: memref<1x384xf32, #tpu.memory_space<vmem>>, %arg5: memref<1x128xf32, #tpu.memory_space<vmem>>, %arg6: memref<128x384xbf16, #tpu.memory_space<vmem>>, %arg7: memref<128x384xbf16, #tpu.memory_space<vmem>>, %arg8: memref<1x384xf32, #tpu.memory_space<vmem>>, %arg9: memref<1x128xf32, #tpu.memory_space<vmem>>, %arg10: memref<128x128xbf16, #tpu.memory_space<vmem>>, %arg11: memref<1x128xf32, #tpu.memory_space<vmem>>, %arg12: memref<64x128xf32, #tpu.memory_space<vmem>>, %arg13: memref<2x8x128xf32, #tpu.memory_space<vmem>>, %arg14: memref<64x384xf32, #tpu.memory_space<vmem>>, %arg15: memref<64x128xf32, #tpu.memory_space<vmem>>, %arg16: memref<64x128xf32, #tpu.memory_space<vmem>>) attributes {dimension_semantics = [], scalar_prefetch = 0 : i64, scratch_operands = 3 : i64, tpu.core_type = #tpu.core_type<tc>} {
    %c0 = arith.constant 0 : index
    %c0_0 = arith.constant 0 : index
    %0 = vector.load %arg0[%c0, %c0_0] : memref<64x128xf32, #tpu.memory_space<vmem>>, vector<64x128xf32>
    %1 = arith.truncf %0 : vector<64x128xf32> to vector<64x128xbf16>
    %c0_1 = arith.constant 0 : index
    %c0_2 = arith.constant 0 : index
    %2 = vector.load %arg2[%c0_1, %c0_2] : memref<128x384xbf16, #tpu.memory_space<vmem>>, vector<128x384xbf16>
    %cst = arith.constant dense<0.000000e+00> : vector<64x384xf32>
    %3 = tpu.matmul %1, %2, %cst {dimension_numbers = #tpu.dot_dimension_numbers<[1], [0], [0], [1], [0, 0, 1, 1], [], []>} : vector<64x128xbf16>, vector<128x384xbf16>, vector<64x384xf32> -> vector<64x384xf32>
    %c0_3 = arith.constant 0 : index
    %c0_4 = arith.constant 0 : index
    %4 = vector.load %arg4[%c0_3, %c0_4] : memref<1x384xf32, #tpu.memory_space<vmem>>, vector<1x384xf32>
    %5 = vector.shape_cast %4 : vector<1x384xf32> to vector<1x384xf32>
    %6 = vector.broadcast %5 : vector<1x384xf32> to vector<64x384xf32>
    %7 = arith.addf %3, %6 : vector<64x384xf32>
    %c0_5 = arith.constant 0 : index
    %c0_6 = arith.constant 0 : index
    %8 = vector.load %arg14[%c0_5, %c0_6] : memref<64x384xf32, #tpu.memory_space<vmem>>, vector<64x384xf32>
    tpu.vector_store %arg14[%c0_5, %c0_6], %7 {strides = array<i32>} : memref<64x384xf32, #tpu.memory_space<vmem>>, vector<64x384xf32>,
    %c0_7 = arith.constant 0 : index
    %c0_8 = arith.constant 0 : index
    %9 = vector.load %arg3[%c0_7, %c0_8] : memref<128x384xbf16, #tpu.memory_space<vmem>>, vector<128x384xbf16>
    %c0_9 = arith.constant 0 : index
    %c0_10 = arith.constant 0 : index
    %10 = vector.load %arg5[%c0_9, %c0_10] : memref<1x128xf32, #tpu.memory_space<vmem>>, vector<1x128xf32>
    %11 = vector.shape_cast %10 : vector<1x128xf32> to vector<1x128xf32>
    %12 = vector.broadcast %11 : vector<1x128xf32> to vector<8x128xf32>
    %c0_11 = arith.constant 0 : index
    %c0_12 = arith.constant 0 : index
    %c0_13 = arith.constant 0 : index
    %13 = vector.load %arg1[%c0_11, %c0_12, %c0_13] : memref<2x8x128xf32, #tpu.memory_space<vmem>>, vector<1x8x128xf32>
    %14 = vector.shape_cast %13 : vector<1x8x128xf32> to vector<8x128xf32>
    %c0_14 = arith.constant 0 : index
    %c0_15 = arith.constant 0 : index
    %15 = vector.load %arg14[%c0_14, %c0_15] : memref<64x384xf32, #tpu.memory_space<vmem>>, vector<8x384xf32>
    %16 = arith.truncf %14 : vector<8x128xf32> to vector<8x128xbf16>
    %cst_16 = arith.constant dense<0.000000e+00> : vector<8x384xf32>
    %17 = tpu.matmul %16, %9, %cst_16 {dimension_numbers = #tpu.dot_dimension_numbers<[1], [0], [0], [1], [0, 0, 1, 1], [], []>} : vector<8x128xbf16>, vector<128x384xbf16>, vector<8x384xf32> -> vector<8x384xf32>
    %18 = vector.extract_strided_slice %15 {offsets = [0, 0], sizes = [8, 256], strides = [1, 1]} : vector<8x384xf32> to vector<8x256xf32>
    %19 = vector.extract_strided_slice %17 {offsets = [0, 0], sizes = [8, 256], strides = [1, 1]} : vector<8x384xf32> to vector<8x256xf32>
    %20 = arith.addf %18, %19 : vector<8x256xf32>
    %21 = arith.negf %20 : vector<8x256xf32>
    %22 = math.exp %21 : vector<8x256xf32>
    %cst_17 = arith.constant 1.000000e+00 : f32
    %23 = vector.broadcast %cst_17 : f32 to vector<8x256xf32>
    %24 = arith.addf %23, %22 : vector<8x256xf32>
    %25 = arith.divf %23, %24 : vector<8x256xf32>
    %26 = vector.extract_strided_slice %25 {offsets = [0, 0], sizes = [8, 128], strides = [1, 1]} : vector<8x256xf32> to vector<8x128xf32>
    %27 = vector.extract_strided_slice %25 {offsets = [0, 128], sizes = [8, 128], strides = [1, 1]} : vector<8x256xf32> to vector<8x128xf32>
    %28 = vector.extract_strided_slice %15 {offsets = [0, 256], sizes = [8, 128], strides = [1, 1]} : vector<8x384xf32> to vector<8x128xf32>
    %29 = vector.extract_strided_slice %17 {offsets = [0, 256], sizes = [8, 128], strides = [1, 1]} : vector<8x384xf32> to vector<8x128xf32>
    %30 = arith.addf %29, %12 : vector<8x128xf32>
    %31 = arith.mulf %26, %30 : vector<8x128xf32>
    %32 = arith.addf %28, %31 : vector<8x128xf32>
    %33 = math.tanh %32 : vector<8x128xf32>
    %cst_18 = arith.constant 1.000000e+00 : f32
    %34 = vector.broadcast %cst_18 : f32 to vector<8x128xf32>
    %35 = arith.subf %34, %27 : vector<8x128xf32>
    %36 = arith.mulf %35, %33 : vector<8x128xf32>
    %37 = arith.mulf %27, %14 : vector<8x128xf32>
    %38 = arith.addf %36, %37 : vector<8x128xf32>
    %c0_19 = arith.constant 0 : index
    %c0_20 = arith.constant 0 : index
    %39 = vector.load %arg15[%c0_19, %c0_20] : memref<64x128xf32, #tpu.memory_space<vmem>>, vector<8x128xf32>
    tpu.vector_store %arg15[%c0_19, %c0_20], %38 {strides = array<i32>} : memref<64x128xf32, #tpu.memory_space<vmem>>, vector<8x128xf32>,
    %c8 = arith.constant 8 : index
    %c0_21 = arith.constant 0 : index
    %40 = vector.load %arg14[%c8, %c0_21] : memref<64x384xf32, #tpu.memory_space<vmem>>, vector<8x384xf32>
    %41 = arith.truncf %38 : vector<8x128xf32> to vector<8x128xbf16>
    %cst_22 = arith.constant dense<0.000000e+00> : vector<8x384xf32>
    %42 = tpu.matmul %41, %9, %cst_22 {dimension_numbers = #tpu.dot_dimension_numbers<[1], [0], [0], [1], [0, 0, 1, 1], [], []>} : vector<8x128xbf16>, vector<128x384xbf16>, vector<8x384xf32> -> vector<8x384xf32>
    %43 = vector.extract_strided_slice %40 {offsets = [0, 0], sizes = [8, 256], strides = [1, 1]} : vector<8x384xf32> to vector<8x256xf32>
    %44 = vector.extract_strided_slice %42 {offsets = [0, 0], sizes = [8, 256], strides = [1, 1]} : vector<8x384xf32> to vector<8x256xf32>
    %45 = arith.addf %43, %44 : vector<8x256xf32>
    %46 = arith.negf %45 : vector<8x256xf32>
    %47 = math.exp %46 : vector<8x256xf32>
    %cst_23 = arith.constant 1.000000e+00 : f32
    %48 = vector.broadcast %cst_23 : f32 to vector<8x256xf32>
    %49 = arith.addf %48, %47 : vector<8x256xf32>
    %50 = arith.divf %48, %49 : vector<8x256xf32>
    %51 = vector.extract_strided_slice %50 {offsets = [0, 0], sizes = [8, 128], strides = [1, 1]} : vector<8x256xf32> to vector<8x128xf32>
    %52 = vector.extract_strided_slice %50 {offsets = [0, 128], sizes = [8, 128], strides = [1, 1]} : vector<8x256xf32> to vector<8x128xf32>
    %53 = vector.extract_strided_slice %40 {offsets = [0, 256], sizes = [8, 128], strides = [1, 1]} : vector<8x384xf32> to vector<8x128xf32>
    %54 = vector.extract_strided_slice %42 {offsets = [0, 256], sizes = [8, 128], strides = [1, 1]} : vector<8x384xf32> to vector<8x128xf32>
    %55 = arith.addf %54, %12 : vector<8x128xf32>
    %56 = arith.mulf %51, %55 : vector<8x128xf32>
    %57 = arith.addf %53, %56 : vector<8x128xf32>
    %58 = math.tanh %57 : vector<8x128xf32>
    %cst_24 = arith.constant 1.000000e+00 : f32
    %59 = vector.broadcast %cst_24 : f32 to vector<8x128xf32>
    %60 = arith.subf %59, %52 : vector<8x128xf32>
    %61 = arith.mulf %60, %58 : vector<8x128xf32>
    %62 = arith.mulf %52, %38 : vector<8x128xf32>
    %63 = arith.addf %61, %62 : vector<8x128xf32>
    %c8_25 = arith.constant 8 : index
    %c0_26 = arith.constant 0 : index
    %64 = vector.load %arg15[%c8_25, %c0_26] : memref<64x128xf32, #tpu.memory_space<vmem>>, vector<8x128xf32>
    tpu.vector_store %arg15[%c8_25, %c0_26], %63 {strides = array<i32>} : memref<64x128xf32, #tpu.memory_space<vmem>>, vector<8x128xf32>,
    %c16 = arith.constant 16 : index
    %c0_27 = arith.constant 0 : index
    %65 = vector.load %arg14[%c16, %c0_27] : memref<64x384xf32, #tpu.memory_space<vmem>>, vector<8x384xf32>
    %66 = arith.truncf %63 : vector<8x128xf32> to vector<8x128xbf16>
    %cst_28 = arith.constant dense<0.000000e+00> : vector<8x384xf32>
    %67 = tpu.matmul %66, %9, %cst_28 {dimension_numbers = #tpu.dot_dimension_numbers<[1], [0], [0], [1], [0, 0, 1, 1], [], []>} : vector<8x128xbf16>, vector<128x384xbf16>, vector<8x384xf32> -> vector<8x384xf32>
    %68 = vector.extract_strided_slice %65 {offsets = [0, 0], sizes = [8, 256], strides = [1, 1]} : vector<8x384xf32> to vector<8x256xf32>
    %69 = vector.extract_strided_slice %67 {offsets = [0, 0], sizes = [8, 256], strides = [1, 1]} : vector<8x384xf32> to vector<8x256xf32>
    %70 = arith.addf %68, %69 : vector<8x256xf32>
    %71 = arith.negf %70 : vector<8x256xf32>
    %72 = math.exp %71 : vector<8x256xf32>
    %cst_29 = arith.constant 1.000000e+00 : f32
    %73 = vector.broadcast %cst_29 : f32 to vector<8x256xf32>
    %74 = arith.addf %73, %72 : vector<8x256xf32>
    %75 = arith.divf %73, %74 : vector<8x256xf32>
    %76 = vector.extract_strided_slice %75 {offsets = [0, 0], sizes = [8, 128], strides = [1, 1]} : vector<8x256xf32> to vector<8x128xf32>
    %77 = vector.extract_strided_slice %75 {offsets = [0, 128], sizes = [8, 128], strides = [1, 1]} : vector<8x256xf32> to vector<8x128xf32>
    %78 = vector.extract_strided_slice %65 {offsets = [0, 256], sizes = [8, 128], strides = [1, 1]} : vector<8x384xf32> to vector<8x128xf32>
    %79 = vector.extract_strided_slice %67 {offsets = [0, 256], sizes = [8, 128], strides = [1, 1]} : vector<8x384xf32> to vector<8x128xf32>
    %80 = arith.addf %79, %12 : vector<8x128xf32>
    %81 = arith.mulf %76, %80 : vector<8x128xf32>
    %82 = arith.addf %78, %81 : vector<8x128xf32>
    %83 = math.tanh %82 : vector<8x128xf32>
    %cst_30 = arith.constant 1.000000e+00 : f32
    %84 = vector.broadcast %cst_30 : f32 to vector<8x128xf32>
    %85 = arith.subf %84, %77 : vector<8x128xf32>
    %86 = arith.mulf %85, %83 : vector<8x128xf32>
    %87 = arith.mulf %77, %63 : vector<8x128xf32>
    %88 = arith.addf %86, %87 : vector<8x128xf32>
    %c16_31 = arith.constant 16 : index
    %c0_32 = arith.constant 0 : index
    %89 = vector.load %arg15[%c16_31, %c0_32] : memref<64x128xf32, #tpu.memory_space<vmem>>, vector<8x128xf32>
    tpu.vector_store %arg15[%c16_31, %c0_32], %88 {strides = array<i32>} : memref<64x128xf32, #tpu.memory_space<vmem>>, vector<8x128xf32>,
    %c24 = arith.constant 24 : index
    %c0_33 = arith.constant 0 : index
    %90 = vector.load %arg14[%c24, %c0_33] : memref<64x384xf32, #tpu.memory_space<vmem>>, vector<8x384xf32>
    %91 = arith.truncf %88 : vector<8x128xf32> to vector<8x128xbf16>
    %cst_34 = arith.constant dense<0.000000e+00> : vector<8x384xf32>
    %92 = tpu.matmul %91, %9, %cst_34 {dimension_numbers = #tpu.dot_dimension_numbers<[1], [0], [0], [1], [0, 0, 1, 1], [], []>} : vector<8x128xbf16>, vector<128x384xbf16>, vector<8x384xf32> -> vector<8x384xf32>
    %93 = vector.extract_strided_slice %90 {offsets = [0, 0], sizes = [8, 256], strides = [1, 1]} : vector<8x384xf32> to vector<8x256xf32>
    %94 = vector.extract_strided_slice %92 {offsets = [0, 0], sizes = [8, 256], strides = [1, 1]} : vector<8x384xf32> to vector<8x256xf32>
    %95 = arith.addf %93, %94 : vector<8x256xf32>
    %96 = arith.negf %95 : vector<8x256xf32>
    %97 = math.exp %96 : vector<8x256xf32>
    %cst_35 = arith.constant 1.000000e+00 : f32
    %98 = vector.broadcast %cst_35 : f32 to vector<8x256xf32>
    %99 = arith.addf %98, %97 : vector<8x256xf32>
    %100 = arith.divf %98, %99 : vector<8x256xf32>
    %101 = vector.extract_strided_slice %100 {offsets = [0, 0], sizes = [8, 128], strides = [1, 1]} : vector<8x256xf32> to vector<8x128xf32>
    %102 = vector.extract_strided_slice %100 {offsets = [0, 128], sizes = [8, 128], strides = [1, 1]} : vector<8x256xf32> to vector<8x128xf32>
    %103 = vector.extract_strided_slice %90 {offsets = [0, 256], sizes = [8, 128], strides = [1, 1]} : vector<8x384xf32> to vector<8x128xf32>
    %104 = vector.extract_strided_slice %92 {offsets = [0, 256], sizes = [8, 128], strides = [1, 1]} : vector<8x384xf32> to vector<8x128xf32>
    %105 = arith.addf %104, %12 : vector<8x128xf32>
    %106 = arith.mulf %101, %105 : vector<8x128xf32>
    %107 = arith.addf %103, %106 : vector<8x128xf32>
    %108 = math.tanh %107 : vector<8x128xf32>
    %cst_36 = arith.constant 1.000000e+00 : f32
    %109 = vector.broadcast %cst_36 : f32 to vector<8x128xf32>
    %110 = arith.subf %109, %102 : vector<8x128xf32>
    %111 = arith.mulf %110, %108 : vector<8x128xf32>
    %112 = arith.mulf %102, %88 : vector<8x128xf32>
    %113 = arith.addf %111, %112 : vector<8x128xf32>
    %c24_37 = arith.constant 24 : index
    %c0_38 = arith.constant 0 : index
    %114 = vector.load %arg15[%c24_37, %c0_38] : memref<64x128xf32, #tpu.memory_space<vmem>>, vector<8x128xf32>
    tpu.vector_store %arg15[%c24_37, %c0_38], %113 {strides = array<i32>} : memref<64x128xf32, #tpu.memory_space<vmem>>, vector<8x128xf32>,
    %c32 = arith.constant 32 : index
    %c0_39 = arith.constant 0 : index
    %115 = vector.load %arg14[%c32, %c0_39] : memref<64x384xf32, #tpu.memory_space<vmem>>, vector<8x384xf32>
    %116 = arith.truncf %113 : vector<8x128xf32> to vector<8x128xbf16>
    %cst_40 = arith.constant dense<0.000000e+00> : vector<8x384xf32>
    %117 = tpu.matmul %116, %9, %cst_40 {dimension_numbers = #tpu.dot_dimension_numbers<[1], [0], [0], [1], [0, 0, 1, 1], [], []>} : vector<8x128xbf16>, vector<128x384xbf16>, vector<8x384xf32> -> vector<8x384xf32>
    %118 = vector.extract_strided_slice %115 {offsets = [0, 0], sizes = [8, 256], strides = [1, 1]} : vector<8x384xf32> to vector<8x256xf32>
    %119 = vector.extract_strided_slice %117 {offsets = [0, 0], sizes = [8, 256], strides = [1, 1]} : vector<8x384xf32> to vector<8x256xf32>
    %120 = arith.addf %118, %119 : vector<8x256xf32>
    %121 = arith.negf %120 : vector<8x256xf32>
    %122 = math.exp %121 : vector<8x256xf32>
    %cst_41 = arith.constant 1.000000e+00 : f32
    %123 = vector.broadcast %cst_41 : f32 to vector<8x256xf32>
    %124 = arith.addf %123, %122 : vector<8x256xf32>
    %125 = arith.divf %123, %124 : vector<8x256xf32>
    %126 = vector.extract_strided_slice %125 {offsets = [0, 0], sizes = [8, 128], strides = [1, 1]} : vector<8x256xf32> to vector<8x128xf32>
    %127 = vector.extract_strided_slice %125 {offsets = [0, 128], sizes = [8, 128], strides = [1, 1]} : vector<8x256xf32> to vector<8x128xf32>
    %128 = vector.extract_strided_slice %115 {offsets = [0, 256], sizes = [8, 128], strides = [1, 1]} : vector<8x384xf32> to vector<8x128xf32>
    %129 = vector.extract_strided_slice %117 {offsets = [0, 256], sizes = [8, 128], strides = [1, 1]} : vector<8x384xf32> to vector<8x128xf32>
    %130 = arith.addf %129, %12 : vector<8x128xf32>
    %131 = arith.mulf %126, %130 : vector<8x128xf32>
    %132 = arith.addf %128, %131 : vector<8x128xf32>
    %133 = math.tanh %132 : vector<8x128xf32>
    %cst_42 = arith.constant 1.000000e+00 : f32
    %134 = vector.broadcast %cst_42 : f32 to vector<8x128xf32>
    %135 = arith.subf %134, %127 : vector<8x128xf32>
    %136 = arith.mulf %135, %133 : vector<8x128xf32>
    %137 = arith.mulf %127, %113 : vector<8x128xf32>
    %138 = arith.addf %136, %137 : vector<8x128xf32>
    %c32_43 = arith.constant 32 : index
    %c0_44 = arith.constant 0 : index
    %139 = vector.load %arg15[%c32_43, %c0_44] : memref<64x128xf32, #tpu.memory_space<vmem>>, vector<8x128xf32>
    tpu.vector_store %arg15[%c32_43, %c0_44], %138 {strides = array<i32>} : memref<64x128xf32, #tpu.memory_space<vmem>>, vector<8x128xf32>,
    %c40 = arith.constant 40 : index
    %c0_45 = arith.constant 0 : index
    %140 = vector.load %arg14[%c40, %c0_45] : memref<64x384xf32, #tpu.memory_space<vmem>>, vector<8x384xf32>
    %141 = arith.truncf %138 : vector<8x128xf32> to vector<8x128xbf16>
    %cst_46 = arith.constant dense<0.000000e+00> : vector<8x384xf32>
    %142 = tpu.matmul %141, %9, %cst_46 {dimension_numbers = #tpu.dot_dimension_numbers<[1], [0], [0], [1], [0, 0, 1, 1], [], []>} : vector<8x128xbf16>, vector<128x384xbf16>, vector<8x384xf32> -> vector<8x384xf32>
    %143 = vector.extract_strided_slice %140 {offsets = [0, 0], sizes = [8, 256], strides = [1, 1]} : vector<8x384xf32> to vector<8x256xf32>
    %144 = vector.extract_strided_slice %142 {offsets = [0, 0], sizes = [8, 256], strides = [1, 1]} : vector<8x384xf32> to vector<8x256xf32>
    %145 = arith.addf %143, %144 : vector<8x256xf32>
    %146 = arith.negf %145 : vector<8x256xf32>
    %147 = math.exp %146 : vector<8x256xf32>
    %cst_47 = arith.constant 1.000000e+00 : f32
    %148 = vector.broadcast %cst_47 : f32 to vector<8x256xf32>
    %149 = arith.addf %148, %147 : vector<8x256xf32>
    %150 = arith.divf %148, %149 : vector<8x256xf32>
    %151 = vector.extract_strided_slice %150 {offsets = [0, 0], sizes = [8, 128], strides = [1, 1]} : vector<8x256xf32> to vector<8x128xf32>
    %152 = vector.extract_strided_slice %150 {offsets = [0, 128], sizes = [8, 128], strides = [1, 1]} : vector<8x256xf32> to vector<8x128xf32>
    %153 = vector.extract_strided_slice %140 {offsets = [0, 256], sizes = [8, 128], strides = [1, 1]} : vector<8x384xf32> to vector<8x128xf32>
    %154 = vector.extract_strided_slice %142 {offsets = [0, 256], sizes = [8, 128], strides = [1, 1]} : vector<8x384xf32> to vector<8x128xf32>
    %155 = arith.addf %154, %12 : vector<8x128xf32>
    %156 = arith.mulf %151, %155 : vector<8x128xf32>
    %157 = arith.addf %153, %156 : vector<8x128xf32>
    %158 = math.tanh %157 : vector<8x128xf32>
    %cst_48 = arith.constant 1.000000e+00 : f32
    %159 = vector.broadcast %cst_48 : f32 to vector<8x128xf32>
    %160 = arith.subf %159, %152 : vector<8x128xf32>
    %161 = arith.mulf %160, %158 : vector<8x128xf32>
    %162 = arith.mulf %152, %138 : vector<8x128xf32>
    %163 = arith.addf %161, %162 : vector<8x128xf32>
    %c40_49 = arith.constant 40 : index
    %c0_50 = arith.constant 0 : index
    %164 = vector.load %arg15[%c40_49, %c0_50] : memref<64x128xf32, #tpu.memory_space<vmem>>, vector<8x128xf32>
    tpu.vector_store %arg15[%c40_49, %c0_50], %163 {strides = array<i32>} : memref<64x128xf32, #tpu.memory_space<vmem>>, vector<8x128xf32>,
    %c48 = arith.constant 48 : index
    %c0_51 = arith.constant 0 : index
    %165 = vector.load %arg14[%c48, %c0_51] : memref<64x384xf32, #tpu.memory_space<vmem>>, vector<8x384xf32>
    %166 = arith.truncf %163 : vector<8x128xf32> to vector<8x128xbf16>
    %cst_52 = arith.constant dense<0.000000e+00> : vector<8x384xf32>
    %167 = tpu.matmul %166, %9, %cst_52 {dimension_numbers = #tpu.dot_dimension_numbers<[1], [0], [0], [1], [0, 0, 1, 1], [], []>} : vector<8x128xbf16>, vector<128x384xbf16>, vector<8x384xf32> -> vector<8x384xf32>
    %168 = vector.extract_strided_slice %165 {offsets = [0, 0], sizes = [8, 256], strides = [1, 1]} : vector<8x384xf32> to vector<8x256xf32>
    %169 = vector.extract_strided_slice %167 {offsets = [0, 0], sizes = [8, 256], strides = [1, 1]} : vector<8x384xf32> to vector<8x256xf32>
    %170 = arith.addf %168, %169 : vector<8x256xf32>
    %171 = arith.negf %170 : vector<8x256xf32>
    %172 = math.exp %171 : vector<8x256xf32>
    %cst_53 = arith.constant 1.000000e+00 : f32
    %173 = vector.broadcast %cst_53 : f32 to vector<8x256xf32>
    %174 = arith.addf %173, %172 : vector<8x256xf32>
    %175 = arith.divf %173, %174 : vector<8x256xf32>
    %176 = vector.extract_strided_slice %175 {offsets = [0, 0], sizes = [8, 128], strides = [1, 1]} : vector<8x256xf32> to vector<8x128xf32>
    %177 = vector.extract_strided_slice %175 {offsets = [0, 128], sizes = [8, 128], strides = [1, 1]} : vector<8x256xf32> to vector<8x128xf32>
    %178 = vector.extract_strided_slice %165 {offsets = [0, 256], sizes = [8, 128], strides = [1, 1]} : vector<8x384xf32> to vector<8x128xf32>
    %179 = vector.extract_strided_slice %167 {offsets = [0, 256], sizes = [8, 128], strides = [1, 1]} : vector<8x384xf32> to vector<8x128xf32>
    %180 = arith.addf %179, %12 : vector<8x128xf32>
    %181 = arith.mulf %176, %180 : vector<8x128xf32>
    %182 = arith.addf %178, %181 : vector<8x128xf32>
    %183 = math.tanh %182 : vector<8x128xf32>
    %cst_54 = arith.constant 1.000000e+00 : f32
    %184 = vector.broadcast %cst_54 : f32 to vector<8x128xf32>
    %185 = arith.subf %184, %177 : vector<8x128xf32>
    %186 = arith.mulf %185, %183 : vector<8x128xf32>
    %187 = arith.mulf %177, %163 : vector<8x128xf32>
    %188 = arith.addf %186, %187 : vector<8x128xf32>
    %c48_55 = arith.constant 48 : index
    %c0_56 = arith.constant 0 : index
    %189 = vector.load %arg15[%c48_55, %c0_56] : memref<64x128xf32, #tpu.memory_space<vmem>>, vector<8x128xf32>
    tpu.vector_store %arg15[%c48_55, %c0_56], %188 {strides = array<i32>} : memref<64x128xf32, #tpu.memory_space<vmem>>, vector<8x128xf32>,
    %c56 = arith.constant 56 : index
    %c0_57 = arith.constant 0 : index
    %190 = vector.load %arg14[%c56, %c0_57] : memref<64x384xf32, #tpu.memory_space<vmem>>, vector<8x384xf32>
    %191 = arith.truncf %188 : vector<8x128xf32> to vector<8x128xbf16>
    %cst_58 = arith.constant dense<0.000000e+00> : vector<8x384xf32>
    %192 = tpu.matmul %191, %9, %cst_58 {dimension_numbers = #tpu.dot_dimension_numbers<[1], [0], [0], [1], [0, 0, 1, 1], [], []>} : vector<8x128xbf16>, vector<128x384xbf16>, vector<8x384xf32> -> vector<8x384xf32>
    %193 = vector.extract_strided_slice %190 {offsets = [0, 0], sizes = [8, 256], strides = [1, 1]} : vector<8x384xf32> to vector<8x256xf32>
    %194 = vector.extract_strided_slice %192 {offsets = [0, 0], sizes = [8, 256], strides = [1, 1]} : vector<8x384xf32> to vector<8x256xf32>
    %195 = arith.addf %193, %194 : vector<8x256xf32>
    %196 = arith.negf %195 : vector<8x256xf32>
    %197 = math.exp %196 : vector<8x256xf32>
    %cst_59 = arith.constant 1.000000e+00 : f32
    %198 = vector.broadcast %cst_59 : f32 to vector<8x256xf32>
    %199 = arith.addf %198, %197 : vector<8x256xf32>
    %200 = arith.divf %198, %199 : vector<8x256xf32>
    %201 = vector.extract_strided_slice %200 {offsets = [0, 0], sizes = [8, 128], strides = [1, 1]} : vector<8x256xf32> to vector<8x128xf32>
    %202 = vector.extract_strided_slice %200 {offsets = [0, 128], sizes = [8, 128], strides = [1, 1]} : vector<8x256xf32> to vector<8x128xf32>
    %203 = vector.extract_strided_slice %190 {offsets = [0, 256], sizes = [8, 128], strides = [1, 1]} : vector<8x384xf32> to vector<8x128xf32>
    %204 = vector.extract_strided_slice %192 {offsets = [0, 256], sizes = [8, 128], strides = [1, 1]} : vector<8x384xf32> to vector<8x128xf32>
    %205 = arith.addf %204, %12 : vector<8x128xf32>
    %206 = arith.mulf %201, %205 : vector<8x128xf32>
    %207 = arith.addf %203, %206 : vector<8x128xf32>
    %208 = math.tanh %207 : vector<8x128xf32>
    %cst_60 = arith.constant 1.000000e+00 : f32
    %209 = vector.broadcast %cst_60 : f32 to vector<8x128xf32>
    %210 = arith.subf %209, %202 : vector<8x128xf32>
    %211 = arith.mulf %210, %208 : vector<8x128xf32>
    %212 = arith.mulf %202, %188 : vector<8x128xf32>
    %213 = arith.addf %211, %212 : vector<8x128xf32>
    %c56_61 = arith.constant 56 : index
    %c0_62 = arith.constant 0 : index
    %214 = vector.load %arg15[%c56_61, %c0_62] : memref<64x128xf32, #tpu.memory_space<vmem>>, vector<8x128xf32>
    tpu.vector_store %arg15[%c56_61, %c0_62], %213 {strides = array<i32>} : memref<64x128xf32, #tpu.memory_space<vmem>>, vector<8x128xf32>,
    %c0_63 = arith.constant 0 : index
    %c0_64 = arith.constant 0 : index
    %c0_65 = arith.constant 0 : index
    %215 = vector.load %arg13[%c0_63, %c0_64, %c0_65] : memref<2x8x128xf32, #tpu.memory_space<vmem>>, vector<1x8x128xf32>
    %216 = vector.shape_cast %215 : vector<1x8x128xf32> to vector<8x128xf32>
    %217 = vector.shape_cast %213 : vector<8x128xf32> to vector<1x8x128xf32>
    tpu.vector_store %arg13[%c0_63, %c0_64, %c0_65], %217 {strides = array<i32>} : memref<2x8x128xf32, #tpu.memory_space<vmem>>, vector<1x8x128xf32>,
    %c0_66 = arith.constant 0 : index
    %c0_67 = arith.constant 0 : index
    %218 = vector.load %arg15[%c0_66, %c0_67] : memref<64x128xf32, #tpu.memory_space<vmem>>, vector<64x128xf32>
    %219 = arith.truncf %218 : vector<64x128xf32> to vector<64x128xbf16>
    %c0_68 = arith.constant 0 : index
    %c0_69 = arith.constant 0 : index
    %220 = vector.load %arg6[%c0_68, %c0_69] : memref<128x384xbf16, #tpu.memory_space<vmem>>, vector<128x384xbf16>
    %cst_70 = arith.constant dense<0.000000e+00> : vector<64x384xf32>
    %221 = tpu.matmul %219, %220, %cst_70 {dimension_numbers = #tpu.dot_dimension_numbers<[1], [0], [0], [1], [0, 0, 1, 1], [], []>} : vector<64x128xbf16>, vector<128x384xbf16>, vector<64x384xf32> -> vector<64x384xf32>
    %c0_71 = arith.constant 0 : index
    %c0_72 = arith.constant 0 : index
    %222 = vector.load %arg8[%c0_71, %c0_72] : memref<1x384xf32, #tpu.memory_space<vmem>>, vector<1x384xf32>
    %223 = vector.shape_cast %222 : vector<1x384xf32> to vector<1x384xf32>
    %224 = vector.broadcast %223 : vector<1x384xf32> to vector<64x384xf32>
    %225 = arith.addf %221, %224 : vector<64x384xf32>
    %c0_73 = arith.constant 0 : index
    %c0_74 = arith.constant 0 : index
    %226 = vector.load %arg14[%c0_73, %c0_74] : memref<64x384xf32, #tpu.memory_space<vmem>>, vector<64x384xf32>
    tpu.vector_store %arg14[%c0_73, %c0_74], %225 {strides = array<i32>} : memref<64x384xf32, #tpu.memory_space<vmem>>, vector<64x384xf32>,
    %c0_75 = arith.constant 0 : index
    %c0_76 = arith.constant 0 : index
    %227 = vector.load %arg7[%c0_75, %c0_76] : memref<128x384xbf16, #tpu.memory_space<vmem>>, vector<128x384xbf16>
    %c0_77 = arith.constant 0 : index
    %c0_78 = arith.constant 0 : index
    %228 = vector.load %arg9[%c0_77, %c0_78] : memref<1x128xf32, #tpu.memory_space<vmem>>, vector<1x128xf32>
    %229 = vector.shape_cast %228 : vector<1x128xf32> to vector<1x128xf32>
    %230 = vector.broadcast %229 : vector<1x128xf32> to vector<8x128xf32>
    %c1 = arith.constant 1 : index
    %c0_79 = arith.constant 0 : index
    %c0_80 = arith.constant 0 : index
    %231 = vector.load %arg1[%c1, %c0_79, %c0_80] : memref<2x8x128xf32, #tpu.memory_space<vmem>>, vector<1x8x128xf32>
    %232 = vector.shape_cast %231 : vector<1x8x128xf32> to vector<8x128xf32>
    %c0_81 = arith.constant 0 : index
    %c0_82 = arith.constant 0 : index
    %233 = vector.load %arg14[%c0_81, %c0_82] : memref<64x384xf32, #tpu.memory_space<vmem>>, vector<8x384xf32>
    %234 = arith.truncf %232 : vector<8x128xf32> to vector<8x128xbf16>
    %cst_83 = arith.constant dense<0.000000e+00> : vector<8x384xf32>
    %235 = tpu.matmul %234, %227, %cst_83 {dimension_numbers = #tpu.dot_dimension_numbers<[1], [0], [0], [1], [0, 0, 1, 1], [], []>} : vector<8x128xbf16>, vector<128x384xbf16>, vector<8x384xf32> -> vector<8x384xf32>
    %236 = vector.extract_strided_slice %233 {offsets = [0, 0], sizes = [8, 256], strides = [1, 1]} : vector<8x384xf32> to vector<8x256xf32>
    %237 = vector.extract_strided_slice %235 {offsets = [0, 0], sizes = [8, 256], strides = [1, 1]} : vector<8x384xf32> to vector<8x256xf32>
    %238 = arith.addf %236, %237 : vector<8x256xf32>
    %239 = arith.negf %238 : vector<8x256xf32>
    %240 = math.exp %239 : vector<8x256xf32>
    %cst_84 = arith.constant 1.000000e+00 : f32
    %241 = vector.broadcast %cst_84 : f32 to vector<8x256xf32>
    %242 = arith.addf %241, %240 : vector<8x256xf32>
    %243 = arith.divf %241, %242 : vector<8x256xf32>
    %244 = vector.extract_strided_slice %243 {offsets = [0, 0], sizes = [8, 128], strides = [1, 1]} : vector<8x256xf32> to vector<8x128xf32>
    %245 = vector.extract_strided_slice %243 {offsets = [0, 128], sizes = [8, 128], strides = [1, 1]} : vector<8x256xf32> to vector<8x128xf32>
    %246 = vector.extract_strided_slice %233 {offsets = [0, 256], sizes = [8, 128], strides = [1, 1]} : vector<8x384xf32> to vector<8x128xf32>
    %247 = vector.extract_strided_slice %235 {offsets = [0, 256], sizes = [8, 128], strides = [1, 1]} : vector<8x384xf32> to vector<8x128xf32>
    %248 = arith.addf %247, %230 : vector<8x128xf32>
    %249 = arith.mulf %244, %248 : vector<8x128xf32>
    %250 = arith.addf %246, %249 : vector<8x128xf32>
    %251 = math.tanh %250 : vector<8x128xf32>
    %cst_85 = arith.constant 1.000000e+00 : f32
    %252 = vector.broadcast %cst_85 : f32 to vector<8x128xf32>
    %253 = arith.subf %252, %245 : vector<8x128xf32>
    %254 = arith.mulf %253, %251 : vector<8x128xf32>
    %255 = arith.mulf %245, %232 : vector<8x128xf32>
    %256 = arith.addf %254, %255 : vector<8x128xf32>
    %c0_86 = arith.constant 0 : index
    %c0_87 = arith.constant 0 : index
    %257 = vector.load %arg16[%c0_86, %c0_87] : memref<64x128xf32, #tpu.memory_space<vmem>>, vector<8x128xf32>
    tpu.vector_store %arg16[%c0_86, %c0_87], %256 {strides = array<i32>} : memref<64x128xf32, #tpu.memory_space<vmem>>, vector<8x128xf32>,
    %c8_88 = arith.constant 8 : index
    %c0_89 = arith.constant 0 : index
    %258 = vector.load %arg14[%c8_88, %c0_89] : memref<64x384xf32, #tpu.memory_space<vmem>>, vector<8x384xf32>
    %259 = arith.truncf %256 : vector<8x128xf32> to vector<8x128xbf16>
    %cst_90 = arith.constant dense<0.000000e+00> : vector<8x384xf32>
    %260 = tpu.matmul %259, %227, %cst_90 {dimension_numbers = #tpu.dot_dimension_numbers<[1], [0], [0], [1], [0, 0, 1, 1], [], []>} : vector<8x128xbf16>, vector<128x384xbf16>, vector<8x384xf32> -> vector<8x384xf32>
    %261 = vector.extract_strided_slice %258 {offsets = [0, 0], sizes = [8, 256], strides = [1, 1]} : vector<8x384xf32> to vector<8x256xf32>
    %262 = vector.extract_strided_slice %260 {offsets = [0, 0], sizes = [8, 256], strides = [1, 1]} : vector<8x384xf32> to vector<8x256xf32>
    %263 = arith.addf %261, %262 : vector<8x256xf32>
    %264 = arith.negf %263 : vector<8x256xf32>
    %265 = math.exp %264 : vector<8x256xf32>
    %cst_91 = arith.constant 1.000000e+00 : f32
    %266 = vector.broadcast %cst_91 : f32 to vector<8x256xf32>
    %267 = arith.addf %266, %265 : vector<8x256xf32>
    %268 = arith.divf %266, %267 : vector<8x256xf32>
    %269 = vector.extract_strided_slice %268 {offsets = [0, 0], sizes = [8, 128], strides = [1, 1]} : vector<8x256xf32> to vector<8x128xf32>
    %270 = vector.extract_strided_slice %268 {offsets = [0, 128], sizes = [8, 128], strides = [1, 1]} : vector<8x256xf32> to vector<8x128xf32>
    %271 = vector.extract_strided_slice %258 {offsets = [0, 256], sizes = [8, 128], strides = [1, 1]} : vector<8x384xf32> to vector<8x128xf32>
    %272 = vector.extract_strided_slice %260 {offsets = [0, 256], sizes = [8, 128], strides = [1, 1]} : vector<8x384xf32> to vector<8x128xf32>
    %273 = arith.addf %272, %230 : vector<8x128xf32>
    %274 = arith.mulf %269, %273 : vector<8x128xf32>
    %275 = arith.addf %271, %274 : vector<8x128xf32>
    %276 = math.tanh %275 : vector<8x128xf32>
    %cst_92 = arith.constant 1.000000e+00 : f32
    %277 = vector.broadcast %cst_92 : f32 to vector<8x128xf32>
    %278 = arith.subf %277, %270 : vector<8x128xf32>
    %279 = arith.mulf %278, %276 : vector<8x128xf32>
    %280 = arith.mulf %270, %256 : vector<8x128xf32>
    %281 = arith.addf %279, %280 : vector<8x128xf32>
    %c8_93 = arith.constant 8 : index
    %c0_94 = arith.constant 0 : index
    %282 = vector.load %arg16[%c8_93, %c0_94] : memref<64x128xf32, #tpu.memory_space<vmem>>, vector<8x128xf32>
    tpu.vector_store %arg16[%c8_93, %c0_94], %281 {strides = array<i32>} : memref<64x128xf32, #tpu.memory_space<vmem>>, vector<8x128xf32>,
    %c16_95 = arith.constant 16 : index
    %c0_96 = arith.constant 0 : index
    %283 = vector.load %arg14[%c16_95, %c0_96] : memref<64x384xf32, #tpu.memory_space<vmem>>, vector<8x384xf32>
    %284 = arith.truncf %281 : vector<8x128xf32> to vector<8x128xbf16>
    %cst_97 = arith.constant dense<0.000000e+00> : vector<8x384xf32>
    %285 = tpu.matmul %284, %227, %cst_97 {dimension_numbers = #tpu.dot_dimension_numbers<[1], [0], [0], [1], [0, 0, 1, 1], [], []>} : vector<8x128xbf16>, vector<128x384xbf16>, vector<8x384xf32> -> vector<8x384xf32>
    %286 = vector.extract_strided_slice %283 {offsets = [0, 0], sizes = [8, 256], strides = [1, 1]} : vector<8x384xf32> to vector<8x256xf32>
    %287 = vector.extract_strided_slice %285 {offsets = [0, 0], sizes = [8, 256], strides = [1, 1]} : vector<8x384xf32> to vector<8x256xf32>
    %288 = arith.addf %286, %287 : vector<8x256xf32>
    %289 = arith.negf %288 : vector<8x256xf32>
    %290 = math.exp %289 : vector<8x256xf32>
    %cst_98 = arith.constant 1.000000e+00 : f32
    %291 = vector.broadcast %cst_98 : f32 to vector<8x256xf32>
    %292 = arith.addf %291, %290 : vector<8x256xf32>
    %293 = arith.divf %291, %292 : vector<8x256xf32>
    %294 = vector.extract_strided_slice %293 {offsets = [0, 0], sizes = [8, 128], strides = [1, 1]} : vector<8x256xf32> to vector<8x128xf32>
    %295 = vector.extract_strided_slice %293 {offsets = [0, 128], sizes = [8, 128], strides = [1, 1]} : vector<8x256xf32> to vector<8x128xf32>
    %296 = vector.extract_strided_slice %283 {offsets = [0, 256], sizes = [8, 128], strides = [1, 1]} : vector<8x384xf32> to vector<8x128xf32>
    %297 = vector.extract_strided_slice %285 {offsets = [0, 256], sizes = [8, 128], strides = [1, 1]} : vector<8x384xf32> to vector<8x128xf32>
    %298 = arith.addf %297, %230 : vector<8x128xf32>
    %299 = arith.mulf %294, %298 : vector<8x128xf32>
    %300 = arith.addf %296, %299 : vector<8x128xf32>
    %301 = math.tanh %300 : vector<8x128xf32>
    %cst_99 = arith.constant 1.000000e+00 : f32
    %302 = vector.broadcast %cst_99 : f32 to vector<8x128xf32>
    %303 = arith.subf %302, %295 : vector<8x128xf32>
    %304 = arith.mulf %303, %301 : vector<8x128xf32>
    %305 = arith.mulf %295, %281 : vector<8x128xf32>
    %306 = arith.addf %304, %305 : vector<8x128xf32>
    %c16_100 = arith.constant 16 : index
    %c0_101 = arith.constant 0 : index
    %307 = vector.load %arg16[%c16_100, %c0_101] : memref<64x128xf32, #tpu.memory_space<vmem>>, vector<8x128xf32>
    tpu.vector_store %arg16[%c16_100, %c0_101], %306 {strides = array<i32>} : memref<64x128xf32, #tpu.memory_space<vmem>>, vector<8x128xf32>,
    %c24_102 = arith.constant 24 : index
    %c0_103 = arith.constant 0 : index
    %308 = vector.load %arg14[%c24_102, %c0_103] : memref<64x384xf32, #tpu.memory_space<vmem>>, vector<8x384xf32>
    %309 = arith.truncf %306 : vector<8x128xf32> to vector<8x128xbf16>
    %cst_104 = arith.constant dense<0.000000e+00> : vector<8x384xf32>
    %310 = tpu.matmul %309, %227, %cst_104 {dimension_numbers = #tpu.dot_dimension_numbers<[1], [0], [0], [1], [0, 0, 1, 1], [], []>} : vector<8x128xbf16>, vector<128x384xbf16>, vector<8x384xf32> -> vector<8x384xf32>
    %311 = vector.extract_strided_slice %308 {offsets = [0, 0], sizes = [8, 256], strides = [1, 1]} : vector<8x384xf32> to vector<8x256xf32>
    %312 = vector.extract_strided_slice %310 {offsets = [0, 0], sizes = [8, 256], strides = [1, 1]} : vector<8x384xf32> to vector<8x256xf32>
    %313 = arith.addf %311, %312 : vector<8x256xf32>
    %314 = arith.negf %313 : vector<8x256xf32>
    %315 = math.exp %314 : vector<8x256xf32>
    %cst_105 = arith.constant 1.000000e+00 : f32
    %316 = vector.broadcast %cst_105 : f32 to vector<8x256xf32>
    %317 = arith.addf %316, %315 : vector<8x256xf32>
    %318 = arith.divf %316, %317 : vector<8x256xf32>
    %319 = vector.extract_strided_slice %318 {offsets = [0, 0], sizes = [8, 128], strides = [1, 1]} : vector<8x256xf32> to vector<8x128xf32>
    %320 = vector.extract_strided_slice %318 {offsets = [0, 128], sizes = [8, 128], strides = [1, 1]} : vector<8x256xf32> to vector<8x128xf32>
    %321 = vector.extract_strided_slice %308 {offsets = [0, 256], sizes = [8, 128], strides = [1, 1]} : vector<8x384xf32> to vector<8x128xf32>
    %322 = vector.extract_strided_slice %310 {offsets = [0, 256], sizes = [8, 128], strides = [1, 1]} : vector<8x384xf32> to vector<8x128xf32>
    %323 = arith.addf %322, %230 : vector<8x128xf32>
    %324 = arith.mulf %319, %323 : vector<8x128xf32>
    %325 = arith.addf %321, %324 : vector<8x128xf32>
    %326 = math.tanh %325 : vector<8x128xf32>
    %cst_106 = arith.constant 1.000000e+00 : f32
    %327 = vector.broadcast %cst_106 : f32 to vector<8x128xf32>
    %328 = arith.subf %327, %320 : vector<8x128xf32>
    %329 = arith.mulf %328, %326 : vector<8x128xf32>
    %330 = arith.mulf %320, %306 : vector<8x128xf32>
    %331 = arith.addf %329, %330 : vector<8x128xf32>
    %c24_107 = arith.constant 24 : index
    %c0_108 = arith.constant 0 : index
    %332 = vector.load %arg16[%c24_107, %c0_108] : memref<64x128xf32, #tpu.memory_space<vmem>>, vector<8x128xf32>
    tpu.vector_store %arg16[%c24_107, %c0_108], %331 {strides = array<i32>} : memref<64x128xf32, #tpu.memory_space<vmem>>, vector<8x128xf32>,
    %c32_109 = arith.constant 32 : index
    %c0_110 = arith.constant 0 : index
    %333 = vector.load %arg14[%c32_109, %c0_110] : memref<64x384xf32, #tpu.memory_space<vmem>>, vector<8x384xf32>
    %334 = arith.truncf %331 : vector<8x128xf32> to vector<8x128xbf16>
    %cst_111 = arith.constant dense<0.000000e+00> : vector<8x384xf32>
    %335 = tpu.matmul %334, %227, %cst_111 {dimension_numbers = #tpu.dot_dimension_numbers<[1], [0], [0], [1], [0, 0, 1, 1], [], []>} : vector<8x128xbf16>, vector<128x384xbf16>, vector<8x384xf32> -> vector<8x384xf32>
    %336 = vector.extract_strided_slice %333 {offsets = [0, 0], sizes = [8, 256], strides = [1, 1]} : vector<8x384xf32> to vector<8x256xf32>
    %337 = vector.extract_strided_slice %335 {offsets = [0, 0], sizes = [8, 256], strides = [1, 1]} : vector<8x384xf32> to vector<8x256xf32>
    %338 = arith.addf %336, %337 : vector<8x256xf32>
    %339 = arith.negf %338 : vector<8x256xf32>
    %340 = math.exp %339 : vector<8x256xf32>
    %cst_112 = arith.constant 1.000000e+00 : f32
    %341 = vector.broadcast %cst_112 : f32 to vector<8x256xf32>
    %342 = arith.addf %341, %340 : vector<8x256xf32>
    %343 = arith.divf %341, %342 : vector<8x256xf32>
    %344 = vector.extract_strided_slice %343 {offsets = [0, 0], sizes = [8, 128], strides = [1, 1]} : vector<8x256xf32> to vector<8x128xf32>
    %345 = vector.extract_strided_slice %343 {offsets = [0, 128], sizes = [8, 128], strides = [1, 1]} : vector<8x256xf32> to vector<8x128xf32>
    %346 = vector.extract_strided_slice %333 {offsets = [0, 256], sizes = [8, 128], strides = [1, 1]} : vector<8x384xf32> to vector<8x128xf32>
    %347 = vector.extract_strided_slice %335 {offsets = [0, 256], sizes = [8, 128], strides = [1, 1]} : vector<8x384xf32> to vector<8x128xf32>
    %348 = arith.addf %347, %230 : vector<8x128xf32>
    %349 = arith.mulf %344, %348 : vector<8x128xf32>
    %350 = arith.addf %346, %349 : vector<8x128xf32>
    %351 = math.tanh %350 : vector<8x128xf32>
    %cst_113 = arith.constant 1.000000e+00 : f32
    %352 = vector.broadcast %cst_113 : f32 to vector<8x128xf32>
    %353 = arith.subf %352, %345 : vector<8x128xf32>
    %354 = arith.mulf %353, %351 : vector<8x128xf32>
    %355 = arith.mulf %345, %331 : vector<8x128xf32>
    %356 = arith.addf %354, %355 : vector<8x128xf32>
    %c32_114 = arith.constant 32 : index
    %c0_115 = arith.constant 0 : index
    %357 = vector.load %arg16[%c32_114, %c0_115] : memref<64x128xf32, #tpu.memory_space<vmem>>, vector<8x128xf32>
    tpu.vector_store %arg16[%c32_114, %c0_115], %356 {strides = array<i32>} : memref<64x128xf32, #tpu.memory_space<vmem>>, vector<8x128xf32>,
    %c40_116 = arith.constant 40 : index
    %c0_117 = arith.constant 0 : index
    %358 = vector.load %arg14[%c40_116, %c0_117] : memref<64x384xf32, #tpu.memory_space<vmem>>, vector<8x384xf32>
    %359 = arith.truncf %356 : vector<8x128xf32> to vector<8x128xbf16>
    %cst_118 = arith.constant dense<0.000000e+00> : vector<8x384xf32>
    %360 = tpu.matmul %359, %227, %cst_118 {dimension_numbers = #tpu.dot_dimension_numbers<[1], [0], [0], [1], [0, 0, 1, 1], [], []>} : vector<8x128xbf16>, vector<128x384xbf16>, vector<8x384xf32> -> vector<8x384xf32>
    %361 = vector.extract_strided_slice %358 {offsets = [0, 0], sizes = [8, 256], strides = [1, 1]} : vector<8x384xf32> to vector<8x256xf32>
    %362 = vector.extract_strided_slice %360 {offsets = [0, 0], sizes = [8, 256], strides = [1, 1]} : vector<8x384xf32> to vector<8x256xf32>
    %363 = arith.addf %361, %362 : vector<8x256xf32>
    %364 = arith.negf %363 : vector<8x256xf32>
    %365 = math.exp %364 : vector<8x256xf32>
    %cst_119 = arith.constant 1.000000e+00 : f32
    %366 = vector.broadcast %cst_119 : f32 to vector<8x256xf32>
    %367 = arith.addf %366, %365 : vector<8x256xf32>
    %368 = arith.divf %366, %367 : vector<8x256xf32>
    %369 = vector.extract_strided_slice %368 {offsets = [0, 0], sizes = [8, 128], strides = [1, 1]} : vector<8x256xf32> to vector<8x128xf32>
    %370 = vector.extract_strided_slice %368 {offsets = [0, 128], sizes = [8, 128], strides = [1, 1]} : vector<8x256xf32> to vector<8x128xf32>
    %371 = vector.extract_strided_slice %358 {offsets = [0, 256], sizes = [8, 128], strides = [1, 1]} : vector<8x384xf32> to vector<8x128xf32>
    %372 = vector.extract_strided_slice %360 {offsets = [0, 256], sizes = [8, 128], strides = [1, 1]} : vector<8x384xf32> to vector<8x128xf32>
    %373 = arith.addf %372, %230 : vector<8x128xf32>
    %374 = arith.mulf %369, %373 : vector<8x128xf32>
    %375 = arith.addf %371, %374 : vector<8x128xf32>
    %376 = math.tanh %375 : vector<8x128xf32>
    %cst_120 = arith.constant 1.000000e+00 : f32
    %377 = vector.broadcast %cst_120 : f32 to vector<8x128xf32>
    %378 = arith.subf %377, %370 : vector<8x128xf32>
    %379 = arith.mulf %378, %376 : vector<8x128xf32>
    %380 = arith.mulf %370, %356 : vector<8x128xf32>
    %381 = arith.addf %379, %380 : vector<8x128xf32>
    %c40_121 = arith.constant 40 : index
    %c0_122 = arith.constant 0 : index
    %382 = vector.load %arg16[%c40_121, %c0_122] : memref<64x128xf32, #tpu.memory_space<vmem>>, vector<8x128xf32>
    tpu.vector_store %arg16[%c40_121, %c0_122], %381 {strides = array<i32>} : memref<64x128xf32, #tpu.memory_space<vmem>>, vector<8x128xf32>,
    %c48_123 = arith.constant 48 : index
    %c0_124 = arith.constant 0 : index
    %383 = vector.load %arg14[%c48_123, %c0_124] : memref<64x384xf32, #tpu.memory_space<vmem>>, vector<8x384xf32>
    %384 = arith.truncf %381 : vector<8x128xf32> to vector<8x128xbf16>
    %cst_125 = arith.constant dense<0.000000e+00> : vector<8x384xf32>
    %385 = tpu.matmul %384, %227, %cst_125 {dimension_numbers = #tpu.dot_dimension_numbers<[1], [0], [0], [1], [0, 0, 1, 1], [], []>} : vector<8x128xbf16>, vector<128x384xbf16>, vector<8x384xf32> -> vector<8x384xf32>
    %386 = vector.extract_strided_slice %383 {offsets = [0, 0], sizes = [8, 256], strides = [1, 1]} : vector<8x384xf32> to vector<8x256xf32>
    %387 = vector.extract_strided_slice %385 {offsets = [0, 0], sizes = [8, 256], strides = [1, 1]} : vector<8x384xf32> to vector<8x256xf32>
    %388 = arith.addf %386, %387 : vector<8x256xf32>
    %389 = arith.negf %388 : vector<8x256xf32>
    %390 = math.exp %389 : vector<8x256xf32>
    %cst_126 = arith.constant 1.000000e+00 : f32
    %391 = vector.broadcast %cst_126 : f32 to vector<8x256xf32>
    %392 = arith.addf %391, %390 : vector<8x256xf32>
    %393 = arith.divf %391, %392 : vector<8x256xf32>
    %394 = vector.extract_strided_slice %393 {offsets = [0, 0], sizes = [8, 128], strides = [1, 1]} : vector<8x256xf32> to vector<8x128xf32>
    %395 = vector.extract_strided_slice %393 {offsets = [0, 128], sizes = [8, 128], strides = [1, 1]} : vector<8x256xf32> to vector<8x128xf32>
    %396 = vector.extract_strided_slice %383 {offsets = [0, 256], sizes = [8, 128], strides = [1, 1]} : vector<8x384xf32> to vector<8x128xf32>
    %397 = vector.extract_strided_slice %385 {offsets = [0, 256], sizes = [8, 128], strides = [1, 1]} : vector<8x384xf32> to vector<8x128xf32>
    %398 = arith.addf %397, %230 : vector<8x128xf32>
    %399 = arith.mulf %394, %398 : vector<8x128xf32>
    %400 = arith.addf %396, %399 : vector<8x128xf32>
    %401 = math.tanh %400 : vector<8x128xf32>
    %cst_127 = arith.constant 1.000000e+00 : f32
    %402 = vector.broadcast %cst_127 : f32 to vector<8x128xf32>
    %403 = arith.subf %402, %395 : vector<8x128xf32>
    %404 = arith.mulf %403, %401 : vector<8x128xf32>
    %405 = arith.mulf %395, %381 : vector<8x128xf32>
    %406 = arith.addf %404, %405 : vector<8x128xf32>
    %c48_128 = arith.constant 48 : index
    %c0_129 = arith.constant 0 : index
    %407 = vector.load %arg16[%c48_128, %c0_129] : memref<64x128xf32, #tpu.memory_space<vmem>>, vector<8x128xf32>
    tpu.vector_store %arg16[%c48_128, %c0_129], %406 {strides = array<i32>} : memref<64x128xf32, #tpu.memory_space<vmem>>, vector<8x128xf32>,
    %c56_130 = arith.constant 56 : index
    %c0_131 = arith.constant 0 : index
    %408 = vector.load %arg14[%c56_130, %c0_131] : memref<64x384xf32, #tpu.memory_space<vmem>>, vector<8x384xf32>
    %409 = arith.truncf %406 : vector<8x128xf32> to vector<8x128xbf16>
    %cst_132 = arith.constant dense<0.000000e+00> : vector<8x384xf32>
    %410 = tpu.matmul %409, %227, %cst_132 {dimension_numbers = #tpu.dot_dimension_numbers<[1], [0], [0], [1], [0, 0, 1, 1], [], []>} : vector<8x128xbf16>, vector<128x384xbf16>, vector<8x384xf32> -> vector<8x384xf32>
    %411 = vector.extract_strided_slice %408 {offsets = [0, 0], sizes = [8, 256], strides = [1, 1]} : vector<8x384xf32> to vector<8x256xf32>
    %412 = vector.extract_strided_slice %410 {offsets = [0, 0], sizes = [8, 256], strides = [1, 1]} : vector<8x384xf32> to vector<8x256xf32>
    %413 = arith.addf %411, %412 : vector<8x256xf32>
    %414 = arith.negf %413 : vector<8x256xf32>
    %415 = math.exp %414 : vector<8x256xf32>
    %cst_133 = arith.constant 1.000000e+00 : f32
    %416 = vector.broadcast %cst_133 : f32 to vector<8x256xf32>
    %417 = arith.addf %416, %415 : vector<8x256xf32>
    %418 = arith.divf %416, %417 : vector<8x256xf32>
    %419 = vector.extract_strided_slice %418 {offsets = [0, 0], sizes = [8, 128], strides = [1, 1]} : vector<8x256xf32> to vector<8x128xf32>
    %420 = vector.extract_strided_slice %418 {offsets = [0, 128], sizes = [8, 128], strides = [1, 1]} : vector<8x256xf32> to vector<8x128xf32>
    %421 = vector.extract_strided_slice %408 {offsets = [0, 256], sizes = [8, 128], strides = [1, 1]} : vector<8x384xf32> to vector<8x128xf32>
    %422 = vector.extract_strided_slice %410 {offsets = [0, 256], sizes = [8, 128], strides = [1, 1]} : vector<8x384xf32> to vector<8x128xf32>
    %423 = arith.addf %422, %230 : vector<8x128xf32>
    %424 = arith.mulf %419, %423 : vector<8x128xf32>
    %425 = arith.addf %421, %424 : vector<8x128xf32>
    %426 = math.tanh %425 : vector<8x128xf32>
    %cst_134 = arith.constant 1.000000e+00 : f32
    %427 = vector.broadcast %cst_134 : f32 to vector<8x128xf32>
    %428 = arith.subf %427, %420 : vector<8x128xf32>
    %429 = arith.mulf %428, %426 : vector<8x128xf32>
    %430 = arith.mulf %420, %406 : vector<8x128xf32>
    %431 = arith.addf %429, %430 : vector<8x128xf32>
    %c56_135 = arith.constant 56 : index
    %c0_136 = arith.constant 0 : index
    %432 = vector.load %arg16[%c56_135, %c0_136] : memref<64x128xf32, #tpu.memory_space<vmem>>, vector<8x128xf32>
    tpu.vector_store %arg16[%c56_135, %c0_136], %431 {strides = array<i32>} : memref<64x128xf32, #tpu.memory_space<vmem>>, vector<8x128xf32>,
    %c1_137 = arith.constant 1 : index
    %c0_138 = arith.constant 0 : index
    %c0_139 = arith.constant 0 : index
    %433 = vector.load %arg13[%c1_137, %c0_138, %c0_139] : memref<2x8x128xf32, #tpu.memory_space<vmem>>, vector<1x8x128xf32>
    %434 = vector.shape_cast %433 : vector<1x8x128xf32> to vector<8x128xf32>
    %435 = vector.shape_cast %431 : vector<8x128xf32> to vector<1x8x128xf32>
    tpu.vector_store %arg13[%c1_137, %c0_138, %c0_139], %435 {strides = array<i32>} : memref<2x8x128xf32, #tpu.memory_space<vmem>>, vector<1x8x128xf32>,
    %c0_140 = arith.constant 0 : index
    %c0_141 = arith.constant 0 : index
    %436 = vector.load %arg16[%c0_140, %c0_141] : memref<64x128xf32, #tpu.memory_space<vmem>>, vector<64x128xf32>
    %437 = arith.truncf %436 : vector<64x128xf32> to vector<64x128xbf16>
    %c0_142 = arith.constant 0 : index
    %c0_143 = arith.constant 0 : index
    %438 = vector.load %arg10[%c0_142, %c0_143] : memref<128x128xbf16, #tpu.memory_space<vmem>>, vector<128x128xbf16>
    %cst_144 = arith.constant dense<0.000000e+00> : vector<64x128xf32>
    %439 = tpu.matmul %437, %438, %cst_144 {dimension_numbers = #tpu.dot_dimension_numbers<[1], [0], [0], [1], [0, 0, 1, 1], [], []>} : vector<64x128xbf16>, vector<128x128xbf16>, vector<64x128xf32> -> vector<64x128xf32>
    %c0_145 = arith.constant 0 : index
    %c0_146 = arith.constant 0 : index
    %440 = vector.load %arg11[%c0_145, %c0_146] : memref<1x128xf32, #tpu.memory_space<vmem>>, vector<1x128xf32>
    %441 = vector.shape_cast %440 : vector<1x128xf32> to vector<1x128xf32>
    %442 = vector.broadcast %441 : vector<1x128xf32> to vector<64x128xf32>
    %443 = arith.addf %439, %442 : vector<64x128xf32>
    %c0_147 = arith.constant 0 : index
    %c0_148 = arith.constant 0 : index
    %444 = vector.load %arg12[%c0_147, %c0_148] : memref<64x128xf32, #tpu.memory_space<vmem>>, vector<64x128xf32>
    tpu.vector_store %arg12[%c0_147, %c0_148], %443 {strides = array<i32>} : memref<64x128xf32, #tpu.memory_space<vmem>>, vector<64x128xf32>,
    return
  }
}

</mosaic_0001>

<llo_original>
// kernel: vae_decode_pallas.1
$region0: #{vae_decode_pallas.1}
  #allocation0 [shape = 'u32[]', space=smem, size = 0x4, offset = 0x4, fixed_abs, tag = 'smem constant byte address 0x4 - core index']
  #allocation1 [shape = 'u32[72,128]{1,0:T(1,128)}', space=vmem, size = 0x9000, scoped, tag = 'internal scratch']
  #allocation2 [shape = 'f32[64,384]{1,0:T(8,128)}', space=vmem, size = 0x18000, scoped, tag = 'scratch operand']
  #allocation3 [shape = 'f32[64,128]{1,0:T(8,128)}', space=vmem, size = 0x8000, scoped, tag = 'scratch operand']
  #allocation4 [shape = 'f32[64,128]{1,0:T(8,128)}', space=vmem, size = 0x8000, scoped, tag = 'scratch operand']
  %s0 = inlined_call_operand.vmem [shape: f32[64,128], index: 0, kind: input, shape index: {}]
  %s1 = inlined_call_operand.vmem [shape: f32[2,8,128], index: 1, kind: input, shape index: {}]
  %s2 = inlined_call_operand.hbm [shape: bf16[128,384], index: 2, kind: input, shape index: {}]
  %s3 = inlined_call_operand.hbm [shape: bf16[128,384], index: 3, kind: input, shape index: {}]
  %s4 = inlined_call_operand.vmem [shape: f32[1,384], index: 4, kind: input, shape index: {}]
  %s5 = inlined_call_operand.vmem [shape: f32[1,128], index: 5, kind: input, shape index: {}]
  %s6 = inlined_call_operand.hbm [shape: bf16[128,384], index: 6, kind: input, shape index: {}]
  %s7 = inlined_call_operand.hbm [shape: bf16[128,384], index: 7, kind: input, shape index: {}]
  %s8 = inlined_call_operand.vmem [shape: f32[1,384], index: 8, kind: input, shape index: {}]
  %s9 = inlined_call_operand.vmem [shape: f32[1,128], index: 9, kind: input, shape index: {}]
  %s10 = inlined_call_operand.vmem [shape: bf16[128,128], index: 10, kind: input, shape index: {}]
  %s11 = inlined_call_operand.vmem [shape: f32[1,128], index: 11, kind: input, shape index: {}]
  %s12 = inlined_call_operand.vmem [shape: f32[64,128], index: 12, kind: output, shape index: {0}]
  %s13 = inlined_call_operand.vmem [shape: f32[2,8,128], index: 13, kind: output, shape index: {1}]
  %14 = xla_tuple %s12, %s13
  %s15 = sld [smem:[#allocation0]]
  $region82: #{vae_decode_pallas.1} parent=0
    _
  %s17 = ssub.s32 1, %s15
  %s18 = scalar_select 0, %s17, %s15
  $region1: #{vae_decode_pallas.1} parent=0
    #allocation5 [shape = 'u8[98304]{0}', space=vmem, size = 0x18000, scoped, tag = 'input window, operand 2, single buffered']
    #allocation6 [shape = 's32[1]{0}', space=sflag, size = 0x4, scoped, tag = 'scoped memory for vae_decode_pallas.1']
    #allocation7 [shape = 'u8[98304]{0}', space=vmem, size = 0x18000, scoped, tag = 'input window, operand 3, single buffered']
    #allocation8 [shape = 's32[1]{0}', space=sflag, size = 0x4, scoped, tag = 'scoped memory for vae_decode_pallas.1']
    #allocation9 [shape = 'u8[98304]{0}', space=vmem, size = 0x18000, scoped, tag = 'input window, operand 6, single buffered']
    #allocation10 [shape = 'u8[98304]{0}', space=vmem, size = 0x18000, scoped, tag = 'input window, operand 7, single buffered']
    #allocation11 [shape = 's32[1]{0}', space=sflag, size = 0x4, scoped, tag = 'scoped memory for vae_decode_pallas.1']
    %19 = vsyncpa [#allocation6], 0
    %20 = vsyncpa [#allocation8], 0
    %21 = vsyncpa [#allocation11], 0
    // Predicated region
    $region2: #{vae_decode_pallas.1} parent=1 // pred_check
      _
    $region3: #{vae_decode_pallas.1} parent=1 // pred_check_branch
      %23 = sbr.rel (0) target = $region5
    $region4: #{vae_decode_pallas.1} parent=1 // pred_region
      _
    $region5: #{vae_decode_pallas.1} parent=1 // pred_fallthru
      _
    // Predicated region
    $region6: #{vae_decode_pallas.1} parent=1 // pred_check
      _
    $region7: #{vae_decode_pallas.1} parent=1 // pred_check_branch
      %25 = sbr.rel (0) target = $region9
    $region8: #{vae_decode_pallas.1} parent=1 // pred_region
      _
    $region9: #{vae_decode_pallas.1} parent=1 // pred_fallthru
      _
    // Predicated region
    $region10: #{vae_decode_pallas.1} parent=1 // pred_check
      _
    $region11: #{vae_decode_pallas.1} parent=1 // pred_check_branch
      %27 = sbr.rel (0) target = $region13
    $region12: #{vae_decode_pallas.1} parent=1 // pred_region
      %29 = vsyncadd [#allocation6], 0
      %s30 = sshll.u32 %s2, 4
      %s31 = int_to_ptr.hbm [resolvable:$true] %s30
      %s32 = sshll.u32 [#allocation5], 4
      %s33 = int_to_ptr.vmem [resolvable:$true] %s32
      %38 = dma.hbm_to_vmem [thread:$0]  %s31, 3072, %s33, [#allocation6], 192, 192, 12
    $region13: #{vae_decode_pallas.1} parent=1 // pred_fallthru
      _
    // Predicated region
    $region14: #{vae_decode_pallas.1} parent=1 // pred_check
      _
    $region15: #{vae_decode_pallas.1} parent=1 // pred_check_branch
      %40 = sbr.rel (0) target = $region17
    $region16: #{vae_decode_pallas.1} parent=1 // pred_region
      %42 = vsyncadd [#allocation8], 0
      %s43 = sshll.u32 %s3, 4
      %s44 = int_to_ptr.hbm [resolvable:$true] %s43
      %s45 = sshll.u32 [#allocation7], 4
      %s46 = int_to_ptr.vmem [resolvable:$true] %s45
      %51 = dma.hbm_to_vmem [thread:$0]  %s44, 3072, %s46, [#allocation8], 192, 192, 12
    $region17: #{vae_decode_pallas.1} parent=1 // pred_fallthru
      _
    // Predicated region
    $region18: #{vae_decode_pallas.1} parent=1 // pred_check
      _
    $region19: #{vae_decode_pallas.1} parent=1 // pred_check_branch
      %53 = sbr.rel (0) target = $region21
    $region20: #{vae_decode_pallas.1} parent=1 // pred_region
      _
    $region21: #{vae_decode_pallas.1} parent=1 // pred_fallthru
      _
    // Predicated region
    $region22: #{vae_decode_pallas.1} parent=1 // pred_check
      _
    $region23: #{vae_decode_pallas.1} parent=1 // pred_check_branch
      %55 = sbr.rel (0) target = $region25
    $region24: #{vae_decode_pallas.1} parent=1 // pred_region
      _
    $region25: #{vae_decode_pallas.1} parent=1 // pred_fallthru
      _
    // Predicated region
    $region26: #{vae_decode_pallas.1} parent=1 // pred_check
      _
    $region27: #{vae_decode_pallas.1} parent=1 // pred_check_branch
      %57 = sbr.rel (0) target = $region29
    $region28: #{vae_decode_pallas.1} parent=1 // pred_region
      %59 = vsyncadd [#allocation8], 0
      %s60 = sshll.u32 %s6, 4
      %s61 = int_to_ptr.hbm [resolvable:$true] %s60
      %s62 = sshll.u32 [#allocation9], 4
      %s63 = int_to_ptr.vmem [resolvable:$true] %s62
      %68 = dma.hbm_to_vmem [thread:$0]  %s61, 3072, %s63, [#allocation8], 192, 192, 12
    $region29: #{vae_decode_pallas.1} parent=1 // pred_fallthru
      _
    // Predicated region
    $region30: #{vae_decode_pallas.1} parent=1 // pred_check
      _
    $region31: #{vae_decode_pallas.1} parent=1 // pred_check_branch
      %70 = sbr.rel (0) target = $region33
    $region32: #{vae_decode_pallas.1} parent=1 // pred_region
      %72 = vsyncadd [#allocation11], 0
      %s73 = sshll.u32 %s7, 4
      %s74 = int_to_ptr.hbm [resolvable:$true] %s73
      %s75 = sshll.u32 [#allocation10], 4
      %s76 = int_to_ptr.vmem [resolvable:$true] %s75
      %81 = dma.hbm_to_vmem [thread:$0]  %s74, 3072, %s76, [#allocation11], 192, 192, 12
    $region33: #{vae_decode_pallas.1} parent=1 // pred_fallthru
      _
    // Predicated region
    $region34: #{vae_decode_pallas.1} parent=1 // pred_check
      _
    $region35: #{vae_decode_pallas.1} parent=1 // pred_check_branch
      %83 = sbr.rel (0) target = $region37
    $region36: #{vae_decode_pallas.1} parent=1 // pred_region
      _
    $region37: #{vae_decode_pallas.1} parent=1 // pred_fallthru
      _
    // Predicated region
    $region38: #{vae_decode_pallas.1} parent=1 // pred_check
      _
    $region39: #{vae_decode_pallas.1} parent=1 // pred_check_branch
      %85 = sbr.rel (0) target = $region41
    $region40: #{vae_decode_pallas.1} parent=1 // pred_region
      _
    $region41: #{vae_decode_pallas.1} parent=1 // pred_fallthru
      _
    // Predicated region
    $region42: #{vae_decode_pallas.1} parent=1 // pred_check
      _
    $region43: #{vae_decode_pallas.1} parent=1 // pred_check_branch
      %87 = sbr.rel (0) target = $region45
    $region44: #{vae_decode_pallas.1} parent=1 // pred_region
      _
    $region45: #{vae_decode_pallas.1} parent=1 // pred_fallthru
      _
    // Predicated region
    $region46: #{vae_decode_pallas.1} parent=1 // pred_check
      _
    $region47: #{vae_decode_pallas.1} parent=1 // pred_check_branch
      %89 = sbr.rel (0) target = $region49
    $region48: #{vae_decode_pallas.1} parent=1 // pred_region
      _
    $region49: #{vae_decode_pallas.1} parent=1 // pred_fallthru
      _
    // Predicated region
    $region50: #{vae_decode_pallas.1} parent=1 // pred_check
      _
    $region51: #{vae_decode_pallas.1} parent=1 // pred_check_branch
      %91 = sbr.rel (0) target = $region53
    $region52: #{vae_decode_pallas.1} parent=1 // pred_region
      %93 = dma.done [#allocation6], 3072
    $region53: #{vae_decode_pallas.1} parent=1 // pred_fallthru
      _
    // Predicated region
    $region54: #{vae_decode_pallas.1} parent=1 // pred_check
      _
    $region55: #{vae_decode_pallas.1} parent=1 // pred_check_branch
      %95 = sbr.rel (0) target = $region57
    $region56: #{vae_decode_pallas.1} parent=1 // pred_region
      %97 = dma.done [#allocation8], 3072
    $region57: #{vae_decode_pallas.1} parent=1 // pred_fallthru
      _
    // Predicated region
    $region58: #{vae_decode_pallas.1} parent=1 // pred_check
      _
    $region59: #{vae_decode_pallas.1} parent=1 // pred_check_branch
      %99 = sbr.rel (0) target = $region61
    $region60: #{vae_decode_pallas.1} parent=1 // pred_region
      %101 = dma.done [#allocation8], 3072
    $region61: #{vae_decode_pallas.1} parent=1 // pred_fallthru
      _
    // Predicated region
    $region62: #{vae_decode_pallas.1} parent=1 // pred_check
      _
    $region63: #{vae_decode_pallas.1} parent=1 // pred_check_branch
      %103 = sbr.rel (0) target = $region65
    $region64: #{vae_decode_pallas.1} parent=1 // pred_region
      %105 = dma.done [#allocation11], 3072
    $region65: #{vae_decode_pallas.1} parent=1 // pred_fallthru
      _
    %v106 = vld [vmem:[%s0] sm:$0xff]
    %v107 = vld [vmem:[%s0 + $0x8] sm:$0xff]
    %v108 = vld [vmem:[%s0 + $0x10] sm:$0xff]
    %v109 = vld [vmem:[%s0 + $0x18] sm:$0xff]
    %v110 = vld [vmem:[%s0 + $0x20] sm:$0xff]
    %v111 = vld [vmem:[%s0 + $0x28] sm:$0xff]
    %v112 = vld [vmem:[%s0 + $0x30] sm:$0xff]
    %v113 = vld [vmem:[%s0 + $0x38] sm:$0xff]
    %v114 = vpack.c.bf16 %v107, %v106
    %v115 = vpack.c.bf16 %v109, %v108
    %v116 = vpack.c.bf16 %v111, %v110
    %v117 = vpack.c.bf16 %v113, %v112
    %v118 = vld [vmem:[#allocation5] sm:$0xff]
    %v119 = vld [vmem:[#allocation5 + $0x8] sm:$0xf]
    %v120 = vld [vmem:[#allocation5 + $0xc] sm:$0xff]
    %v121 = vld [vmem:[#allocation5 + $0x14] sm:$0xf]
    %v122 = vld [vmem:[#allocation5 + $0x18] sm:$0xff]
    %v123 = vld [vmem:[#allocation5 + $0x20] sm:$0xf]
    %v124 = vld [vmem:[#allocation5 + $0x24] sm:$0xff]
    %v125 = vld [vmem:[#allocation5 + $0x2c] sm:$0xf]
    %v126 = vld [vmem:[#allocation5 + $0x30] sm:$0xff]
    %v127 = vld [vmem:[#allocation5 + $0x38] sm:$0xf]
    %v128 = vld [vmem:[#allocation5 + $0x3c] sm:$0xff]
    %v129 = vld [vmem:[#allocation5 + $0x44] sm:$0xf]
    %v130 = vld [vmem:[#allocation5 + $0x48] sm:$0xff]
    %v131 = vld [vmem:[#allocation5 + $0x50] sm:$0xf]
    %v132 = vld [vmem:[#allocation5 + $0x54] sm:$0xff]
    %v133 = vld [vmem:[#allocation5 + $0x5c] sm:$0xf]
    %v134 = vld [vmem:[#allocation5 + $0x60] sm:$0xff]
    %v135 = vld [vmem:[#allocation5 + $0x68] sm:$0xf]
    %v136 = vld [vmem:[#allocation5 + $0x6c] sm:$0xff]
    %v137 = vld [vmem:[#allocation5 + $0x74] sm:$0xf]
    %v138 = vld [vmem:[#allocation5 + $0x78] sm:$0xff]
    %v139 = vld [vmem:[#allocation5 + $0x80] sm:$0xf]
    %v140 = vld [vmem:[#allocation5 + $0x84] sm:$0xff]
    %v141 = vld [vmem:[#allocation5 + $0x8c] sm:$0xf]
    %v142 = vld [vmem:[#allocation5 + $0x90] sm:$0xff]
    %v143 = vld [vmem:[#allocation5 + $0x98] sm:$0xf]
    %v144 = vld [vmem:[#allocation5 + $0x9c] sm:$0xff]
    %v145 = vld [vmem:[#allocation5 + $0xa4] sm:$0xf]
    %v146 = vld [vmem:[#allocation5 + $0xa8] sm:$0xff]
    %v147 = vld [vmem:[#allocation5 + $0xb0] sm:$0xf]
    %v148 = vld [vmem:[#allocation5 + $0xb4] sm:$0xff]
    %v149 = vld [vmem:[#allocation5 + $0xbc] sm:$0xf]
    %v150 = vld [vmem:[%s4] sm:$0x7]
    %v152 = vperm.slane %v150, 0
    %v153 = vperm.slane %v150, 1
    %v154 = vperm.slane %v150, 2
    %v190 = vunpack.c.l.b16 %v118
    %v191 = vunpack.c.h.b16 %v118
    %v192 = vunpack.c.l.b16 %v119
    %v193 = vunpack.c.l.b16 %v120
    %v194 = vunpack.c.h.b16 %v120
    %v195 = vunpack.c.l.b16 %v121
    %v196 = vunpack.c.l.b16 %v122
    %v197 = vunpack.c.h.b16 %v122
    %v198 = vunpack.c.l.b16 %v123
    %v199 = vunpack.c.l.b16 %v124
    %v200 = vunpack.c.h.b16 %v124
    %v201 = vunpack.c.l.b16 %v125
    %v202 = vunpack.c.l.b16 %v126
    %v203 = vunpack.c.h.b16 %v126
    %v204 = vunpack.c.l.b16 %v127
    %v205 = vunpack.c.l.b16 %v128
    %v206 = vunpack.c.h.b16 %v128
    %v207 = vunpack.c.l.b16 %v129
    %v208 = vunpack.c.l.b16 %v130
    %v209 = vunpack.c.h.b16 %v130
    %v210 = vunpack.c.l.b16 %v131
    %v211 = vunpack.c.l.b16 %v132
    %v212 = vunpack.c.h.b16 %v132
    %v213 = vunpack.c.l.b16 %v133
    %v214 = vunpack.c.l.b16 %v134
    %v215 = vunpack.c.h.b16 %v134
    %v216 = vunpack.c.l.b16 %v135
    %v217 = vunpack.c.l.b16 %v136
    %v218 = vunpack.c.h.b16 %v136
    %v219 = vunpack.c.l.b16 %v137
    %v220 = vunpack.c.l.b16 %v138
    %v221 = vunpack.c.h.b16 %v138
    %v222 = vunpack.c.l.b16 %v139
    %v223 = vunpack.c.l.b16 %v140
    %v224 = vunpack.c.h.b16 %v140
    %v225 = vunpack.c.l.b16 %v141
    %v226 = vunpack.c.l.b16 %v142
    %v227 = vunpack.c.h.b16 %v142
    %v228 = vunpack.c.l.b16 %v143
    %v229 = vunpack.c.l.b16 %v144
    %v230 = vunpack.c.h.b16 %v144
    %v231 = vunpack.c.l.b16 %v145
    %v232 = vunpack.c.l.b16 %v146
    %v233 = vunpack.c.h.b16 %v146
    %v234 = vunpack.c.l.b16 %v147
    %v235 = vunpack.c.l.b16 %v148
    %v236 = vunpack.c.h.b16 %v148
    %v237 = vunpack.c.l.b16 %v149
    %v238 = vpack.c.b16 %v193, %v190
    %v239 = vpack.c.b16 %v194, %v191
    %v240 = vpack.c.b16 %v195, %v192
    %v241 = vpack.c.b16 %v199, %v196
    %v242 = vpack.c.b16 %v200, %v197
    %v243 = vpack.c.b16 %v201, %v198
    %v244 = vpack.c.b16 %v205, %v202
    %v245 = vpack.c.b16 %v206, %v203
    %v246 = vpack.c.b16 %v207, %v204
    %v247 = vpack.c.b16 %v211, %v208
    %v248 = vpack.c.b16 %v212, %v209
    %v249 = vpack.c.b16 %v213, %v210
    %v250 = vpack.c.b16 %v217, %v214
    %v251 = vpack.c.b16 %v218, %v215
    %v252 = vpack.c.b16 %v219, %v216
    %v253 = vpack.c.b16 %v223, %v220
    %v254 = vpack.c.b16 %v224, %v221
    %v255 = vpack.c.b16 %v225, %v222
    %v256 = vpack.c.b16 %v229, %v226
    %v257 = vpack.c.b16 %v230, %v227
    %v258 = vpack.c.b16 %v231, %v228
    %v259 = vpack.c.b16 %v235, %v232
    %v260 = vpack.c.b16 %v236, %v233
    %v261 = vpack.c.b16 %v237, %v234
    %286 = vmatpush.bf16.msra.mxu0 %v259
    %287 = vmatpush.bf16.msra.mxu0 %v256
    %288 = vmatpush.bf16.msra.mxu0 %v253
    %289 = vmatpush.bf16.msra.mxu0 %v250
    %290 = vmatpush.bf16.msra.mxu0 %v247
    %291 = vmatpush.bf16.msra.mxu0 %v244
    %292 = vmatpush.bf16.msra.mxu0 %v241
    %293 = vmatpush.bf16.msra.mxu0 %v238
    %294 = vmatmul.bf16.gmra.mxu0 %v114
    %v295 = vpop.f32.mrf.mxu0
    %v296 = vadd.f32 %v152, %v295
    %v297 = vpop.f32.mrf.mxu0
    %v298 = vadd.f32 %v152, %v297
    %299 = vmatmul.bf16.gmra.mxu0 %v115
    %v300 = vpop.f32.mrf.mxu0
    %v301 = vadd.f32 %v152, %v300
    %v302 = vpop.f32.mrf.mxu0
    %v303 = vadd.f32 %v152, %v302
    %304 = vmatmul.bf16.gmra.mxu0 %v116
    %v305 = vpop.f32.mrf.mxu0
    %v306 = vadd.f32 %v152, %v305
    %v307 = vpop.f32.mrf.mxu0
    %v308 = vadd.f32 %v152, %v307
    %309 = vmatmul.bf16.gmra.mxu0 %v117
    %v310 = vpop.f32.mrf.mxu0
    %v311 = vadd.f32 %v152, %v310
    %v312 = vpop.f32.mrf.mxu0
    %v313 = vadd.f32 %v152, %v312
    %314 = vdwg.mxu0
    %315 = vmatpush.bf16.msra.mxu0 %v260
    %316 = vmatpush.bf16.msra.mxu0 %v257
    %317 = vmatpush.bf16.msra.mxu0 %v254
    %318 = vmatpush.bf16.msra.mxu0 %v251
    %319 = vmatpush.bf16.msra.mxu0 %v248
    %320 = vmatpush.bf16.msra.mxu0 %v245
    %321 = vmatpush.bf16.msra.mxu0 %v242
    %322 = vmatpush.bf16.msra.mxu0 %v239
    %323 = vmatmul.bf16.gmra.mxu0 %v114
    %v324 = vpop.f32.mrf.mxu0
    %v325 = vadd.f32 %v153, %v324
    %v326 = vpop.f32.mrf.mxu0
    %v327 = vadd.f32 %v153, %v326
    %328 = vmatmul.bf16.gmra.mxu0 %v115
    %v329 = vpop.f32.mrf.mxu0
    %v330 = vadd.f32 %v153, %v329
    %v331 = vpop.f32.mrf.mxu0
    %v332 = vadd.f32 %v153, %v331
    %333 = vmatmul.bf16.gmra.mxu0 %v116
    %v334 = vpop.f32.mrf.mxu0
    %v335 = vadd.f32 %v153, %v334
    %v336 = vpop.f32.mrf.mxu0
    %v337 = vadd.f32 %v153, %v336
    %338 = vmatmul.bf16.gmra.mxu0 %v117
    %v339 = vpop.f32.mrf.mxu0
    %v340 = vadd.f32 %v153, %v339
    %v341 = vpop.f32.mrf.mxu0
    %v342 = vadd.f32 %v153, %v341
    %343 = vdwg.mxu0
    %344 = vmatpush.bf16.msra.mxu0 %v261
    %345 = vmatpush.bf16.msra.mxu0 %v258
    %346 = vmatpush.bf16.msra.mxu0 %v255
    %347 = vmatpush.bf16.msra.mxu0 %v252
    %348 = vmatpush.bf16.msra.mxu0 %v249
    %349 = vmatpush.bf16.msra.mxu0 %v246
    %350 = vmatpush.bf16.msra.mxu0 %v243
    %351 = vmatpush.bf16.msra.mxu0 %v240
    %352 = vmatmul.bf16.gmra.mxu0 %v114
    %v353 = vpop.f32.mrf.mxu0
    %v354 = vadd.f32 %v154, %v353
    %v355 = vpop.f32.mrf.mxu0
    %v356 = vadd.f32 %v154, %v355
    %357 = vmatmul.bf16.gmra.mxu0 %v115
    %v358 = vpop.f32.mrf.mxu0
    %v359 = vadd.f32 %v154, %v358
    %v360 = vpop.f32.mrf.mxu0
    %v361 = vadd.f32 %v154, %v360
    %362 = vmatmul.bf16.gmra.mxu0 %v116
    %v363 = vpop.f32.mrf.mxu0
    %v364 = vadd.f32 %v154, %v363
    %v365 = vpop.f32.mrf.mxu0
    %v366 = vadd.f32 %v154, %v365
    %367 = vmatmul.bf16.gmra.mxu0 %v117
    %v368 = vpop.f32.mrf.mxu0
    %v369 = vadd.f32 %v154, %v368
    %v370 = vpop.f32.mrf.mxu0
    %v371 = vadd.f32 %v154, %v370
    %372 = vdwg.mxu0
    %373 = vst [vmem:[#allocation2] sm:$0xff] %v296
    %374 = vst [vmem:[#allocation2 + $0x8] sm:$0xff] %v325
    %375 = vst [vmem:[#allocation2 + $0x10] sm:$0xff] %v354
    %376 = vst [vmem:[#allocation2 + $0x18] sm:$0xff] %v298
    %377 = vst [vmem:[#allocation2 + $0x20] sm:$0xff] %v327
    %378 = vst [vmem:[#allocation2 + $0x28] sm:$0xff] %v356
    %379 = vst [vmem:[#allocation2 + $0x30] sm:$0xff] %v301
    %380 = vst [vmem:[#allocation2 + $0x38] sm:$0xff] %v330
    %381 = vst [vmem:[#allocation2 + $0x40] sm:$0xff] %v359
    %382 = vst [vmem:[#allocation2 + $0x48] sm:$0xff] %v303
    %383 = vst [vmem:[#allocation2 + $0x50] sm:$0xff] %v332
    %384 = vst [vmem:[#allocation2 + $0x58] sm:$0xff] %v361
    %385 = vst [vmem:[#allocation2 + $0x60] sm:$0xff] %v306
    %386 = vst [vmem:[#allocation2 + $0x68] sm:$0xff] %v335
    %387 = vst [vmem:[#allocation2 + $0x70] sm:$0xff] %v364
    %388 = vst [vmem:[#allocation2 + $0x78] sm:$0xff] %v308
    %389 = vst [vmem:[#allocation2 + $0x80] sm:$0xff] %v337
    %390 = vst [vmem:[#allocation2 + $0x88] sm:$0xff] %v366
    %391 = vst [vmem:[#allocation2 + $0x90] sm:$0xff] %v311
    %392 = vst [vmem:[#allocation2 + $0x98] sm:$0xff] %v340
    %393 = vst [vmem:[#allocation2 + $0xa0] sm:$0xff] %v369
    %394 = vst [vmem:[#allocation2 + $0xa8] sm:$0xff] %v313
    %395 = vst [vmem:[#allocation2 + $0xb0] sm:$0xff] %v342
    %396 = vst [vmem:[#allocation2 + $0xb8] sm:$0xff] %v371
    %v397 = vld [vmem:[#allocation7] sm:$0xff]
    %v398 = vld [vmem:[#allocation7 + $0x8] sm:$0xf]
    %v399 = vld [vmem:[#allocation7 + $0xc] sm:$0xff]
    %v400 = vld [vmem:[#allocation7 + $0x14] sm:$0xf]
    %v401 = vld [vmem:[#allocation7 + $0x18] sm:$0xff]
    %v402 = vld [vmem:[#allocation7 + $0x20] sm:$0xf]
    %v403 = vld [vmem:[#allocation7 + $0x24] sm:$0xff]
    %v404 = vld [vmem:[#allocation7 + $0x2c] sm:$0xf]
    %v405 = vld [vmem:[#allocation7 + $0x30] sm:$0xff]
    %v406 = vld [vmem:[#allocation7 + $0x38] sm:$0xf]
    %v407 = vld [vmem:[#allocation7 + $0x3c] sm:$0xff]
    %v408 = vld [vmem:[#allocation7 + $0x44] sm:$0xf]
    %v409 = vld [vmem:[#allocation7 + $0x48] sm:$0xff]
    %v410 = vld [vmem:[#allocation7 + $0x50] sm:$0xf]
    %v411 = vld [vmem:[#allocation7 + $0x54] sm:$0xff]
    %v412 = vld [vmem:[#allocation7 + $0x5c] sm:$0xf]
    %v413 = vld [vmem:[#allocation7 + $0x60] sm:$0xff]
    %v414 = vld [vmem:[#allocation7 + $0x68] sm:$0xf]
    %v415 = vld [vmem:[#allocation7 + $0x6c] sm:$0xff]
    %v416 = vld [vmem:[#allocation7 + $0x74] sm:$0xf]
    %v417 = vld [vmem:[#allocation7 + $0x78] sm:$0xff]
    %v418 = vld [vmem:[#allocation7 + $0x80] sm:$0xf]
    %v419 = vld [vmem:[#allocation7 + $0x84] sm:$0xff]
    %v420 = vld [vmem:[#allocation7 + $0x8c] sm:$0xf]
    %v421 = vld [vmem:[#allocation7 + $0x90] sm:$0xff]
    %v422 = vld [vmem:[#allocation7 + $0x98] sm:$0xf]
    %v423 = vld [vmem:[#allocation7 + $0x9c] sm:$0xff]
    %v424 = vld [vmem:[#allocation7 + $0xa4] sm:$0xf]
    %v425 = vld [vmem:[#allocation7 + $0xa8] sm:$0xff]
    %v426 = vld [vmem:[#allocation7 + $0xb0] sm:$0xf]
    %v427 = vld [vmem:[#allocation7 + $0xb4] sm:$0xff]
    %v428 = vld [vmem:[#allocation7 + $0xbc] sm:$0xf]
    %v429 = vld [vmem:[%s5] sm:$0x1]
    %v431 = vperm.slane %v429, 0
    %v433 = vld [vmem:[%s1] sm:$0xff]
    %v434 = vld [vmem:[#allocation2] sm:$0xff]
    %v435 = vld [vmem:[#allocation2 + $0x8] sm:$0xff]
    %v436 = vld [vmem:[#allocation2 + $0x10] sm:$0xff]
    %v437 = vpack.c.bf16 %v433, %v433
    %v470 = vunpack.c.l.b16 %v397
    %v471 = vunpack.c.h.b16 %v397
    %v472 = vunpack.c.l.b16 %v398
    %v473 = vunpack.c.l.b16 %v399
    %v474 = vunpack.c.h.b16 %v399
    %v475 = vunpack.c.l.b16 %v400
    %v476 = vunpack.c.l.b16 %v401
    %v477 = vunpack.c.h.b16 %v401
    %v478 = vunpack.c.l.b16 %v402
    %v479 = vunpack.c.l.b16 %v403
    %v480 = vunpack.c.h.b16 %v403
    %v481 = vunpack.c.l.b16 %v404
    %v482 = vunpack.c.l.b16 %v405
    %v483 = vunpack.c.h.b16 %v405
    %v484 = vunpack.c.l.b16 %v406
    %v485 = vunpack.c.l.b16 %v407
    %v486 = vunpack.c.h.b16 %v407
    %v487 = vunpack.c.l.b16 %v408
    %v488 = vunpack.c.l.b16 %v409
    %v489 = vunpack.c.h.b16 %v409
    %v490 = vunpack.c.l.b16 %v410
    %v491 = vunpack.c.l.b16 %v411
    %v492 = vunpack.c.h.b16 %v411
    %v493 = vunpack.c.l.b16 %v412
    %v494 = vunpack.c.l.b16 %v413
    %v495 = vunpack.c.h.b16 %v413
    %v496 = vunpack.c.l.b16 %v414
    %v497 = vunpack.c.l.b16 %v415
    %v498 = vunpack.c.h.b16 %v415
    %v499 = vunpack.c.l.b16 %v416
    %v500 = vunpack.c.l.b16 %v417
    %v501 = vunpack.c.h.b16 %v417
    %v502 = vunpack.c.l.b16 %v418
    %v503 = vunpack.c.l.b16 %v419
    %v504 = vunpack.c.h.b16 %v419
    %v505 = vunpack.c.l.b16 %v420
    %v506 = vunpack.c.l.b16 %v421
    %v507 = vunpack.c.h.b16 %v421
    %v508 = vunpack.c.l.b16 %v422
    %v509 = vunpack.c.l.b16 %v423
    %v510 = vunpack.c.h.b16 %v423
    %v511 = vunpack.c.l.b16 %v424
    %v512 = vunpack.c.l.b16 %v425
    %v513 = vunpack.c.h.b16 %v425
    %v514 = vunpack.c.l.b16 %v426
    %v515 = vunpack.c.l.b16 %v427
    %v516 = vunpack.c.h.b16 %v427
    %v517 = vunpack.c.l.b16 %v428
    %v518 = vpack.c.b16 %v473, %v470
    %v519 = vpack.c.b16 %v474, %v471
    %v520 = vpack.c.b16 %v475, %v472
    %v521 = vpack.c.b16 %v479, %v476
    %v522 = vpack.c.b16 %v480, %v477
    %v523 = vpack.c.b16 %v481, %v478
    %v524 = vpack.c.b16 %v485, %v482
    %v525 = vpack.c.b16 %v486, %v483
    %v526 = vpack.c.b16 %v487, %v484
    %v527 = vpack.c.b16 %v491, %v488
    %v528 = vpack.c.b16 %v492, %v489
    %v529 = vpack.c.b16 %v493, %v490
    %v530 = vpack.c.b16 %v497, %v494
    %v531 = vpack.c.b16 %v498, %v495
    %v532 = vpack.c.b16 %v499, %v496
    %v533 = vpack.c.b16 %v503, %v500
    %v534 = vpack.c.b16 %v504, %v501
    %v535 = vpack.c.b16 %v505, %v502
    %v536 = vpack.c.b16 %v509, %v506
    %v537 = vpack.c.b16 %v510, %v507
    %v538 = vpack.c.b16 %v511, %v508
    %v539 = vpack.c.b16 %v515, %v512
    %v540 = vpack.c.b16 %v516, %v513
    %v541 = vpack.c.b16 %v517, %v514
    %566 = vmatpush.bf16.msra.mxu0 %v539
    %567 = vmatpush.bf16.msra.mxu0 %v536
    %568 = vmatpush.bf16.msra.mxu0 %v533
    %569 = vmatpush.bf16.msra.mxu0 %v530
    %570 = vmatpush.bf16.msra.mxu0 %v527
    %571 = vmatpush.bf16.msra.mxu0 %v524
    %572 = vmatpush.bf16.msra.mxu0 %v521
    %573 = vmatpush.bf16.msra.mxu0 %v518
    %574 = vmatmul.bf16.gmra.mxu0 %v437
    %v575 = vpop.f32.mrf.mxu0
    %v576 = vadd.f32 0.0, %v575
    %v577 = vpop.f32.mrf.mxu0
    %578 = vdwg.mxu0
    %579 = vmatpush.bf16.msra.mxu0 %v540
    %580 = vmatpush.bf16.msra.mxu0 %v537
    %581 = vmatpush.bf16.msra.mxu0 %v534
    %582 = vmatpush.bf16.msra.mxu0 %v531
    %583 = vmatpush.bf16.msra.mxu0 %v528
    %584 = vmatpush.bf16.msra.mxu0 %v525
    %585 = vmatpush.bf16.msra.mxu0 %v522
    %586 = vmatpush.bf16.msra.mxu0 %v519
    %587 = vmatmul.bf16.gmra.mxu0 %v437
    %v588 = vpop.f32.mrf.mxu0
    %v589 = vadd.f32 0.0, %v588
    %v590 = vpop.f32.mrf.mxu0
    %591 = vdwg.mxu0
    %592 = vmatpush.bf16.msra.mxu0 %v541
    %593 = vmatpush.bf16.msra.mxu0 %v538
    %594 = vmatpush.bf16.msra.mxu0 %v535
    %595 = vmatpush.bf16.msra.mxu0 %v532
    %596 = vmatpush.bf16.msra.mxu0 %v529
    %597 = vmatpush.bf16.msra.mxu0 %v526
    %598 = vmatpush.bf16.msra.mxu0 %v523
    %599 = vmatpush.bf16.msra.mxu0 %v520
    %600 = vmatmul.bf16.gmra.mxu0 %v437
    %v601 = vpop.f32.mrf.mxu0
    %v602 = vadd.f32 0.0, %v601
    %v603 = vpop.f32.mrf.mxu0
    %604 = vdwg.mxu0
    %v605 = vadd.f32 %v434, %v576
    %v606 = vadd.f32 %v435, %v589
    %v607 = vxor.u32 %v605, 2147483648
    %v608 = vxor.u32 %v606, 2147483648
    %v609 = vmul.f32 %v607, 1.442695
    %v610 = vpow.pop %v609
    %v611 = vmul.f32 %v608, 1.442695
    %v612 = vpow.pop %v611
    %v613 = vadd.f32 %v610, 1.0
    %v614 = vadd.f32 %v612, 1.0
    %v615 = vrcp.pop %v613
    %v616 = vmul.f32 %v613, %v615
    %v617 = vsub.f32 1.0, %v616
    %v618 = vmul.f32 %v615, %v617
    %v619 = vadd.f32 %v615, %v618
    %vm620 = vweird.f32 %v613
    %vm621 = vweird.f32 %v615
    %vm622 = vmor %vm620, %vm621
    %v623 = vsel %vm622, %v615, %v619
    %v624 = vand.u32 2147483647, %v613
    %vm625 = vcmp.eq.f32.partialorder %v624, 8.507059e+37
    %v626 = vand.u32 %v613, 2147483648
    %v627 = vor.u32 1.1754944e-38, %v626
    %v628 = vsel %vm625, %v627, %v623
    %v629 = vmul.f32 1.0, %v628
    %v630 = vrcp.pop %v614
    %v631 = vmul.f32 %v614, %v630
    %v632 = vsub.f32 1.0, %v631
    %v633 = vmul.f32 %v630, %v632
    %v634 = vadd.f32 %v630, %v633
    %vm635 = vweird.f32 %v614
    %vm636 = vweird.f32 %v630
    %vm637 = vmor %vm635, %vm636
    %v638 = vsel %vm637, %v630, %v634
    %v639 = vand.u32 2147483647, %v614
    %vm640 = vcmp.eq.f32.partialorder %v639, 8.507059e+37
    %v641 = vand.u32 %v614, 2147483648
    %v642 = vor.u32 1.1754944e-38, %v641
    %v643 = vsel %vm640, %v642, %v638
    %v644 = vmul.f32 1.0, %v643
    %v645 = vadd.f32 %v602, %v431
    %v646 = vmul.f32 %v629, %v645
    %v647 = vadd.f32 %v436, %v646
    %v648 = vtanh.pop %v647
    %v649 = vsub.f32 1.0, %v644
    %v650 = vmul.f32 %v649, %v648
    %v651 = vmul.f32 %v644, %v433
    %v652 = vadd.f32 %v650, %v651
    %653 = vst [vmem:[#allocation3] sm:$0xff] %v652
    %v654 = vld [vmem:[#allocation2 + $0x18] sm:$0xff]
    %v655 = vld [vmem:[#allocation2 + $0x20] sm:$0xff]
    %v656 = vld [vmem:[#allocation2 + $0x28] sm:$0xff]
    %v657 = vpack.c.bf16 %v652, %v652
    %658 = vmatpush.bf16.msra.mxu0 %v539
    %659 = vmatpush.bf16.msra.mxu0 %v536
    %660 = vmatpush.bf16.msra.mxu0 %v533
    %661 = vmatpush.bf16.msra.mxu0 %v530
    %662 = vmatpush.bf16.msra.mxu0 %v527
    %663 = vmatpush.bf16.msra.mxu0 %v524
    %664 = vmatpush.bf16.msra.mxu0 %v521
    %665 = vmatpush.bf16.msra.mxu0 %v518
    %666 = vmatmul.bf16.gmra.mxu0 %v657
    %v667 = vpop.f32.mrf.mxu0
    %v668 = vadd.f32 0.0, %v667
    %v669 = vpop.f32.mrf.mxu0
    %670 = vdwg.mxu0
    %671 = vmatpush.bf16.msra.mxu0 %v540
    %672 = vmatpush.bf16.msra.mxu0 %v537
    %673 = vmatpush.bf16.msra.mxu0 %v534
    %674 = vmatpush.bf16.msra.mxu0 %v531
    %675 = vmatpush.bf16.msra.mxu0 %v528
    %676 = vmatpush.bf16.msra.mxu0 %v525
    %677 = vmatpush.bf16.msra.mxu0 %v522
    %678 = vmatpush.bf16.msra.mxu0 %v519
    %679 = vmatmul.bf16.gmra.mxu0 %v657
    %v680 = vpop.f32.mrf.mxu0
    %v681 = vadd.f32 0.0, %v680
    %v682 = vpop.f32.mrf.mxu0
    %683 = vdwg.mxu0
    %684 = vmatpush.bf16.msra.mxu0 %v541
    %685 = vmatpush.bf16.msra.mxu0 %v538
    %686 = vmatpush.bf16.msra.mxu0 %v535
    %687 = vmatpush.bf16.msra.mxu0 %v532
    %688 = vmatpush.bf16.msra.mxu0 %v529
    %689 = vmatpush.bf16.msra.mxu0 %v526
    %690 = vmatpush.bf16.msra.mxu0 %v523
    %691 = vmatpush.bf16.msra.mxu0 %v520
    %692 = vmatmul.bf16.gmra.mxu0 %v657
    %v693 = vpop.f32.mrf.mxu0
    %v694 = vadd.f32 0.0, %v693
    %v695 = vpop.f32.mrf.mxu0
    %696 = vdwg.mxu0
    %v697 = vadd.f32 %v654, %v668
    %v698 = vadd.f32 %v655, %v681
    %v699 = vxor.u32 %v697, 2147483648
    %v700 = vxor.u32 %v698, 2147483648
    %v701 = vmul.f32 %v699, 1.442695
    %v702 = vpow.pop %v701
    %v703 = vmul.f32 %v700, 1.442695
    %v704 = vpow.pop %v703
    %v705 = vadd.f32 %v702, 1.0
    %v706 = vadd.f32 %v704, 1.0
    %v707 = vrcp.pop %v705
    %v708 = vmul.f32 %v705, %v707
    %v709 = vsub.f32 1.0, %v708
    %v710 = vmul.f32 %v707, %v709
    %v711 = vadd.f32 %v707, %v710
    %vm712 = vweird.f32 %v705
    %vm713 = vweird.f32 %v707
    %vm714 = vmor %vm712, %vm713
    %v715 = vsel %vm714, %v707, %v711
    %v716 = vand.u32 2147483647, %v705
    %vm717 = vcmp.eq.f32.partialorder %v716, 8.507059e+37
    %v718 = vand.u32 %v705, 2147483648
    %v719 = vor.u32 1.1754944e-38, %v718
    %v720 = vsel %vm717, %v719, %v715
    %v721 = vmul.f32 1.0, %v720
    %v722 = vrcp.pop %v706
    %v723 = vmul.f32 %v706, %v722
    %v724 = vsub.f32 1.0, %v723
    %v725 = vmul.f32 %v722, %v724
    %v726 = vadd.f32 %v722, %v725
    %vm727 = vweird.f32 %v706
    %vm728 = vweird.f32 %v722
    %vm729 = vmor %vm727, %vm728
    %v730 = vsel %vm729, %v722, %v726
    %v731 = vand.u32 2147483647, %v706
    %vm732 = vcmp.eq.f32.partialorder %v731, 8.507059e+37
    %v733 = vand.u32 %v706, 2147483648
    %v734 = vor.u32 1.1754944e-38, %v733
    %v735 = vsel %vm732, %v734, %v730
    %v736 = vmul.f32 1.0, %v735
    %v737 = vadd.f32 %v694, %v431
    %v738 = vmul.f32 %v721, %v737
    %v739 = vadd.f32 %v656, %v738
    %v740 = vtanh.pop %v739
    %v741 = vsub.f32 1.0, %v736
    %v742 = vmul.f32 %v741, %v740
    %v743 = vmul.f32 %v736, %v652
    %v744 = vadd.f32 %v742, %v743
    %745 = vst [vmem:[#allocation3 + $0x8] sm:$0xff] %v744
    %v746 = vld [vmem:[#allocation2 + $0x30] sm:$0xff]
    %v747 = vld [vmem:[#allocation2 + $0x38] sm:$0xff]
    %v748 = vld [vmem:[#allocation2 + $0x40] sm:$0xff]
    %v749 = vpack.c.bf16 %v744, %v744
    %750 = vmatpush.bf16.msra.mxu0 %v539
    %751 = vmatpush.bf16.msra.mxu0 %v536
    %752 = vmatpush.bf16.msra.mxu0 %v533
    %753 = vmatpush.bf16.msra.mxu0 %v530
    %754 = vmatpush.bf16.msra.mxu0 %v527
    %755 = vmatpush.bf16.msra.mxu0 %v524
    %756 = vmatpush.bf16.msra.mxu0 %v521
    %757 = vmatpush.bf16.msra.mxu0 %v518
    %758 = vmatmul.bf16.gmra.mxu0 %v749
    %v759 = vpop.f32.mrf.mxu0
    %v760 = vadd.f32 0.0, %v759
    %v761 = vpop.f32.mrf.mxu0
    %762 = vdwg.mxu0
    %763 = vmatpush.bf16.msra.mxu0 %v540
    %764 = vmatpush.bf16.msra.mxu0 %v537
    %765 = vmatpush.bf16.msra.mxu0 %v534
    %766 = vmatpush.bf16.msra.mxu0 %v531
    %767 = vmatpush.bf16.msra.mxu0 %v528
    %768 = vmatpush.bf16.msra.mxu0 %v525
    %769 = vmatpush.bf16.msra.mxu0 %v522
    %770 = vmatpush.bf16.msra.mxu0 %v519
    %771 = vmatmul.bf16.gmra.mxu0 %v749
    %v772 = vpop.f32.mrf.mxu0
    %v773 = vadd.f32 0.0, %v772
    %v774 = vpop.f32.mrf.mxu0
    %775 = vdwg.mxu0
    %776 = vmatpush.bf16.msra.mxu0 %v541
    %777 = vmatpush.bf16.msra.mxu0 %v538
    %778 = vmatpush.bf16.msra.mxu0 %v535
    %779 = vmatpush.bf16.msra.mxu0 %v532
    %780 = vmatpush.bf16.msra.mxu0 %v529
    %781 = vmatpush.bf16.msra.mxu0 %v526
    %782 = vmatpush.bf16.msra.mxu0 %v523
    %783 = vmatpush.bf16.msra.mxu0 %v520
    %784 = vmatmul.bf16.gmra.mxu0 %v749
    %v785 = vpop.f32.mrf.mxu0
    %v786 = vadd.f32 0.0, %v785
    %v787 = vpop.f32.mrf.mxu0
    %788 = vdwg.mxu0
    %v789 = vadd.f32 %v746, %v760
    %v790 = vadd.f32 %v747, %v773
    %v791 = vxor.u32 %v789, 2147483648
    %v792 = vxor.u32 %v790, 2147483648
    %v793 = vmul.f32 %v791, 1.442695
    %v794 = vpow.pop %v793
    %v795 = vmul.f32 %v792, 1.442695
    %v796 = vpow.pop %v795
    %v797 = vadd.f32 %v794, 1.0
    %v798 = vadd.f32 %v796, 1.0
    %v799 = vrcp.pop %v797
    %v800 = vmul.f32 %v797, %v799
    %v801 = vsub.f32 1.0, %v800
    %v802 = vmul.f32 %v799, %v801
    %v803 = vadd.f32 %v799, %v802
    %vm804 = vweird.f32 %v797
    %vm805 = vweird.f32 %v799
    %vm806 = vmor %vm804, %vm805
    %v807 = vsel %vm806, %v799, %v803
    %v808 = vand.u32 2147483647, %v797
    %vm809 = vcmp.eq.f32.partialorder %v808, 8.507059e+37
    %v810 = vand.u32 %v797, 2147483648
    %v811 = vor.u32 1.1754944e-38, %v810
    %v812 = vsel %vm809, %v811, %v807
    %v813 = vmul.f32 1.0, %v812
    %v814 = vrcp.pop %v798
    %v815 = vmul.f32 %v798, %v814
    %v816 = vsub.f32 1.0, %v815
    %v817 = vmul.f32 %v814, %v816
    %v818 = vadd.f32 %v814, %v817
    %vm819 = vweird.f32 %v798
    %vm820 = vweird.f32 %v814
    %vm821 = vmor %vm819, %vm820
    %v822 = vsel %vm821, %v814, %v818
    %v823 = vand.u32 2147483647, %v798
    %vm824 = vcmp.eq.f32.partialorder %v823, 8.507059e+37
    %v825 = vand.u32 %v798, 2147483648
    %v826 = vor.u32 1.1754944e-38, %v825
    %v827 = vsel %vm824, %v826, %v822
    %v828 = vmul.f32 1.0, %v827
    %v829 = vadd.f32 %v786, %v431
    %v830 = vmul.f32 %v813, %v829
    %v831 = vadd.f32 %v748, %v830
    %v832 = vtanh.pop %v831
    %v833 = vsub.f32 1.0, %v828
    %v834 = vmul.f32 %v833, %v832
    %v835 = vmul.f32 %v828, %v744
    %v836 = vadd.f32 %v834, %v835
    %837 = vst [vmem:[#allocation3 + $0x10] sm:$0xff] %v836
    %v838 = vld [vmem:[#allocation2 + $0x48] sm:$0xff]
    %v839 = vld [vmem:[#allocation2 + $0x50] sm:$0xff]
    %v840 = vld [vmem:[#allocation2 + $0x58] sm:$0xff]
    %v841 = vpack.c.bf16 %v836, %v836
    %842 = vmatpush.bf16.msra.mxu0 %v539
    %843 = vmatpush.bf16.msra.mxu0 %v536
    %844 = vmatpush.bf16.msra.mxu0 %v533
    %845 = vmatpush.bf16.msra.mxu0 %v530
    %846 = vmatpush.bf16.msra.mxu0 %v527
    %847 = vmatpush.bf16.msra.mxu0 %v524
    %848 = vmatpush.bf16.msra.mxu0 %v521
    %849 = vmatpush.bf16.msra.mxu0 %v518
    %850 = vmatmul.bf16.gmra.mxu0 %v841
    %v851 = vpop.f32.mrf.mxu0
    %v852 = vadd.f32 0.0, %v851
    %v853 = vpop.f32.mrf.mxu0
    %854 = vdwg.mxu0
    %855 = vmatpush.bf16.msra.mxu0 %v540
    %856 = vmatpush.bf16.msra.mxu0 %v537
    %857 = vmatpush.bf16.msra.mxu0 %v534
    %858 = vmatpush.bf16.msra.mxu0 %v531
    %859 = vmatpush.bf16.msra.mxu0 %v528
    %860 = vmatpush.bf16.msra.mxu0 %v525
    %861 = vmatpush.bf16.msra.mxu0 %v522
    %862 = vmatpush.bf16.msra.mxu0 %v519
    %863 = vmatmul.bf16.gmra.mxu0 %v841
    %v864 = vpop.f32.mrf.mxu0
    %v865 = vadd.f32 0.0, %v864
    %v866 = vpop.f32.mrf.mxu0
    %867 = vdwg.mxu0
    %868 = vmatpush.bf16.msra.mxu0 %v541
    %869 = vmatpush.bf16.msra.mxu0 %v538
    %870 = vmatpush.bf16.msra.mxu0 %v535
    %871 = vmatpush.bf16.msra.mxu0 %v532
    %872 = vmatpush.bf16.msra.mxu0 %v529
    %873 = vmatpush.bf16.msra.mxu0 %v526
    %874 = vmatpush.bf16.msra.mxu0 %v523
    %875 = vmatpush.bf16.msra.mxu0 %v520
    %876 = vmatmul.bf16.gmra.mxu0 %v841
    %v877 = vpop.f32.mrf.mxu0
    %v878 = vadd.f32 0.0, %v877
    %v879 = vpop.f32.mrf.mxu0
    %880 = vdwg.mxu0
    %v881 = vadd.f32 %v838, %v852
    %v882 = vadd.f32 %v839, %v865
    %v883 = vxor.u32 %v881, 2147483648
    %v884 = vxor.u32 %v882, 2147483648
    %v885 = vmul.f32 %v883, 1.442695
    %v886 = vpow.pop %v885
    %v887 = vmul.f32 %v884, 1.442695
    %v888 = vpow.pop %v887
    %v889 = vadd.f32 %v886, 1.0
    %v890 = vadd.f32 %v888, 1.0
    %v891 = vrcp.pop %v889
    %v892 = vmul.f32 %v889, %v891
    %v893 = vsub.f32 1.0, %v892
    %v894 = vmul.f32 %v891, %v893
    %v895 = vadd.f32 %v891, %v894
    %vm896 = vweird.f32 %v889
    %vm897 = vweird.f32 %v891
    %vm898 = vmor %vm896, %vm897
    %v899 = vsel %vm898, %v891, %v895
    %v900 = vand.u32 2147483647, %v889
    %vm901 = vcmp.eq.f32.partialorder %v900, 8.507059e+37
    %v902 = vand.u32 %v889, 2147483648
    %v903 = vor.u32 1.1754944e-38, %v902
    %v904 = vsel %vm901, %v903, %v899
    %v905 = vmul.f32 1.0, %v904
    %v906 = vrcp.pop %v890
    %v907 = vmul.f32 %v890, %v906
    %v908 = vsub.f32 1.0, %v907
    %v909 = vmul.f32 %v906, %v908
    %v910 = vadd.f32 %v906, %v909
    %vm911 = vweird.f32 %v890
    %vm912 = vweird.f32 %v906
    %vm913 = vmor %vm911, %vm912
    %v914 = vsel %vm913, %v906, %v910
    %v915 = vand.u32 2147483647, %v890
    %vm916 = vcmp.eq.f32.partialorder %v915, 8.507059e+37
    %v917 = vand.u32 %v890, 2147483648
    %v918 = vor.u32 1.1754944e-38, %v917
    %v919 = vsel %vm916, %v918, %v914
    %v920 = vmul.f32 1.0, %v919
    %v921 = vadd.f32 %v878, %v431
    %v922 = vmul.f32 %v905, %v921
    %v923 = vadd.f32 %v840, %v922
    %v924 = vtanh.pop %v923
    %v925 = vsub.f32 1.0, %v920
    %v926 = vmul.f32 %v925, %v924
    %v927 = vmul.f32 %v920, %v836
    %v928 = vadd.f32 %v926, %v927
    %929 = vst [vmem:[#allocation3 + $0x18] sm:$0xff] %v928
    %v930 = vld [vmem:[#allocation2 + $0x60] sm:$0xff]
    %v931 = vld [vmem:[#allocation2 + $0x68] sm:$0xff]
    %v932 = vld [vmem:[#allocation2 + $0x70] sm:$0xff]
    %v933 = vpack.c.bf16 %v928, %v928
    %934 = vmatpush.bf16.msra.mxu0 %v539
    %935 = vmatpush.bf16.msra.mxu0 %v536
    %936 = vmatpush.bf16.msra.mxu0 %v533
    %937 = vmatpush.bf16.msra.mxu0 %v530
    %938 = vmatpush.bf16.msra.mxu0 %v527
    %939 = vmatpush.bf16.msra.mxu0 %v524
    %940 = vmatpush.bf16.msra.mxu0 %v521
    %941 = vmatpush.bf16.msra.mxu0 %v518
    %942 = vmatmul.bf16.gmra.mxu0 %v933
    %v943 = vpop.f32.mrf.mxu0
    %v944 = vadd.f32 0.0, %v943
    %v945 = vpop.f32.mrf.mxu0
    %946 = vdwg.mxu0
    %947 = vmatpush.bf16.msra.mxu0 %v540
    %948 = vmatpush.bf16.msra.mxu0 %v537
    %949 = vmatpush.bf16.msra.mxu0 %v534
    %950 = vmatpush.bf16.msra.mxu0 %v531
    %951 = vmatpush.bf16.msra.mxu0 %v528
    %952 = vmatpush.bf16.msra.mxu0 %v525
    %953 = vmatpush.bf16.msra.mxu0 %v522
    %954 = vmatpush.bf16.msra.mxu0 %v519
    %955 = vmatmul.bf16.gmra.mxu0 %v933
    %v956 = vpop.f32.mrf.mxu0
    %v957 = vadd.f32 0.0, %v956
    %v958 = vpop.f32.mrf.mxu0
    %959 = vdwg.mxu0
    %960 = vmatpush.bf16.msra.mxu0 %v541
    %961 = vmatpush.bf16.msra.mxu0 %v538
    %962 = vmatpush.bf16.msra.mxu0 %v535
    %963 = vmatpush.bf16.msra.mxu0 %v532
    %964 = vmatpush.bf16.msra.mxu0 %v529
    %965 = vmatpush.bf16.msra.mxu0 %v526
    %966 = vmatpush.bf16.msra.mxu0 %v523
    %967 = vmatpush.bf16.msra.mxu0 %v520
    %968 = vmatmul.bf16.gmra.mxu0 %v933
    %v969 = vpop.f32.mrf.mxu0
    %v970 = vadd.f32 0.0, %v969
    %v971 = vpop.f32.mrf.mxu0
    %972 = vdwg.mxu0
    %v973 = vadd.f32 %v930, %v944
    %v974 = vadd.f32 %v931, %v957
    %v975 = vxor.u32 %v973, 2147483648
    %v976 = vxor.u32 %v974, 2147483648
    %v977 = vmul.f32 %v975, 1.442695
    %v978 = vpow.pop %v977
    %v979 = vmul.f32 %v976, 1.442695
    %v980 = vpow.pop %v979
    %v981 = vadd.f32 %v978, 1.0
    %v982 = vadd.f32 %v980, 1.0
    %v983 = vrcp.pop %v981
    %v984 = vmul.f32 %v981, %v983
    %v985 = vsub.f32 1.0, %v984
    %v986 = vmul.f32 %v983, %v985
    %v987 = vadd.f32 %v983, %v986
    %vm988 = vweird.f32 %v981
    %vm989 = vweird.f32 %v983
    %vm990 = vmor %vm988, %vm989
    %v991 = vsel %vm990, %v983, %v987
    %v992 = vand.u32 2147483647, %v981
    %vm993 = vcmp.eq.f32.partialorder %v992, 8.507059e+37
    %v994 = vand.u32 %v981, 2147483648
    %v995 = vor.u32 1.1754944e-38, %v994
    %v996 = vsel %vm993, %v995, %v991
    %v997 = vmul.f32 1.0, %v996
    %v998 = vrcp.pop %v982
    %v999 = vmul.f32 %v982, %v998
    %v1000 = vsub.f32 1.0, %v999
    %v1001 = vmul.f32 %v998, %v1000
    %v1002 = vadd.f32 %v998, %v1001
    %vm1003 = vweird.f32 %v982
    %vm1004 = vweird.f32 %v998
    %vm1005 = vmor %vm1003, %vm1004
    %v1006 = vsel %vm1005, %v998, %v1002
    %v1007 = vand.u32 2147483647, %v982
    %vm1008 = vcmp.eq.f32.partialorder %v1007, 8.507059e+37
    %v1009 = vand.u32 %v982, 2147483648
    %v1010 = vor.u32 1.1754944e-38, %v1009
    %v1011 = vsel %vm1008, %v1010, %v1006
    %v1012 = vmul.f32 1.0, %v1011
    %v1013 = vadd.f32 %v970, %v431
    %v1014 = vmul.f32 %v997, %v1013
    %v1015 = vadd.f32 %v932, %v1014
    %v1016 = vtanh.pop %v1015
    %v1017 = vsub.f32 1.0, %v1012
    %v1018 = vmul.f32 %v1017, %v1016
    %v1019 = vmul.f32 %v1012, %v928
    %v1020 = vadd.f32 %v1018, %v1019
    %1021 = vst [vmem:[#allocation3 + $0x20] sm:$0xff] %v1020
    %v1022 = vld [vmem:[#allocation2 + $0x78] sm:$0xff]
    %v1023 = vld [vmem:[#allocation2 + $0x80] sm:$0xff]
    %v1024 = vld [vmem:[#allocation2 + $0x88] sm:$0xff]
    %v1025 = vpack.c.bf16 %v1020, %v1020
    %1026 = vmatpush.bf16.msra.mxu0 %v539
    %1027 = vmatpush.bf16.msra.mxu0 %v536
    %1028 = vmatpush.bf16.msra.mxu0 %v533
    %1029 = vmatpush.bf16.msra.mxu0 %v530
    %1030 = vmatpush.bf16.msra.mxu0 %v527
    %1031 = vmatpush.bf16.msra.mxu0 %v524
    %1032 = vmatpush.bf16.msra.mxu0 %v521
    %1033 = vmatpush.bf16.msra.mxu0 %v518
    %1034 = vmatmul.bf16.gmra.mxu0 %v1025
    %v1035 = vpop.f32.mrf.mxu0
    %v1036 = vadd.f32 0.0, %v1035
    %v1037 = vpop.f32.mrf.mxu0
    %1038 = vdwg.mxu0
    %1039 = vmatpush.bf16.msra.mxu0 %v540
    %1040 = vmatpush.bf16.msra.mxu0 %v537
    %1041 = vmatpush.bf16.msra.mxu0 %v534
    %1042 = vmatpush.bf16.msra.mxu0 %v531
    %1043 = vmatpush.bf16.msra.mxu0 %v528
    %1044 = vmatpush.bf16.msra.mxu0 %v525
    %1045 = vmatpush.bf16.msra.mxu0 %v522
    %1046 = vmatpush.bf16.msra.mxu0 %v519
    %1047 = vmatmul.bf16.gmra.mxu0 %v1025
    %v1048 = vpop.f32.mrf.mxu0
    %v1049 = vadd.f32 0.0, %v1048
    %v1050 = vpop.f32.mrf.mxu0
    %1051 = vdwg.mxu0
    %1052 = vmatpush.bf16.msra.mxu0 %v541
    %1053 = vmatpush.bf16.msra.mxu0 %v538
    %1054 = vmatpush.bf16.msra.mxu0 %v535
    %1055 = vmatpush.bf16.msra.mxu0 %v532
    %1056 = vmatpush.bf16.msra.mxu0 %v529
    %1057 = vmatpush.bf16.msra.mxu0 %v526
    %1058 = vmatpush.bf16.msra.mxu0 %v523
    %1059 = vmatpush.bf16.msra.mxu0 %v520
    %1060 = vmatmul.bf16.gmra.mxu0 %v1025
    %v1061 = vpop.f32.mrf.mxu0
    %v1062 = vadd.f32 0.0, %v1061
    %v1063 = vpop.f32.mrf.mxu0
    %1064 = vdwg.mxu0
    %v1065 = vadd.f32 %v1022, %v1036
    %v1066 = vadd.f32 %v1023, %v1049
    %v1067 = vxor.u32 %v1065, 2147483648
    %v1068 = vxor.u32 %v1066, 2147483648
    %v1069 = vmul.f32 %v1067, 1.442695
    %v1070 = vpow.pop %v1069
    %v1071 = vmul.f32 %v1068, 1.442695
    %v1072 = vpow.pop %v1071
    %v1073 = vadd.f32 %v1070, 1.0
    %v1074 = vadd.f32 %v1072, 1.0
    %v1075 = vrcp.pop %v1073
    %v1076 = vmul.f32 %v1073, %v1075
    %v1077 = vsub.f32 1.0, %v1076
    %v1078 = vmul.f32 %v1075, %v1077
    %v1079 = vadd.f32 %v1075, %v1078
    %vm1080 = vweird.f32 %v1073
    %vm1081 = vweird.f32 %v1075
    %vm1082 = vmor %vm1080, %vm1081
    %v1083 = vsel %vm1082, %v1075, %v1079
    %v1084 = vand.u32 2147483647, %v1073
    %vm1085 = vcmp.eq.f32.partialorder %v1084, 8.507059e+37
    %v1086 = vand.u32 %v1073, 2147483648
    %v1087 = vor.u32 1.1754944e-38, %v1086
    %v1088 = vsel %vm1085, %v1087, %v1083
    %v1089 = vmul.f32 1.0, %v1088
    %v1090 = vrcp.pop %v1074
    %v1091 = vmul.f32 %v1074, %v1090
    %v1092 = vsub.f32 1.0, %v1091
    %v1093 = vmul.f32 %v1090, %v1092
    %v1094 = vadd.f32 %v1090, %v1093
    %vm1095 = vweird.f32 %v1074
    %vm1096 = vweird.f32 %v1090
    %vm1097 = vmor %vm1095, %vm1096
    %v1098 = vsel %vm1097, %v1090, %v1094
    %v1099 = vand.u32 2147483647, %v1074
    %vm1100 = vcmp.eq.f32.partialorder %v1099, 8.507059e+37
    %v1101 = vand.u32 %v1074, 2147483648
    %v1102 = vor.u32 1.1754944e-38, %v1101
    %v1103 = vsel %vm1100, %v1102, %v1098
    %v1104 = vmul.f32 1.0, %v1103
    %v1105 = vadd.f32 %v1062, %v431
    %v1106 = vmul.f32 %v1089, %v1105
    %v1107 = vadd.f32 %v1024, %v1106
    %v1108 = vtanh.pop %v1107
    %v1109 = vsub.f32 1.0, %v1104
    %v1110 = vmul.f32 %v1109, %v1108
    %v1111 = vmul.f32 %v1104, %v1020
    %v1112 = vadd.f32 %v1110, %v1111
    %1113 = vst [vmem:[#allocation3 + $0x28] sm:$0xff] %v1112
    %v1114 = vld [vmem:[#allocation2 + $0x90] sm:$0xff]
    %v1115 = vld [vmem:[#allocation2 + $0x98] sm:$0xff]
    %v1116 = vld [vmem:[#allocation2 + $0xa0] sm:$0xff]
    %v1117 = vpack.c.bf16 %v1112, %v1112
    %1118 = vmatpush.bf16.msra.mxu0 %v539
    %1119 = vmatpush.bf16.msra.mxu0 %v536
    %1120 = vmatpush.bf16.msra.mxu0 %v533
    %1121 = vmatpush.bf16.msra.mxu0 %v530
    %1122 = vmatpush.bf16.msra.mxu0 %v527
    %1123 = vmatpush.bf16.msra.mxu0 %v524
    %1124 = vmatpush.bf16.msra.mxu0 %v521
    %1125 = vmatpush.bf16.msra.mxu0 %v518
    %1126 = vmatmul.bf16.gmra.mxu0 %v1117
    %v1127 = vpop.f32.mrf.mxu0
    %v1128 = vadd.f32 0.0, %v1127
    %v1129 = vpop.f32.mrf.mxu0
    %1130 = vdwg.mxu0
    %1131 = vmatpush.bf16.msra.mxu0 %v540
    %1132 = vmatpush.bf16.msra.mxu0 %v537
    %1133 = vmatpush.bf16.msra.mxu0 %v534
    %1134 = vmatpush.bf16.msra.mxu0 %v531
    %1135 = vmatpush.bf16.msra.mxu0 %v528
    %1136 = vmatpush.bf16.msra.mxu0 %v525
    %1137 = vmatpush.bf16.msra.mxu0 %v522
    %1138 = vmatpush.bf16.msra.mxu0 %v519
    %1139 = vmatmul.bf16.gmra.mxu0 %v1117
    %v1140 = vpop.f32.mrf.mxu0
    %v1141 = vadd.f32 0.0, %v1140
    %v1142 = vpop.f32.mrf.mxu0
    %1143 = vdwg.mxu0
    %1144 = vmatpush.bf16.msra.mxu0 %v541
    %1145 = vmatpush.bf16.msra.mxu0 %v538
    %1146 = vmatpush.bf16.msra.mxu0 %v535
    %1147 = vmatpush.bf16.msra.mxu0 %v532
    %1148 = vmatpush.bf16.msra.mxu0 %v529
    %1149 = vmatpush.bf16.msra.mxu0 %v526
    %1150 = vmatpush.bf16.msra.mxu0 %v523
    %1151 = vmatpush.bf16.msra.mxu0 %v520
    %1152 = vmatmul.bf16.gmra.mxu0 %v1117
    %v1153 = vpop.f32.mrf.mxu0
    %v1154 = vadd.f32 0.0, %v1153
    %v1155 = vpop.f32.mrf.mxu0
    %1156 = vdwg.mxu0
    %v1157 = vadd.f32 %v1114, %v1128
    %v1158 = vadd.f32 %v1115, %v1141
    %v1159 = vxor.u32 %v1157, 2147483648
    %v1160 = vxor.u32 %v1158, 2147483648
    %v1161 = vmul.f32 %v1159, 1.442695
    %v1162 = vpow.pop %v1161
    %v1163 = vmul.f32 %v1160, 1.442695
    %v1164 = vpow.pop %v1163
    %v1165 = vadd.f32 %v1162, 1.0
    %v1166 = vadd.f32 %v1164, 1.0
    %v1167 = vrcp.pop %v1165
    %v1168 = vmul.f32 %v1165, %v1167
    %v1169 = vsub.f32 1.0, %v1168
    %v1170 = vmul.f32 %v1167, %v1169
    %v1171 = vadd.f32 %v1167, %v1170
    %vm1172 = vweird.f32 %v1165
    %vm1173 = vweird.f32 %v1167
    %vm1174 = vmor %vm1172, %vm1173
    %v1175 = vsel %vm1174, %v1167, %v1171
    %v1176 = vand.u32 2147483647, %v1165
    %vm1177 = vcmp.eq.f32.partialorder %v1176, 8.507059e+37
    %v1178 = vand.u32 %v1165, 2147483648
    %v1179 = vor.u32 1.1754944e-38, %v1178
    %v1180 = vsel %vm1177, %v1179, %v1175
    %v1181 = vmul.f32 1.0, %v1180
    %v1182 = vrcp.pop %v1166
    %v1183 = vmul.f32 %v1166, %v1182
    %v1184 = vsub.f32 1.0, %v1183
    %v1185 = vmul.f32 %v1182, %v1184
    %v1186 = vadd.f32 %v1182, %v1185
    %vm1187 = vweird.f32 %v1166
    %vm1188 = vweird.f32 %v1182
    %vm1189 = vmor %vm1187, %vm1188
    %v1190 = vsel %vm1189, %v1182, %v1186
    %v1191 = vand.u32 2147483647, %v1166
    %vm1192 = vcmp.eq.f32.partialorder %v1191, 8.507059e+37
    %v1193 = vand.u32 %v1166, 2147483648
    %v1194 = vor.u32 1.1754944e-38, %v1193
    %v1195 = vsel %vm1192, %v1194, %v1190
    %v1196 = vmul.f32 1.0, %v1195
    %v1197 = vadd.f32 %v1154, %v431
    %v1198 = vmul.f32 %v1181, %v1197
    %v1199 = vadd.f32 %v1116, %v1198
    %v1200 = vtanh.pop %v1199
    %v1201 = vsub.f32 1.0, %v1196
    %v1202 = vmul.f32 %v1201, %v1200
    %v1203 = vmul.f32 %v1196, %v1112
    %v1204 = vadd.f32 %v1202, %v1203
    %1205 = vst [vmem:[#allocation3 + $0x30] sm:$0xff] %v1204
    %v1206 = vld [vmem:[#allocation2 + $0xa8] sm:$0xff]
    %v1207 = vld [vmem:[#allocation2 + $0xb0] sm:$0xff]
    %v1208 = vld [vmem:[#allocation2 + $0xb8] sm:$0xff]
    %v1209 = vpack.c.bf16 %v1204, %v1204
    %1210 = vmatpush.bf16.msra.mxu0 %v539
    %1211 = vmatpush.bf16.msra.mxu0 %v536
    %1212 = vmatpush.bf16.msra.mxu0 %v533
    %1213 = vmatpush.bf16.msra.mxu0 %v530
    %1214 = vmatpush.bf16.msra.mxu0 %v527
    %1215 = vmatpush.bf16.msra.mxu0 %v524
    %1216 = vmatpush.bf16.msra.mxu0 %v521
    %1217 = vmatpush.bf16.msra.mxu0 %v518
    %1218 = vmatmul.bf16.gmra.mxu0 %v1209
    %v1219 = vpop.f32.mrf.mxu0
    %v1220 = vadd.f32 0.0, %v1219
    %v1221 = vpop.f32.mrf.mxu0
    %1222 = vdwg.mxu0
    %1223 = vmatpush.bf16.msra.mxu0 %v540
    %1224 = vmatpush.bf16.msra.mxu0 %v537
    %1225 = vmatpush.bf16.msra.mxu0 %v534
    %1226 = vmatpush.bf16.msra.mxu0 %v531
    %1227 = vmatpush.bf16.msra.mxu0 %v528
    %1228 = vmatpush.bf16.msra.mxu0 %v525
    %1229 = vmatpush.bf16.msra.mxu0 %v522
    %1230 = vmatpush.bf16.msra.mxu0 %v519
    %1231 = vmatmul.bf16.gmra.mxu0 %v1209
    %v1232 = vpop.f32.mrf.mxu0
    %v1233 = vadd.f32 0.0, %v1232
    %v1234 = vpop.f32.mrf.mxu0
    %1235 = vdwg.mxu0
    %1236 = vmatpush.bf16.msra.mxu0 %v541
    %1237 = vmatpush.bf16.msra.mxu0 %v538
    %1238 = vmatpush.bf16.msra.mxu0 %v535
    %1239 = vmatpush.bf16.msra.mxu0 %v532
    %1240 = vmatpush.bf16.msra.mxu0 %v529
    %1241 = vmatpush.bf16.msra.mxu0 %v526
    %1242 = vmatpush.bf16.msra.mxu0 %v523
    %1243 = vmatpush.bf16.msra.mxu0 %v520
    %1244 = vmatmul.bf16.gmra.mxu0 %v1209
    %v1245 = vpop.f32.mrf.mxu0
    %v1246 = vadd.f32 0.0, %v1245
    %v1247 = vpop.f32.mrf.mxu0
    %1248 = vdwg.mxu0
    %v1249 = vadd.f32 %v1206, %v1220
    %v1250 = vadd.f32 %v1207, %v1233
    %v1251 = vxor.u32 %v1249, 2147483648
    %v1252 = vxor.u32 %v1250, 2147483648
    %v1253 = vmul.f32 %v1251, 1.442695
    %v1254 = vpow.pop %v1253
    %v1255 = vmul.f32 %v1252, 1.442695
    %v1256 = vpow.pop %v1255
    %v1257 = vadd.f32 %v1254, 1.0
    %v1258 = vadd.f32 %v1256, 1.0
    %v1259 = vrcp.pop %v1257
    %v1260 = vmul.f32 %v1257, %v1259
    %v1261 = vsub.f32 1.0, %v1260
    %v1262 = vmul.f32 %v1259, %v1261
    %v1263 = vadd.f32 %v1259, %v1262
    %vm1264 = vweird.f32 %v1257
    %vm1265 = vweird.f32 %v1259
    %vm1266 = vmor %vm1264, %vm1265
    %v1267 = vsel %vm1266, %v1259, %v1263
    %v1268 = vand.u32 2147483647, %v1257
    %vm1269 = vcmp.eq.f32.partialorder %v1268, 8.507059e+37
    %v1270 = vand.u32 %v1257, 2147483648
    %v1271 = vor.u32 1.1754944e-38, %v1270
    %v1272 = vsel %vm1269, %v1271, %v1267
    %v1273 = vmul.f32 1.0, %v1272
    %v1274 = vrcp.pop %v1258
    %v1275 = vmul.f32 %v1258, %v1274
    %v1276 = vsub.f32 1.0, %v1275
    %v1277 = vmul.f32 %v1274, %v1276
    %v1278 = vadd.f32 %v1274, %v1277
    %vm1279 = vweird.f32 %v1258
    %vm1280 = vweird.f32 %v1274
    %vm1281 = vmor %vm1279, %vm1280
    %v1282 = vsel %vm1281, %v1274, %v1278
    %v1283 = vand.u32 2147483647, %v1258
    %vm1284 = vcmp.eq.f32.partialorder %v1283, 8.507059e+37
    %v1285 = vand.u32 %v1258, 2147483648
    %v1286 = vor.u32 1.1754944e-38, %v1285
    %v1287 = vsel %vm1284, %v1286, %v1282
    %v1288 = vmul.f32 1.0, %v1287
    %v1289 = vadd.f32 %v1246, %v431
    %v1290 = vmul.f32 %v1273, %v1289
    %v1291 = vadd.f32 %v1208, %v1290
    %v1292 = vtanh.pop %v1291
    %v1293 = vsub.f32 1.0, %v1288
    %v1294 = vmul.f32 %v1293, %v1292
    %v1295 = vmul.f32 %v1288, %v1204
    %v1296 = vadd.f32 %v1294, %v1295
    %1297 = vst [vmem:[#allocation3 + $0x38] sm:$0xff] %v1296
    %1298 = vst [vmem:[%s13] sm:$0xff] %v1296
    %v1299 = vld [vmem:[#allocation3] sm:$0xff]
    %v1300 = vld [vmem:[#allocation3 + $0x8] sm:$0xff]
    %v1301 = vld [vmem:[#allocation3 + $0x10] sm:$0xff]
    %v1302 = vld [vmem:[#allocation3 + $0x18] sm:$0xff]
    %v1303 = vld [vmem:[#allocation3 + $0x20] sm:$0xff]
    %v1304 = vld [vmem:[#allocation3 + $0x28] sm:$0xff]
    %v1305 = vld [vmem:[#allocation3 + $0x30] sm:$0xff]
    %v1306 = vld [vmem:[#allocation3 + $0x38] sm:$0xff]
    %v1307 = vpack.c.bf16 %v1300, %v1299
    %v1308 = vpack.c.bf16 %v1302, %v1301
    %v1309 = vpack.c.bf16 %v1304, %v1303
    %v1310 = vpack.c.bf16 %v1306, %v1305
    %v1311 = vld [vmem:[#allocation9] sm:$0xff]
    %v1312 = vld [vmem:[#allocation9 + $0x8] sm:$0xf]
    %v1313 = vld [vmem:[#allocation9 + $0xc] sm:$0xff]
    %v1314 = vld [vmem:[#allocation9 + $0x14] sm:$0xf]
    %v1315 = vld [vmem:[#allocation9 + $0x18] sm:$0xff]
    %v1316 = vld [vmem:[#allocation9 + $0x20] sm:$0xf]
    %v1317 = vld [vmem:[#allocation9 + $0x24] sm:$0xff]
    %v1318 = vld [vmem:[#allocation9 + $0x2c] sm:$0xf]
    %v1319 = vld [vmem:[#allocation9 + $0x30] sm:$0xff]
    %v1320 = vld [vmem:[#allocation9 + $0x38] sm:$0xf]
    %v1321 = vld [vmem:[#allocation9 + $0x3c] sm:$0xff]
    %v1322 = vld [vmem:[#allocation9 + $0x44] sm:$0xf]
    %v1323 = vld [vmem:[#allocation9 + $0x48] sm:$0xff]
    %v1324 = vld [vmem:[#allocation9 + $0x50] sm:$0xf]
    %v1325 = vld [vmem:[#allocation9 + $0x54] sm:$0xff]
    %v1326 = vld [vmem:[#allocation9 + $0x5c] sm:$0xf]
    %v1327 = vld [vmem:[#allocation9 + $0x60] sm:$0xff]
    %v1328 = vld [vmem:[#allocation9 + $0x68] sm:$0xf]
    %v1329 = vld [vmem:[#allocation9 + $0x6c] sm:$0xff]
    %v1330 = vld [vmem:[#allocation9 + $0x74] sm:$0xf]
    %v1331 = vld [vmem:[#allocation9 + $0x78] sm:$0xff]
    %v1332 = vld [vmem:[#allocation9 + $0x80] sm:$0xf]
    %v1333 = vld [vmem:[#allocation9 + $0x84] sm:$0xff]
    %v1334 = vld [vmem:[#allocation9 + $0x8c] sm:$0xf]
    %v1335 = vld [vmem:[#allocation9 + $0x90] sm:$0xff]
    %v1336 = vld [vmem:[#allocation9 + $0x98] sm:$0xf]
    %v1337 = vld [vmem:[#allocation9 + $0x9c] sm:$0xff]
    %v1338 = vld [vmem:[#allocation9 + $0xa4] sm:$0xf]
    %v1339 = vld [vmem:[#allocation9 + $0xa8] sm:$0xff]
    %v1340 = vld [vmem:[#allocation9 + $0xb0] sm:$0xf]
    %v1341 = vld [vmem:[#allocation9 + $0xb4] sm:$0xff]
    %v1342 = vld [vmem:[#allocation9 + $0xbc] sm:$0xf]
    %v1343 = vld [vmem:[%s8] sm:$0x7]
    %v1345 = vperm.slane %v1343, 0
    %v1346 = vperm.slane %v1343, 1
    %v1347 = vperm.slane %v1343, 2
    %v1383 = vunpack.c.l.b16 %v1311
    %v1384 = vunpack.c.h.b16 %v1311
    %v1385 = vunpack.c.l.b16 %v1312
    %v1386 = vunpack.c.l.b16 %v1313
    %v1387 = vunpack.c.h.b16 %v1313
    %v1388 = vunpack.c.l.b16 %v1314
    %v1389 = vunpack.c.l.b16 %v1315
    %v1390 = vunpack.c.h.b16 %v1315
    %v1391 = vunpack.c.l.b16 %v1316
    %v1392 = vunpack.c.l.b16 %v1317
    %v1393 = vunpack.c.h.b16 %v1317
    %v1394 = vunpack.c.l.b16 %v1318
    %v1395 = vunpack.c.l.b16 %v1319
    %v1396 = vunpack.c.h.b16 %v1319
    %v1397 = vunpack.c.l.b16 %v1320
    %v1398 = vunpack.c.l.b16 %v1321
    %v1399 = vunpack.c.h.b16 %v1321
    %v1400 = vunpack.c.l.b16 %v1322
    %v1401 = vunpack.c.l.b16 %v1323
    %v1402 = vunpack.c.h.b16 %v1323
    %v1403 = vunpack.c.l.b16 %v1324
    %v1404 = vunpack.c.l.b16 %v1325
    %v1405 = vunpack.c.h.b16 %v1325
    %v1406 = vunpack.c.l.b16 %v1326
    %v1407 = vunpack.c.l.b16 %v1327
    %v1408 = vunpack.c.h.b16 %v1327
    %v1409 = vunpack.c.l.b16 %v1328
    %v1410 = vunpack.c.l.b16 %v1329
    %v1411 = vunpack.c.h.b16 %v1329
    %v1412 = vunpack.c.l.b16 %v1330
    %v1413 = vunpack.c.l.b16 %v1331
    %v1414 = vunpack.c.h.b16 %v1331
    %v1415 = vunpack.c.l.b16 %v1332
    %v1416 = vunpack.c.l.b16 %v1333
    %v1417 = vunpack.c.h.b16 %v1333
    %v1418 = vunpack.c.l.b16 %v1334
    %v1419 = vunpack.c.l.b16 %v1335
    %v1420 = vunpack.c.h.b16 %v1335
    %v1421 = vunpack.c.l.b16 %v1336
    %v1422 = vunpack.c.l.b16 %v1337
    %v1423 = vunpack.c.h.b16 %v1337
    %v1424 = vunpack.c.l.b16 %v1338
    %v1425 = vunpack.c.l.b16 %v1339
    %v1426 = vunpack.c.h.b16 %v1339
    %v1427 = vunpack.c.l.b16 %v1340
    %v1428 = vunpack.c.l.b16 %v1341
    %v1429 = vunpack.c.h.b16 %v1341
    %v1430 = vunpack.c.l.b16 %v1342
    %v1431 = vpack.c.b16 %v1386, %v1383
    %v1432 = vpack.c.b16 %v1387, %v1384
    %v1433 = vpack.c.b16 %v1388, %v1385
    %v1434 = vpack.c.b16 %v1392, %v1389
    %v1435 = vpack.c.b16 %v1393, %v1390
    %v1436 = vpack.c.b16 %v1394, %v1391
    %v1437 = vpack.c.b16 %v1398, %v1395
    %v1438 = vpack.c.b16 %v1399, %v1396
    %v1439 = vpack.c.b16 %v1400, %v1397
    %v1440 = vpack.c.b16 %v1404, %v1401
    %v1441 = vpack.c.b16 %v1405, %v1402
    %v1442 = vpack.c.b16 %v1406, %v1403
    %v1443 = vpack.c.b16 %v1410, %v1407
    %v1444 = vpack.c.b16 %v1411, %v1408
    %v1445 = vpack.c.b16 %v1412, %v1409
    %v1446 = vpack.c.b16 %v1416, %v1413
    %v1447 = vpack.c.b16 %v1417, %v1414
    %v1448 = vpack.c.b16 %v1418, %v1415
    %v1449 = vpack.c.b16 %v1422, %v1419
    %v1450 = vpack.c.b16 %v1423, %v1420
    %v1451 = vpack.c.b16 %v1424, %v1421
    %v1452 = vpack.c.b16 %v1428, %v1425
    %v1453 = vpack.c.b16 %v1429, %v1426
    %v1454 = vpack.c.b16 %v1430, %v1427
    %1479 = vmatpush.bf16.msra.mxu0 %v1452
    %1480 = vmatpush.bf16.msra.mxu0 %v1449
    %1481 = vmatpush.bf16.msra.mxu0 %v1446
    %1482 = vmatpush.bf16.msra.mxu0 %v1443
    %1483 = vmatpush.bf16.msra.mxu0 %v1440
    %1484 = vmatpush.bf16.msra.mxu0 %v1437
    %1485 = vmatpush.bf16.msra.mxu0 %v1434
    %1486 = vmatpush.bf16.msra.mxu0 %v1431
    %1487 = vmatmul.bf16.gmra.mxu0 %v1307
    %v1488 = vpop.f32.mrf.mxu0
    %v1489 = vadd.f32 %v1345, %v1488
    %v1490 = vpop.f32.mrf.mxu0
    %v1491 = vadd.f32 %v1345, %v1490
    %1492 = vmatmul.bf16.gmra.mxu0 %v1308
    %v1493 = vpop.f32.mrf.mxu0
    %v1494 = vadd.f32 %v1345, %v1493
    %v1495 = vpop.f32.mrf.mxu0
    %v1496 = vadd.f32 %v1345, %v1495
    %1497 = vmatmul.bf16.gmra.mxu0 %v1309
    %v1498 = vpop.f32.mrf.mxu0
    %v1499 = vadd.f32 %v1345, %v1498
    %v1500 = vpop.f32.mrf.mxu0
    %v1501 = vadd.f32 %v1345, %v1500
    %1502 = vmatmul.bf16.gmra.mxu0 %v1310
    %v1503 = vpop.f32.mrf.mxu0
    %v1504 = vadd.f32 %v1345, %v1503
    %v1505 = vpop.f32.mrf.mxu0
    %v1506 = vadd.f32 %v1345, %v1505
    %1507 = vdwg.mxu0
    %1508 = vmatpush.bf16.msra.mxu0 %v1453
    %1509 = vmatpush.bf16.msra.mxu0 %v1450
    %1510 = vmatpush.bf16.msra.mxu0 %v1447
    %1511 = vmatpush.bf16.msra.mxu0 %v1444
    %1512 = vmatpush.bf16.msra.mxu0 %v1441
    %1513 = vmatpush.bf16.msra.mxu0 %v1438
    %1514 = vmatpush.bf16.msra.mxu0 %v1435
    %1515 = vmatpush.bf16.msra.mxu0 %v1432
    %1516 = vmatmul.bf16.gmra.mxu0 %v1307
    %v1517 = vpop.f32.mrf.mxu0
    %v1518 = vadd.f32 %v1346, %v1517
    %v1519 = vpop.f32.mrf.mxu0
    %v1520 = vadd.f32 %v1346, %v1519
    %1521 = vmatmul.bf16.gmra.mxu0 %v1308
    %v1522 = vpop.f32.mrf.mxu0
    %v1523 = vadd.f32 %v1346, %v1522
    %v1524 = vpop.f32.mrf.mxu0
    %v1525 = vadd.f32 %v1346, %v1524
    %1526 = vmatmul.bf16.gmra.mxu0 %v1309
    %v1527 = vpop.f32.mrf.mxu0
    %v1528 = vadd.f32 %v1346, %v1527
    %v1529 = vpop.f32.mrf.mxu0
    %v1530 = vadd.f32 %v1346, %v1529
    %1531 = vmatmul.bf16.gmra.mxu0 %v1310
    %v1532 = vpop.f32.mrf.mxu0
    %v1533 = vadd.f32 %v1346, %v1532
    %v1534 = vpop.f32.mrf.mxu0
    %v1535 = vadd.f32 %v1346, %v1534
    %1536 = vdwg.mxu0
    %1537 = vmatpush.bf16.msra.mxu0 %v1454
    %1538 = vmatpush.bf16.msra.mxu0 %v1451
    %1539 = vmatpush.bf16.msra.mxu0 %v1448
    %1540 = vmatpush.bf16.msra.mxu0 %v1445
    %1541 = vmatpush.bf16.msra.mxu0 %v1442
    %1542 = vmatpush.bf16.msra.mxu0 %v1439
    %1543 = vmatpush.bf16.msra.mxu0 %v1436
    %1544 = vmatpush.bf16.msra.mxu0 %v1433
    %1545 = vmatmul.bf16.gmra.mxu0 %v1307
    %v1546 = vpop.f32.mrf.mxu0
    %v1547 = vadd.f32 %v1347, %v1546
    %v1548 = vpop.f32.mrf.mxu0
    %v1549 = vadd.f32 %v1347, %v1548
    %1550 = vmatmul.bf16.gmra.mxu0 %v1308
    %v1551 = vpop.f32.mrf.mxu0
    %v1552 = vadd.f32 %v1347, %v1551
    %v1553 = vpop.f32.mrf.mxu0
    %v1554 = vadd.f32 %v1347, %v1553
    %1555 = vmatmul.bf16.gmra.mxu0 %v1309
    %v1556 = vpop.f32.mrf.mxu0
    %v1557 = vadd.f32 %v1347, %v1556
    %v1558 = vpop.f32.mrf.mxu0
    %v1559 = vadd.f32 %v1347, %v1558
    %1560 = vmatmul.bf16.gmra.mxu0 %v1310
    %v1561 = vpop.f32.mrf.mxu0
    %v1562 = vadd.f32 %v1347, %v1561
    %v1563 = vpop.f32.mrf.mxu0
    %v1564 = vadd.f32 %v1347, %v1563
    %1565 = vdwg.mxu0
    %1566 = vst [vmem:[#allocation2] sm:$0xff] %v1489
    %1567 = vst [vmem:[#allocation2 + $0x8] sm:$0xff] %v1518
    %1568 = vst [vmem:[#allocation2 + $0x10] sm:$0xff] %v1547
    %1569 = vst [vmem:[#allocation2 + $0x18] sm:$0xff] %v1491
    %1570 = vst [vmem:[#allocation2 + $0x20] sm:$0xff] %v1520
    %1571 = vst [vmem:[#allocation2 + $0x28] sm:$0xff] %v1549
    %1572 = vst [vmem:[#allocation2 + $0x30] sm:$0xff] %v1494
    %1573 = vst [vmem:[#allocation2 + $0x38] sm:$0xff] %v1523
    %1574 = vst [vmem:[#allocation2 + $0x40] sm:$0xff] %v1552
    %1575 = vst [vmem:[#allocation2 + $0x48] sm:$0xff] %v1496
    %1576 = vst [vmem:[#allocation2 + $0x50] sm:$0xff] %v1525
    %1577 = vst [vmem:[#allocation2 + $0x58] sm:$0xff] %v1554
    %1578 = vst [vmem:[#allocation2 + $0x60] sm:$0xff] %v1499
    %1579 = vst [vmem:[#allocation2 + $0x68] sm:$0xff] %v1528
    %1580 = vst [vmem:[#allocation2 + $0x70] sm:$0xff] %v1557
    %1581 = vst [vmem:[#allocation2 + $0x78] sm:$0xff] %v1501
    %1582 = vst [vmem:[#allocation2 + $0x80] sm:$0xff] %v1530
    %1583 = vst [vmem:[#allocation2 + $0x88] sm:$0xff] %v1559
    %1584 = vst [vmem:[#allocation2 + $0x90] sm:$0xff] %v1504
    %1585 = vst [vmem:[#allocation2 + $0x98] sm:$0xff] %v1533
    %1586 = vst [vmem:[#allocation2 + $0xa0] sm:$0xff] %v1562
    %1587 = vst [vmem:[#allocation2 + $0xa8] sm:$0xff] %v1506
    %1588 = vst [vmem:[#allocation2 + $0xb0] sm:$0xff] %v1535
    %1589 = vst [vmem:[#allocation2 + $0xb8] sm:$0xff] %v1564
    %v1590 = vld [vmem:[#allocation10] sm:$0xff]
    %v1591 = vld [vmem:[#allocation10 + $0x8] sm:$0xf]
    %v1592 = vld [vmem:[#allocation10 + $0xc] sm:$0xff]
    %v1593 = vld [vmem:[#allocation10 + $0x14] sm:$0xf]
    %v1594 = vld [vmem:[#allocation10 + $0x18] sm:$0xff]
    %v1595 = vld [vmem:[#allocation10 + $0x20] sm:$0xf]
    %v1596 = vld [vmem:[#allocation10 + $0x24] sm:$0xff]
    %v1597 = vld [vmem:[#allocation10 + $0x2c] sm:$0xf]
    %v1598 = vld [vmem:[#allocation10 + $0x30] sm:$0xff]
    %v1599 = vld [vmem:[#allocation10 + $0x38] sm:$0xf]
    %v1600 = vld [vmem:[#allocation10 + $0x3c] sm:$0xff]
    %v1601 = vld [vmem:[#allocation10 + $0x44] sm:$0xf]
    %v1602 = vld [vmem:[#allocation10 + $0x48] sm:$0xff]
    %v1603 = vld [vmem:[#allocation10 + $0x50] sm:$0xf]
    %v1604 = vld [vmem:[#allocation10 + $0x54] sm:$0xff]
    %v1605 = vld [vmem:[#allocation10 + $0x5c] sm:$0xf]
    %v1606 = vld [vmem:[#allocation10 + $0x60] sm:$0xff]
    %v1607 = vld [vmem:[#allocation10 + $0x68] sm:$0xf]
    %v1608 = vld [vmem:[#allocation10 + $0x6c] sm:$0xff]
    %v1609 = vld [vmem:[#allocation10 + $0x74] sm:$0xf]
    %v1610 = vld [vmem:[#allocation10 + $0x78] sm:$0xff]
    %v1611 = vld [vmem:[#allocation10 + $0x80] sm:$0xf]
    %v1612 = vld [vmem:[#allocation10 + $0x84] sm:$0xff]
    %v1613 = vld [vmem:[#allocation10 + $0x8c] sm:$0xf]
    %v1614 = vld [vmem:[#allocation10 + $0x90] sm:$0xff]
    %v1615 = vld [vmem:[#allocation10 + $0x98] sm:$0xf]
    %v1616 = vld [vmem:[#allocation10 + $0x9c] sm:$0xff]
    %v1617 = vld [vmem:[#allocation10 + $0xa4] sm:$0xf]
    %v1618 = vld [vmem:[#allocation10 + $0xa8] sm:$0xff]
    %v1619 = vld [vmem:[#allocation10 + $0xb0] sm:$0xf]
    %v1620 = vld [vmem:[#allocation10 + $0xb4] sm:$0xff]
    %v1621 = vld [vmem:[#allocation10 + $0xbc] sm:$0xf]
    %v1622 = vld [vmem:[%s9] sm:$0x1]
    %v1624 = vperm.slane %v1622, 0
    %s1626 = scalar_lea.vmem %s1, 8
    %v1627 = vld [vmem:[%s1626] sm:$0xff]
    %v1628 = vld [vmem:[#allocation2] sm:$0xff]
    %v1629 = vld [vmem:[#allocation2 + $0x8] sm:$0xff]
    %v1630 = vld [vmem:[#allocation2 + $0x10] sm:$0xff]
    %v1631 = vpack.c.bf16 %v1627, %v1627
    %v1664 = vunpack.c.l.b16 %v1590
    %v1665 = vunpack.c.h.b16 %v1590
    %v1666 = vunpack.c.l.b16 %v1591
    %v1667 = vunpack.c.l.b16 %v1592
    %v1668 = vunpack.c.h.b16 %v1592
    %v1669 = vunpack.c.l.b16 %v1593
    %v1670 = vunpack.c.l.b16 %v1594
    %v1671 = vunpack.c.h.b16 %v1594
    %v1672 = vunpack.c.l.b16 %v1595
    %v1673 = vunpack.c.l.b16 %v1596
    %v1674 = vunpack.c.h.b16 %v1596
    %v1675 = vunpack.c.l.b16 %v1597
    %v1676 = vunpack.c.l.b16 %v1598
    %v1677 = vunpack.c.h.b16 %v1598
    %v1678 = vunpack.c.l.b16 %v1599
    %v1679 = vunpack.c.l.b16 %v1600
    %v1680 = vunpack.c.h.b16 %v1600
    %v1681 = vunpack.c.l.b16 %v1601
    %v1682 = vunpack.c.l.b16 %v1602
    %v1683 = vunpack.c.h.b16 %v1602
    %v1684 = vunpack.c.l.b16 %v1603
    %v1685 = vunpack.c.l.b16 %v1604
    %v1686 = vunpack.c.h.b16 %v1604
    %v1687 = vunpack.c.l.b16 %v1605
    %v1688 = vunpack.c.l.b16 %v1606
    %v1689 = vunpack.c.h.b16 %v1606
    %v1690 = vunpack.c.l.b16 %v1607
    %v1691 = vunpack.c.l.b16 %v1608
    %v1692 = vunpack.c.h.b16 %v1608
    %v1693 = vunpack.c.l.b16 %v1609
    %v1694 = vunpack.c.l.b16 %v1610
    %v1695 = vunpack.c.h.b16 %v1610
    %v1696 = vunpack.c.l.b16 %v1611
    %v1697 = vunpack.c.l.b16 %v1612
    %v1698 = vunpack.c.h.b16 %v1612
    %v1699 = vunpack.c.l.b16 %v1613
    %v1700 = vunpack.c.l.b16 %v1614
    %v1701 = vunpack.c.h.b16 %v1614
    %v1702 = vunpack.c.l.b16 %v1615
    %v1703 = vunpack.c.l.b16 %v1616
    %v1704 = vunpack.c.h.b16 %v1616
    %v1705 = vunpack.c.l.b16 %v1617
    %v1706 = vunpack.c.l.b16 %v1618
    %v1707 = vunpack.c.h.b16 %v1618
    %v1708 = vunpack.c.l.b16 %v1619
    %v1709 = vunpack.c.l.b16 %v1620
    %v1710 = vunpack.c.h.b16 %v1620
    %v1711 = vunpack.c.l.b16 %v1621
    %v1712 = vpack.c.b16 %v1667, %v1664
    %v1713 = vpack.c.b16 %v1668, %v1665
    %v1714 = vpack.c.b16 %v1669, %v1666
    %v1715 = vpack.c.b16 %v1673, %v1670
    %v1716 = vpack.c.b16 %v1674, %v1671
    %v1717 = vpack.c.b16 %v1675, %v1672
    %v1718 = vpack.c.b16 %v1679, %v1676
    %v1719 = vpack.c.b16 %v1680, %v1677
    %v1720 = vpack.c.b16 %v1681, %v1678
    %v1721 = vpack.c.b16 %v1685, %v1682
    %v1722 = vpack.c.b16 %v1686, %v1683
    %v1723 = vpack.c.b16 %v1687, %v1684
    %v1724 = vpack.c.b16 %v1691, %v1688
    %v1725 = vpack.c.b16 %v1692, %v1689
    %v1726 = vpack.c.b16 %v1693, %v1690
    %v1727 = vpack.c.b16 %v1697, %v1694
    %v1728 = vpack.c.b16 %v1698, %v1695
    %v1729 = vpack.c.b16 %v1699, %v1696
    %v1730 = vpack.c.b16 %v1703, %v1700
    %v1731 = vpack.c.b16 %v1704, %v1701
    %v1732 = vpack.c.b16 %v1705, %v1702
    %v1733 = vpack.c.b16 %v1709, %v1706
    %v1734 = vpack.c.b16 %v1710, %v1707
    %v1735 = vpack.c.b16 %v1711, %v1708
    %1760 = vmatpush.bf16.msra.mxu0 %v1733
    %1761 = vmatpush.bf16.msra.mxu0 %v1730
    %1762 = vmatpush.bf16.msra.mxu0 %v1727
    %1763 = vmatpush.bf16.msra.mxu0 %v1724
    %1764 = vmatpush.bf16.msra.mxu0 %v1721
    %1765 = vmatpush.bf16.msra.mxu0 %v1718
    %1766 = vmatpush.bf16.msra.mxu0 %v1715
    %1767 = vmatpush.bf16.msra.mxu0 %v1712
    %1768 = vmatmul.bf16.gmra.mxu0 %v1631
    %v1769 = vpop.f32.mrf.mxu0
    %v1770 = vadd.f32 0.0, %v1769
    %v1771 = vpop.f32.mrf.mxu0
    %1772 = vdwg.mxu0
    %1773 = vmatpush.bf16.msra.mxu0 %v1734
    %1774 = vmatpush.bf16.msra.mxu0 %v1731
    %1775 = vmatpush.bf16.msra.mxu0 %v1728
    %1776 = vmatpush.bf16.msra.mxu0 %v1725
    %1777 = vmatpush.bf16.msra.mxu0 %v1722
    %1778 = vmatpush.bf16.msra.mxu0 %v1719
    %1779 = vmatpush.bf16.msra.mxu0 %v1716
    %1780 = vmatpush.bf16.msra.mxu0 %v1713
    %1781 = vmatmul.bf16.gmra.mxu0 %v1631
    %v1782 = vpop.f32.mrf.mxu0
    %v1783 = vadd.f32 0.0, %v1782
    %v1784 = vpop.f32.mrf.mxu0
    %1785 = vdwg.mxu0
    %1786 = vmatpush.bf16.msra.mxu0 %v1735
    %1787 = vmatpush.bf16.msra.mxu0 %v1732
    %1788 = vmatpush.bf16.msra.mxu0 %v1729
    %1789 = vmatpush.bf16.msra.mxu0 %v1726
    %1790 = vmatpush.bf16.msra.mxu0 %v1723
    %1791 = vmatpush.bf16.msra.mxu0 %v1720
    %1792 = vmatpush.bf16.msra.mxu0 %v1717
    %1793 = vmatpush.bf16.msra.mxu0 %v1714
    %1794 = vmatmul.bf16.gmra.mxu0 %v1631
    %v1795 = vpop.f32.mrf.mxu0
    %v1796 = vadd.f32 0.0, %v1795
    %v1797 = vpop.f32.mrf.mxu0
    %1798 = vdwg.mxu0
    %v1799 = vadd.f32 %v1628, %v1770
    %v1800 = vadd.f32 %v1629, %v1783
    %v1801 = vxor.u32 %v1799, 2147483648
    %v1802 = vxor.u32 %v1800, 2147483648
    %v1803 = vmul.f32 %v1801, 1.442695
    %v1804 = vpow.pop %v1803
    %v1805 = vmul.f32 %v1802, 1.442695
    %v1806 = vpow.pop %v1805
    %v1807 = vadd.f32 %v1804, 1.0
    %v1808 = vadd.f32 %v1806, 1.0
    %v1809 = vrcp.pop %v1807
    %v1810 = vmul.f32 %v1807, %v1809
    %v1811 = vsub.f32 1.0, %v1810
    %v1812 = vmul.f32 %v1809, %v1811
    %v1813 = vadd.f32 %v1809, %v1812
    %vm1814 = vweird.f32 %v1807
    %vm1815 = vweird.f32 %v1809
    %vm1816 = vmor %vm1814, %vm1815
    %v1817 = vsel %vm1816, %v1809, %v1813
    %v1818 = vand.u32 2147483647, %v1807
    %vm1819 = vcmp.eq.f32.partialorder %v1818, 8.507059e+37
    %v1820 = vand.u32 %v1807, 2147483648
    %v1821 = vor.u32 1.1754944e-38, %v1820
    %v1822 = vsel %vm1819, %v1821, %v1817
    %v1823 = vmul.f32 1.0, %v1822
    %v1824 = vrcp.pop %v1808
    %v1825 = vmul.f32 %v1808, %v1824
    %v1826 = vsub.f32 1.0, %v1825
    %v1827 = vmul.f32 %v1824, %v1826
    %v1828 = vadd.f32 %v1824, %v1827
    %vm1829 = vweird.f32 %v1808
    %vm1830 = vweird.f32 %v1824
    %vm1831 = vmor %vm1829, %vm1830
    %v1832 = vsel %vm1831, %v1824, %v1828
    %v1833 = vand.u32 2147483647, %v1808
    %vm1834 = vcmp.eq.f32.partialorder %v1833, 8.507059e+37
    %v1835 = vand.u32 %v1808, 2147483648
    %v1836 = vor.u32 1.1754944e-38, %v1835
    %v1837 = vsel %vm1834, %v1836, %v1832
    %v1838 = vmul.f32 1.0, %v1837
    %v1839 = vadd.f32 %v1796, %v1624
    %v1840 = vmul.f32 %v1823, %v1839
    %v1841 = vadd.f32 %v1630, %v1840
    %v1842 = vtanh.pop %v1841
    %v1843 = vsub.f32 1.0, %v1838
    %v1844 = vmul.f32 %v1843, %v1842
    %v1845 = vmul.f32 %v1838, %v1627
    %v1846 = vadd.f32 %v1844, %v1845
    %1847 = vst [vmem:[#allocation4] sm:$0xff] %v1846
    %v1848 = vld [vmem:[#allocation2 + $0x18] sm:$0xff]
    %v1849 = vld [vmem:[#allocation2 + $0x20] sm:$0xff]
    %v1850 = vld [vmem:[#allocation2 + $0x28] sm:$0xff]
    %v1851 = vpack.c.bf16 %v1846, %v1846
    %1852 = vmatpush.bf16.msra.mxu0 %v1733
    %1853 = vmatpush.bf16.msra.mxu0 %v1730
    %1854 = vmatpush.bf16.msra.mxu0 %v1727
    %1855 = vmatpush.bf16.msra.mxu0 %v1724
    %1856 = vmatpush.bf16.msra.mxu0 %v1721
    %1857 = vmatpush.bf16.msra.mxu0 %v1718
    %1858 = vmatpush.bf16.msra.mxu0 %v1715
    %1859 = vmatpush.bf16.msra.mxu0 %v1712
    %1860 = vmatmul.bf16.gmra.mxu0 %v1851
    %v1861 = vpop.f32.mrf.mxu0
    %v1862 = vadd.f32 0.0, %v1861
    %v1863 = vpop.f32.mrf.mxu0
    %1864 = vdwg.mxu0
    %1865 = vmatpush.bf16.msra.mxu0 %v1734
    %1866 = vmatpush.bf16.msra.mxu0 %v1731
    %1867 = vmatpush.bf16.msra.mxu0 %v1728
    %1868 = vmatpush.bf16.msra.mxu0 %v1725
    %1869 = vmatpush.bf16.msra.mxu0 %v1722
    %1870 = vmatpush.bf16.msra.mxu0 %v1719
    %1871 = vmatpush.bf16.msra.mxu0 %v1716
    %1872 = vmatpush.bf16.msra.mxu0 %v1713
    %1873 = vmatmul.bf16.gmra.mxu0 %v1851
    %v1874 = vpop.f32.mrf.mxu0
    %v1875 = vadd.f32 0.0, %v1874
    %v1876 = vpop.f32.mrf.mxu0
    %1877 = vdwg.mxu0
    %1878 = vmatpush.bf16.msra.mxu0 %v1735
    %1879 = vmatpush.bf16.msra.mxu0 %v1732
    %1880 = vmatpush.bf16.msra.mxu0 %v1729
    %1881 = vmatpush.bf16.msra.mxu0 %v1726
    %1882 = vmatpush.bf16.msra.mxu0 %v1723
    %1883 = vmatpush.bf16.msra.mxu0 %v1720
    %1884 = vmatpush.bf16.msra.mxu0 %v1717
    %1885 = vmatpush.bf16.msra.mxu0 %v1714
    %1886 = vmatmul.bf16.gmra.mxu0 %v1851
    %v1887 = vpop.f32.mrf.mxu0
    %v1888 = vadd.f32 0.0, %v1887
    %v1889 = vpop.f32.mrf.mxu0
    %1890 = vdwg.mxu0
    %v1891 = vadd.f32 %v1848, %v1862
    %v1892 = vadd.f32 %v1849, %v1875
    %v1893 = vxor.u32 %v1891, 2147483648
    %v1894 = vxor.u32 %v1892, 2147483648
    %v1895 = vmul.f32 %v1893, 1.442695
    %v1896 = vpow.pop %v1895
    %v1897 = vmul.f32 %v1894, 1.442695
    %v1898 = vpow.pop %v1897
    %v1899 = vadd.f32 %v1896, 1.0
    %v1900 = vadd.f32 %v1898, 1.0
    %v1901 = vrcp.pop %v1899
    %v1902 = vmul.f32 %v1899, %v1901
    %v1903 = vsub.f32 1.0, %v1902
    %v1904 = vmul.f32 %v1901, %v1903
    %v1905 = vadd.f32 %v1901, %v1904
    %vm1906 = vweird.f32 %v1899
    %vm1907 = vweird.f32 %v1901
    %vm1908 = vmor %vm1906, %vm1907
    %v1909 = vsel %vm1908, %v1901, %v1905
    %v1910 = vand.u32 2147483647, %v1899
    %vm1911 = vcmp.eq.f32.partialorder %v1910, 8.507059e+37
    %v1912 = vand.u32 %v1899, 2147483648
    %v1913 = vor.u32 1.1754944e-38, %v1912
    %v1914 = vsel %vm1911, %v1913, %v1909
    %v1915 = vmul.f32 1.0, %v1914
    %v1916 = vrcp.pop %v1900
    %v1917 = vmul.f32 %v1900, %v1916
    %v1918 = vsub.f32 1.0, %v1917
    %v1919 = vmul.f32 %v1916, %v1918
    %v1920 = vadd.f32 %v1916, %v1919
    %vm1921 = vweird.f32 %v1900
    %vm1922 = vweird.f32 %v1916
    %vm1923 = vmor %vm1921, %vm1922
    %v1924 = vsel %vm1923, %v1916, %v1920
    %v1925 = vand.u32 2147483647, %v1900
    %vm1926 = vcmp.eq.f32.partialorder %v1925, 8.507059e+37
    %v1927 = vand.u32 %v1900, 2147483648
    %v1928 = vor.u32 1.1754944e-38, %v1927
    %v1929 = vsel %vm1926, %v1928, %v1924
    %v1930 = vmul.f32 1.0, %v1929
    %v1931 = vadd.f32 %v1888, %v1624
    %v1932 = vmul.f32 %v1915, %v1931
    %v1933 = vadd.f32 %v1850, %v1932
    %v1934 = vtanh.pop %v1933
    %v1935 = vsub.f32 1.0, %v1930
    %v1936 = vmul.f32 %v1935, %v1934
    %v1937 = vmul.f32 %v1930, %v1846
    %v1938 = vadd.f32 %v1936, %v1937
    %1939 = vst [vmem:[#allocation4 + $0x8] sm:$0xff] %v1938
    %v1940 = vld [vmem:[#allocation2 + $0x30] sm:$0xff]
    %v1941 = vld [vmem:[#allocation2 + $0x38] sm:$0xff]
    %v1942 = vld [vmem:[#allocation2 + $0x40] sm:$0xff]
    %v1943 = vpack.c.bf16 %v1938, %v1938
    %1944 = vmatpush.bf16.msra.mxu0 %v1733
    %1945 = vmatpush.bf16.msra.mxu0 %v1730
    %1946 = vmatpush.bf16.msra.mxu0 %v1727
    %1947 = vmatpush.bf16.msra.mxu0 %v1724
    %1948 = vmatpush.bf16.msra.mxu0 %v1721
    %1949 = vmatpush.bf16.msra.mxu0 %v1718
    %1950 = vmatpush.bf16.msra.mxu0 %v1715
    %1951 = vmatpush.bf16.msra.mxu0 %v1712
    %1952 = vmatmul.bf16.gmra.mxu0 %v1943
    %v1953 = vpop.f32.mrf.mxu0
    %v1954 = vadd.f32 0.0, %v1953
    %v1955 = vpop.f32.mrf.mxu0
    %1956 = vdwg.mxu0
    %1957 = vmatpush.bf16.msra.mxu0 %v1734
    %1958 = vmatpush.bf16.msra.mxu0 %v1731
    %1959 = vmatpush.bf16.msra.mxu0 %v1728
    %1960 = vmatpush.bf16.msra.mxu0 %v1725
    %1961 = vmatpush.bf16.msra.mxu0 %v1722
    %1962 = vmatpush.bf16.msra.mxu0 %v1719
    %1963 = vmatpush.bf16.msra.mxu0 %v1716
    %1964 = vmatpush.bf16.msra.mxu0 %v1713
    %1965 = vmatmul.bf16.gmra.mxu0 %v1943
    %v1966 = vpop.f32.mrf.mxu0
    %v1967 = vadd.f32 0.0, %v1966
    %v1968 = vpop.f32.mrf.mxu0
    %1969 = vdwg.mxu0
    %1970 = vmatpush.bf16.msra.mxu0 %v1735
    %1971 = vmatpush.bf16.msra.mxu0 %v1732
    %1972 = vmatpush.bf16.msra.mxu0 %v1729
    %1973 = vmatpush.bf16.msra.mxu0 %v1726
    %1974 = vmatpush.bf16.msra.mxu0 %v1723
    %1975 = vmatpush.bf16.msra.mxu0 %v1720
    %1976 = vmatpush.bf16.msra.mxu0 %v1717
    %1977 = vmatpush.bf16.msra.mxu0 %v1714
    %1978 = vmatmul.bf16.gmra.mxu0 %v1943
    %v1979 = vpop.f32.mrf.mxu0
    %v1980 = vadd.f32 0.0, %v1979
    %v1981 = vpop.f32.mrf.mxu0
    %1982 = vdwg.mxu0
    %v1983 = vadd.f32 %v1940, %v1954
    %v1984 = vadd.f32 %v1941, %v1967
    %v1985 = vxor.u32 %v1983, 2147483648
    %v1986 = vxor.u32 %v1984, 2147483648
    %v1987 = vmul.f32 %v1985, 1.442695
    %v1988 = vpow.pop %v1987
    %v1989 = vmul.f32 %v1986, 1.442695
    %v1990 = vpow.pop %v1989
    %v1991 = vadd.f32 %v1988, 1.0
    %v1992 = vadd.f32 %v1990, 1.0
    %v1993 = vrcp.pop %v1991
    %v1994 = vmul.f32 %v1991, %v1993
    %v1995 = vsub.f32 1.0, %v1994
    %v1996 = vmul.f32 %v1993, %v1995
    %v1997 = vadd.f32 %v1993, %v1996
    %vm1998 = vweird.f32 %v1991
    %vm1999 = vweird.f32 %v1993
    %vm2000 = vmor %vm1998, %vm1999
    %v2001 = vsel %vm2000, %v1993, %v1997
    %v2002 = vand.u32 2147483647, %v1991
    %vm2003 = vcmp.eq.f32.partialorder %v2002, 8.507059e+37
    %v2004 = vand.u32 %v1991, 2147483648
    %v2005 = vor.u32 1.1754944e-38, %v2004
    %v2006 = vsel %vm2003, %v2005, %v2001
    %v2007 = vmul.f32 1.0, %v2006
    %v2008 = vrcp.pop %v1992
    %v2009 = vmul.f32 %v1992, %v2008
    %v2010 = vsub.f32 1.0, %v2009
    %v2011 = vmul.f32 %v2008, %v2010
    %v2012 = vadd.f32 %v2008, %v2011
    %vm2013 = vweird.f32 %v1992
    %vm2014 = vweird.f32 %v2008
    %vm2015 = vmor %vm2013, %vm2014
    %v2016 = vsel %vm2015, %v2008, %v2012
    %v2017 = vand.u32 2147483647, %v1992
    %vm2018 = vcmp.eq.f32.partialorder %v2017, 8.507059e+37
    %v2019 = vand.u32 %v1992, 2147483648
    %v2020 = vor.u32 1.1754944e-38, %v2019
    %v2021 = vsel %vm2018, %v2020, %v2016
    %v2022 = vmul.f32 1.0, %v2021
    %v2023 = vadd.f32 %v1980, %v1624
    %v2024 = vmul.f32 %v2007, %v2023
    %v2025 = vadd.f32 %v1942, %v2024
    %v2026 = vtanh.pop %v2025
    %v2027 = vsub.f32 1.0, %v2022
    %v2028 = vmul.f32 %v2027, %v2026
    %v2029 = vmul.f32 %v2022, %v1938
    %v2030 = vadd.f32 %v2028, %v2029
    %2031 = vst [vmem:[#allocation4 + $0x10] sm:$0xff] %v2030
    %v2032 = vld [vmem:[#allocation2 + $0x48] sm:$0xff]
    %v2033 = vld [vmem:[#allocation2 + $0x50] sm:$0xff]
    %v2034 = vld [vmem:[#allocation2 + $0x58] sm:$0xff]
    %v2035 = vpack.c.bf16 %v2030, %v2030
    %2036 = vmatpush.bf16.msra.mxu0 %v1733
    %2037 = vmatpush.bf16.msra.mxu0 %v1730
    %2038 = vmatpush.bf16.msra.mxu0 %v1727
    %2039 = vmatpush.bf16.msra.mxu0 %v1724
    %2040 = vmatpush.bf16.msra.mxu0 %v1721
    %2041 = vmatpush.bf16.msra.mxu0 %v1718
    %2042 = vmatpush.bf16.msra.mxu0 %v1715
    %2043 = vmatpush.bf16.msra.mxu0 %v1712
    %2044 = vmatmul.bf16.gmra.mxu0 %v2035
    %v2045 = vpop.f32.mrf.mxu0
    %v2046 = vadd.f32 0.0, %v2045
    %v2047 = vpop.f32.mrf.mxu0
    %2048 = vdwg.mxu0
    %2049 = vmatpush.bf16.msra.mxu0 %v1734
    %2050 = vmatpush.bf16.msra.mxu0 %v1731
    %2051 = vmatpush.bf16.msra.mxu0 %v1728
    %2052 = vmatpush.bf16.msra.mxu0 %v1725
    %2053 = vmatpush.bf16.msra.mxu0 %v1722
    %2054 = vmatpush.bf16.msra.mxu0 %v1719
    %2055 = vmatpush.bf16.msra.mxu0 %v1716
    %2056 = vmatpush.bf16.msra.mxu0 %v1713
    %2057 = vmatmul.bf16.gmra.mxu0 %v2035
    %v2058 = vpop.f32.mrf.mxu0
    %v2059 = vadd.f32 0.0, %v2058
    %v2060 = vpop.f32.mrf.mxu0
    %2061 = vdwg.mxu0
    %2062 = vmatpush.bf16.msra.mxu0 %v1735
    %2063 = vmatpush.bf16.msra.mxu0 %v1732
    %2064 = vmatpush.bf16.msra.mxu0 %v1729
    %2065 = vmatpush.bf16.msra.mxu0 %v1726
    %2066 = vmatpush.bf16.msra.mxu0 %v1723
    %2067 = vmatpush.bf16.msra.mxu0 %v1720
    %2068 = vmatpush.bf16.msra.mxu0 %v1717
    %2069 = vmatpush.bf16.msra.mxu0 %v1714
    %2070 = vmatmul.bf16.gmra.mxu0 %v2035
    %v2071 = vpop.f32.mrf.mxu0
    %v2072 = vadd.f32 0.0, %v2071
    %v2073 = vpop.f32.mrf.mxu0
    %2074 = vdwg.mxu0
    %v2075 = vadd.f32 %v2032, %v2046
    %v2076 = vadd.f32 %v2033, %v2059
    %v2077 = vxor.u32 %v2075, 2147483648
    %v2078 = vxor.u32 %v2076, 2147483648
    %v2079 = vmul.f32 %v2077, 1.442695
    %v2080 = vpow.pop %v2079
    %v2081 = vmul.f32 %v2078, 1.442695
    %v2082 = vpow.pop %v2081
    %v2083 = vadd.f32 %v2080, 1.0
    %v2084 = vadd.f32 %v2082, 1.0
    %v2085 = vrcp.pop %v2083
    %v2086 = vmul.f32 %v2083, %v2085
    %v2087 = vsub.f32 1.0, %v2086
    %v2088 = vmul.f32 %v2085, %v2087
    %v2089 = vadd.f32 %v2085, %v2088
    %vm2090 = vweird.f32 %v2083
    %vm2091 = vweird.f32 %v2085
    %vm2092 = vmor %vm2090, %vm2091
    %v2093 = vsel %vm2092, %v2085, %v2089
    %v2094 = vand.u32 2147483647, %v2083
    %vm2095 = vcmp.eq.f32.partialorder %v2094, 8.507059e+37
    %v2096 = vand.u32 %v2083, 2147483648
    %v2097 = vor.u32 1.1754944e-38, %v2096
    %v2098 = vsel %vm2095, %v2097, %v2093
    %v2099 = vmul.f32 1.0, %v2098
    %v2100 = vrcp.pop %v2084
    %v2101 = vmul.f32 %v2084, %v2100
    %v2102 = vsub.f32 1.0, %v2101
    %v2103 = vmul.f32 %v2100, %v2102
    %v2104 = vadd.f32 %v2100, %v2103
    %vm2105 = vweird.f32 %v2084
    %vm2106 = vweird.f32 %v2100
    %vm2107 = vmor %vm2105, %vm2106
    %v2108 = vsel %vm2107, %v2100, %v2104
    %v2109 = vand.u32 2147483647, %v2084
    %vm2110 = vcmp.eq.f32.partialorder %v2109, 8.507059e+37
    %v2111 = vand.u32 %v2084, 2147483648
    %v2112 = vor.u32 1.1754944e-38, %v2111
    %v2113 = vsel %vm2110, %v2112, %v2108
    %v2114 = vmul.f32 1.0, %v2113
    %v2115 = vadd.f32 %v2072, %v1624
    %v2116 = vmul.f32 %v2099, %v2115
    %v2117 = vadd.f32 %v2034, %v2116
    %v2118 = vtanh.pop %v2117
    %v2119 = vsub.f32 1.0, %v2114
    %v2120 = vmul.f32 %v2119, %v2118
    %v2121 = vmul.f32 %v2114, %v2030
    %v2122 = vadd.f32 %v2120, %v2121
    %2123 = vst [vmem:[#allocation4 + $0x18] sm:$0xff] %v2122
    %v2124 = vld [vmem:[#allocation2 + $0x60] sm:$0xff]
    %v2125 = vld [vmem:[#allocation2 + $0x68] sm:$0xff]
    %v2126 = vld [vmem:[#allocation2 + $0x70] sm:$0xff]
    %v2127 = vpack.c.bf16 %v2122, %v2122
    %2128 = vmatpush.bf16.msra.mxu0 %v1733
    %2129 = vmatpush.bf16.msra.mxu0 %v1730
    %2130 = vmatpush.bf16.msra.mxu0 %v1727
    %2131 = vmatpush.bf16.msra.mxu0 %v1724
    %2132 = vmatpush.bf16.msra.mxu0 %v1721
    %2133 = vmatpush.bf16.msra.mxu0 %v1718
    %2134 = vmatpush.bf16.msra.mxu0 %v1715
    %2135 = vmatpush.bf16.msra.mxu0 %v1712
    %2136 = vmatmul.bf16.gmra.mxu0 %v2127
    %v2137 = vpop.f32.mrf.mxu0
    %v2138 = vadd.f32 0.0, %v2137
    %v2139 = vpop.f32.mrf.mxu0
    %2140 = vdwg.mxu0
    %2141 = vmatpush.bf16.msra.mxu0 %v1734
    %2142 = vmatpush.bf16.msra.mxu0 %v1731
    %2143 = vmatpush.bf16.msra.mxu0 %v1728
    %2144 = vmatpush.bf16.msra.mxu0 %v1725
    %2145 = vmatpush.bf16.msra.mxu0 %v1722
    %2146 = vmatpush.bf16.msra.mxu0 %v1719
    %2147 = vmatpush.bf16.msra.mxu0 %v1716
    %2148 = vmatpush.bf16.msra.mxu0 %v1713
    %2149 = vmatmul.bf16.gmra.mxu0 %v2127
    %v2150 = vpop.f32.mrf.mxu0
    %v2151 = vadd.f32 0.0, %v2150
    %v2152 = vpop.f32.mrf.mxu0
    %2153 = vdwg.mxu0
    %2154 = vmatpush.bf16.msra.mxu0 %v1735
    %2155 = vmatpush.bf16.msra.mxu0 %v1732
    %2156 = vmatpush.bf16.msra.mxu0 %v1729
    %2157 = vmatpush.bf16.msra.mxu0 %v1726
    %2158 = vmatpush.bf16.msra.mxu0 %v1723
    %2159 = vmatpush.bf16.msra.mxu0 %v1720
    %2160 = vmatpush.bf16.msra.mxu0 %v1717
    %2161 = vmatpush.bf16.msra.mxu0 %v1714
    %2162 = vmatmul.bf16.gmra.mxu0 %v2127
    %v2163 = vpop.f32.mrf.mxu0
    %v2164 = vadd.f32 0.0, %v2163
    %v2165 = vpop.f32.mrf.mxu0
    %2166 = vdwg.mxu0
    %v2167 = vadd.f32 %v2124, %v2138
    %v2168 = vadd.f32 %v2125, %v2151
    %v2169 = vxor.u32 %v2167, 2147483648
    %v2170 = vxor.u32 %v2168, 2147483648
    %v2171 = vmul.f32 %v2169, 1.442695
    %v2172 = vpow.pop %v2171
    %v2173 = vmul.f32 %v2170, 1.442695
    %v2174 = vpow.pop %v2173
    %v2175 = vadd.f32 %v2172, 1.0
    %v2176 = vadd.f32 %v2174, 1.0
    %v2177 = vrcp.pop %v2175
    %v2178 = vmul.f32 %v2175, %v2177
    %v2179 = vsub.f32 1.0, %v2178
    %v2180 = vmul.f32 %v2177, %v2179
    %v2181 = vadd.f32 %v2177, %v2180
    %vm2182 = vweird.f32 %v2175
    %vm2183 = vweird.f32 %v2177
    %vm2184 = vmor %vm2182, %vm2183
    %v2185 = vsel %vm2184, %v2177, %v2181
    %v2186 = vand.u32 2147483647, %v2175
    %vm2187 = vcmp.eq.f32.partialorder %v2186, 8.507059e+37
    %v2188 = vand.u32 %v2175, 2147483648
    %v2189 = vor.u32 1.1754944e-38, %v2188
    %v2190 = vsel %vm2187, %v2189, %v2185
    %v2191 = vmul.f32 1.0, %v2190
    %v2192 = vrcp.pop %v2176
    %v2193 = vmul.f32 %v2176, %v2192
    %v2194 = vsub.f32 1.0, %v2193
    %v2195 = vmul.f32 %v2192, %v2194
    %v2196 = vadd.f32 %v2192, %v2195
    %vm2197 = vweird.f32 %v2176
    %vm2198 = vweird.f32 %v2192
    %vm2199 = vmor %vm2197, %vm2198
    %v2200 = vsel %vm2199, %v2192, %v2196
    %v2201 = vand.u32 2147483647, %v2176
    %vm2202 = vcmp.eq.f32.partialorder %v2201, 8.507059e+37
    %v2203 = vand.u32 %v2176, 2147483648
    %v2204 = vor.u32 1.1754944e-38, %v2203
    %v2205 = vsel %vm2202, %v2204, %v2200
    %v2206 = vmul.f32 1.0, %v2205
    %v2207 = vadd.f32 %v2164, %v1624
    %v2208 = vmul.f32 %v2191, %v2207
    %v2209 = vadd.f32 %v2126, %v2208
    %v2210 = vtanh.pop %v2209
    %v2211 = vsub.f32 1.0, %v2206
    %v2212 = vmul.f32 %v2211, %v2210
    %v2213 = vmul.f32 %v2206, %v2122
    %v2214 = vadd.f32 %v2212, %v2213
    %2215 = vst [vmem:[#allocation4 + $0x20] sm:$0xff] %v2214
    %v2216 = vld [vmem:[#allocation2 + $0x78] sm:$0xff]
    %v2217 = vld [vmem:[#allocation2 + $0x80] sm:$0xff]
    %v2218 = vld [vmem:[#allocation2 + $0x88] sm:$0xff]
    %v2219 = vpack.c.bf16 %v2214, %v2214
    %2220 = vmatpush.bf16.msra.mxu0 %v1733
    %2221 = vmatpush.bf16.msra.mxu0 %v1730
    %2222 = vmatpush.bf16.msra.mxu0 %v1727
    %2223 = vmatpush.bf16.msra.mxu0 %v1724
    %2224 = vmatpush.bf16.msra.mxu0 %v1721
    %2225 = vmatpush.bf16.msra.mxu0 %v1718
    %2226 = vmatpush.bf16.msra.mxu0 %v1715
    %2227 = vmatpush.bf16.msra.mxu0 %v1712
    %2228 = vmatmul.bf16.gmra.mxu0 %v2219
    %v2229 = vpop.f32.mrf.mxu0
    %v2230 = vadd.f32 0.0, %v2229
    %v2231 = vpop.f32.mrf.mxu0
    %2232 = vdwg.mxu0
    %2233 = vmatpush.bf16.msra.mxu0 %v1734
    %2234 = vmatpush.bf16.msra.mxu0 %v1731
    %2235 = vmatpush.bf16.msra.mxu0 %v1728
    %2236 = vmatpush.bf16.msra.mxu0 %v1725
    %2237 = vmatpush.bf16.msra.mxu0 %v1722
    %2238 = vmatpush.bf16.msra.mxu0 %v1719
    %2239 = vmatpush.bf16.msra.mxu0 %v1716
    %2240 = vmatpush.bf16.msra.mxu0 %v1713
    %2241 = vmatmul.bf16.gmra.mxu0 %v2219
    %v2242 = vpop.f32.mrf.mxu0
    %v2243 = vadd.f32 0.0, %v2242
    %v2244 = vpop.f32.mrf.mxu0
    %2245 = vdwg.mxu0
    %2246 = vmatpush.bf16.msra.mxu0 %v1735
    %2247 = vmatpush.bf16.msra.mxu0 %v1732
    %2248 = vmatpush.bf16.msra.mxu0 %v1729
    %2249 = vmatpush.bf16.msra.mxu0 %v1726
    %2250 = vmatpush.bf16.msra.mxu0 %v1723
    %2251 = vmatpush.bf16.msra.mxu0 %v1720
    %2252 = vmatpush.bf16.msra.mxu0 %v1717
    %2253 = vmatpush.bf16.msra.mxu0 %v1714
    %2254 = vmatmul.bf16.gmra.mxu0 %v2219
    %v2255 = vpop.f32.mrf.mxu0
    %v2256 = vadd.f32 0.0, %v2255
    %v2257 = vpop.f32.mrf.mxu0
    %2258 = vdwg.mxu0
    %v2259 = vadd.f32 %v2216, %v2230
    %v2260 = vadd.f32 %v2217, %v2243
    %v2261 = vxor.u32 %v2259, 2147483648
    %v2262 = vxor.u32 %v2260, 2147483648
    %v2263 = vmul.f32 %v2261, 1.442695
    %v2264 = vpow.pop %v2263
    %v2265 = vmul.f32 %v2262, 1.442695
    %v2266 = vpow.pop %v2265
    %v2267 = vadd.f32 %v2264, 1.0
    %v2268 = vadd.f32 %v2266, 1.0
    %v2269 = vrcp.pop %v2267
    %v2270 = vmul.f32 %v2267, %v2269
    %v2271 = vsub.f32 1.0, %v2270
    %v2272 = vmul.f32 %v2269, %v2271
    %v2273 = vadd.f32 %v2269, %v2272
    %vm2274 = vweird.f32 %v2267
    %vm2275 = vweird.f32 %v2269
    %vm2276 = vmor %vm2274, %vm2275
    %v2277 = vsel %vm2276, %v2269, %v2273
    %v2278 = vand.u32 2147483647, %v2267
    %vm2279 = vcmp.eq.f32.partialorder %v2278, 8.507059e+37
    %v2280 = vand.u32 %v2267, 2147483648
    %v2281 = vor.u32 1.1754944e-38, %v2280
    %v2282 = vsel %vm2279, %v2281, %v2277
    %v2283 = vmul.f32 1.0, %v2282
    %v2284 = vrcp.pop %v2268
    %v2285 = vmul.f32 %v2268, %v2284
    %v2286 = vsub.f32 1.0, %v2285
    %v2287 = vmul.f32 %v2284, %v2286
    %v2288 = vadd.f32 %v2284, %v2287
    %vm2289 = vweird.f32 %v2268
    %vm2290 = vweird.f32 %v2284
    %vm2291 = vmor %vm2289, %vm2290
    %v2292 = vsel %vm2291, %v2284, %v2288
    %v2293 = vand.u32 2147483647, %v2268
    %vm2294 = vcmp.eq.f32.partialorder %v2293, 8.507059e+37
    %v2295 = vand.u32 %v2268, 2147483648
    %v2296 = vor.u32 1.1754944e-38, %v2295
    %v2297 = vsel %vm2294, %v2296, %v2292
    %v2298 = vmul.f32 1.0, %v2297
    %v2299 = vadd.f32 %v2256, %v1624
    %v2300 = vmul.f32 %v2283, %v2299
    %v2301 = vadd.f32 %v2218, %v2300
    %v2302 = vtanh.pop %v2301
    %v2303 = vsub.f32 1.0, %v2298
    %v2304 = vmul.f32 %v2303, %v2302
    %v2305 = vmul.f32 %v2298, %v2214
    %v2306 = vadd.f32 %v2304, %v2305
    %2307 = vst [vmem:[#allocation4 + $0x28] sm:$0xff] %v2306
    %v2308 = vld [vmem:[#allocation2 + $0x90] sm:$0xff]
    %v2309 = vld [vmem:[#allocation2 + $0x98] sm:$0xff]
    %v2310 = vld [vmem:[#allocation2 + $0xa0] sm:$0xff]
    %v2311 = vpack.c.bf16 %v2306, %v2306
    %2312 = vmatpush.bf16.msra.mxu0 %v1733
    %2313 = vmatpush.bf16.msra.mxu0 %v1730
    %2314 = vmatpush.bf16.msra.mxu0 %v1727
    %2315 = vmatpush.bf16.msra.mxu0 %v1724
    %2316 = vmatpush.bf16.msra.mxu0 %v1721
    %2317 = vmatpush.bf16.msra.mxu0 %v1718
    %2318 = vmatpush.bf16.msra.mxu0 %v1715
    %2319 = vmatpush.bf16.msra.mxu0 %v1712
    %2320 = vmatmul.bf16.gmra.mxu0 %v2311
    %v2321 = vpop.f32.mrf.mxu0
    %v2322 = vadd.f32 0.0, %v2321
    %v2323 = vpop.f32.mrf.mxu0
    %2324 = vdwg.mxu0
    %2325 = vmatpush.bf16.msra.mxu0 %v1734
    %2326 = vmatpush.bf16.msra.mxu0 %v1731
    %2327 = vmatpush.bf16.msra.mxu0 %v1728
    %2328 = vmatpush.bf16.msra.mxu0 %v1725
    %2329 = vmatpush.bf16.msra.mxu0 %v1722
    %2330 = vmatpush.bf16.msra.mxu0 %v1719
    %2331 = vmatpush.bf16.msra.mxu0 %v1716
    %2332 = vmatpush.bf16.msra.mxu0 %v1713
    %2333 = vmatmul.bf16.gmra.mxu0 %v2311
    %v2334 = vpop.f32.mrf.mxu0
    %v2335 = vadd.f32 0.0, %v2334
    %v2336 = vpop.f32.mrf.mxu0
    %2337 = vdwg.mxu0
    %2338 = vmatpush.bf16.msra.mxu0 %v1735
    %2339 = vmatpush.bf16.msra.mxu0 %v1732
    %2340 = vmatpush.bf16.msra.mxu0 %v1729
    %2341 = vmatpush.bf16.msra.mxu0 %v1726
    %2342 = vmatpush.bf16.msra.mxu0 %v1723
    %2343 = vmatpush.bf16.msra.mxu0 %v1720
    %2344 = vmatpush.bf16.msra.mxu0 %v1717
    %2345 = vmatpush.bf16.msra.mxu0 %v1714
    %2346 = vmatmul.bf16.gmra.mxu0 %v2311
    %v2347 = vpop.f32.mrf.mxu0
    %v2348 = vadd.f32 0.0, %v2347
    %v2349 = vpop.f32.mrf.mxu0
    %2350 = vdwg.mxu0
    %v2351 = vadd.f32 %v2308, %v2322
    %v2352 = vadd.f32 %v2309, %v2335
    %v2353 = vxor.u32 %v2351, 2147483648
    %v2354 = vxor.u32 %v2352, 2147483648
    %v2355 = vmul.f32 %v2353, 1.442695
    %v2356 = vpow.pop %v2355
    %v2357 = vmul.f32 %v2354, 1.442695
    %v2358 = vpow.pop %v2357
    %v2359 = vadd.f32 %v2356, 1.0
    %v2360 = vadd.f32 %v2358, 1.0
    %v2361 = vrcp.pop %v2359
    %v2362 = vmul.f32 %v2359, %v2361
    %v2363 = vsub.f32 1.0, %v2362
    %v2364 = vmul.f32 %v2361, %v2363
    %v2365 = vadd.f32 %v2361, %v2364
    %vm2366 = vweird.f32 %v2359
    %vm2367 = vweird.f32 %v2361
    %vm2368 = vmor %vm2366, %vm2367
    %v2369 = vsel %vm2368, %v2361, %v2365
    %v2370 = vand.u32 2147483647, %v2359
    %vm2371 = vcmp.eq.f32.partialorder %v2370, 8.507059e+37
    %v2372 = vand.u32 %v2359, 2147483648
    %v2373 = vor.u32 1.1754944e-38, %v2372
    %v2374 = vsel %vm2371, %v2373, %v2369
    %v2375 = vmul.f32 1.0, %v2374
    %v2376 = vrcp.pop %v2360
    %v2377 = vmul.f32 %v2360, %v2376
    %v2378 = vsub.f32 1.0, %v2377
    %v2379 = vmul.f32 %v2376, %v2378
    %v2380 = vadd.f32 %v2376, %v2379
    %vm2381 = vweird.f32 %v2360
    %vm2382 = vweird.f32 %v2376
    %vm2383 = vmor %vm2381, %vm2382
    %v2384 = vsel %vm2383, %v2376, %v2380
    %v2385 = vand.u32 2147483647, %v2360
    %vm2386 = vcmp.eq.f32.partialorder %v2385, 8.507059e+37
    %v2387 = vand.u32 %v2360, 2147483648
    %v2388 = vor.u32 1.1754944e-38, %v2387
    %v2389 = vsel %vm2386, %v2388, %v2384
    %v2390 = vmul.f32 1.0, %v2389
    %v2391 = vadd.f32 %v2348, %v1624
    %v2392 = vmul.f32 %v2375, %v2391
    %v2393 = vadd.f32 %v2310, %v2392
    %v2394 = vtanh.pop %v2393
    %v2395 = vsub.f32 1.0, %v2390
    %v2396 = vmul.f32 %v2395, %v2394
    %v2397 = vmul.f32 %v2390, %v2306
    %v2398 = vadd.f32 %v2396, %v2397
    %2399 = vst [vmem:[#allocation4 + $0x30] sm:$0xff] %v2398
    %v2400 = vld [vmem:[#allocation2 + $0xa8] sm:$0xff]
    %v2401 = vld [vmem:[#allocation2 + $0xb0] sm:$0xff]
    %v2402 = vld [vmem:[#allocation2 + $0xb8] sm:$0xff]
    %v2403 = vpack.c.bf16 %v2398, %v2398
    %2404 = vmatpush.bf16.msra.mxu0 %v1733
    %2405 = vmatpush.bf16.msra.mxu0 %v1730
    %2406 = vmatpush.bf16.msra.mxu0 %v1727
    %2407 = vmatpush.bf16.msra.mxu0 %v1724
    %2408 = vmatpush.bf16.msra.mxu0 %v1721
    %2409 = vmatpush.bf16.msra.mxu0 %v1718
    %2410 = vmatpush.bf16.msra.mxu0 %v1715
    %2411 = vmatpush.bf16.msra.mxu0 %v1712
    %2412 = vmatmul.bf16.gmra.mxu0 %v2403
    %v2413 = vpop.f32.mrf.mxu0
    %v2414 = vadd.f32 0.0, %v2413
    %v2415 = vpop.f32.mrf.mxu0
    %2416 = vdwg.mxu0
    %2417 = vmatpush.bf16.msra.mxu0 %v1734
    %2418 = vmatpush.bf16.msra.mxu0 %v1731
    %2419 = vmatpush.bf16.msra.mxu0 %v1728
    %2420 = vmatpush.bf16.msra.mxu0 %v1725
    %2421 = vmatpush.bf16.msra.mxu0 %v1722
    %2422 = vmatpush.bf16.msra.mxu0 %v1719
    %2423 = vmatpush.bf16.msra.mxu0 %v1716
    %2424 = vmatpush.bf16.msra.mxu0 %v1713
    %2425 = vmatmul.bf16.gmra.mxu0 %v2403
    %v2426 = vpop.f32.mrf.mxu0
    %v2427 = vadd.f32 0.0, %v2426
    %v2428 = vpop.f32.mrf.mxu0
    %2429 = vdwg.mxu0
    %2430 = vmatpush.bf16.msra.mxu0 %v1735
    %2431 = vmatpush.bf16.msra.mxu0 %v1732
    %2432 = vmatpush.bf16.msra.mxu0 %v1729
    %2433 = vmatpush.bf16.msra.mxu0 %v1726
    %2434 = vmatpush.bf16.msra.mxu0 %v1723
    %2435 = vmatpush.bf16.msra.mxu0 %v1720
    %2436 = vmatpush.bf16.msra.mxu0 %v1717
    %2437 = vmatpush.bf16.msra.mxu0 %v1714
    %2438 = vmatmul.bf16.gmra.mxu0 %v2403
    %v2439 = vpop.f32.mrf.mxu0
    %v2440 = vadd.f32 0.0, %v2439
    %v2441 = vpop.f32.mrf.mxu0
    %2442 = vdwg.mxu0
    %v2443 = vadd.f32 %v2400, %v2414
    %v2444 = vadd.f32 %v2401, %v2427
    %v2445 = vxor.u32 %v2443, 2147483648
    %v2446 = vxor.u32 %v2444, 2147483648
    %v2447 = vmul.f32 %v2445, 1.442695
    %v2448 = vpow.pop %v2447
    %v2449 = vmul.f32 %v2446, 1.442695
    %v2450 = vpow.pop %v2449
    %v2451 = vadd.f32 %v2448, 1.0
    %v2452 = vadd.f32 %v2450, 1.0
    %v2453 = vrcp.pop %v2451
    %v2454 = vmul.f32 %v2451, %v2453
    %v2455 = vsub.f32 1.0, %v2454
    %v2456 = vmul.f32 %v2453, %v2455
    %v2457 = vadd.f32 %v2453, %v2456
    %vm2458 = vweird.f32 %v2451
    %vm2459 = vweird.f32 %v2453
    %vm2460 = vmor %vm2458, %vm2459
    %v2461 = vsel %vm2460, %v2453, %v2457
    %v2462 = vand.u32 2147483647, %v2451
    %vm2463 = vcmp.eq.f32.partialorder %v2462, 8.507059e+37
    %v2464 = vand.u32 %v2451, 2147483648
    %v2465 = vor.u32 1.1754944e-38, %v2464
    %v2466 = vsel %vm2463, %v2465, %v2461
    %v2467 = vmul.f32 1.0, %v2466
    %v2468 = vrcp.pop %v2452
    %v2469 = vmul.f32 %v2452, %v2468
    %v2470 = vsub.f32 1.0, %v2469
    %v2471 = vmul.f32 %v2468, %v2470
    %v2472 = vadd.f32 %v2468, %v2471
    %vm2473 = vweird.f32 %v2452
    %vm2474 = vweird.f32 %v2468
    %vm2475 = vmor %vm2473, %vm2474
    %v2476 = vsel %vm2475, %v2468, %v2472
    %v2477 = vand.u32 2147483647, %v2452
    %vm2478 = vcmp.eq.f32.partialorder %v2477, 8.507059e+37
    %v2479 = vand.u32 %v2452, 2147483648
    %v2480 = vor.u32 1.1754944e-38, %v2479
    %v2481 = vsel %vm2478, %v2480, %v2476
    %v2482 = vmul.f32 1.0, %v2481
    %v2483 = vadd.f32 %v2440, %v1624
    %v2484 = vmul.f32 %v2467, %v2483
    %v2485 = vadd.f32 %v2402, %v2484
    %v2486 = vtanh.pop %v2485
    %v2487 = vsub.f32 1.0, %v2482
    %v2488 = vmul.f32 %v2487, %v2486
    %v2489 = vmul.f32 %v2482, %v2398
    %v2490 = vadd.f32 %v2488, %v2489
    %2491 = vst [vmem:[#allocation4 + $0x38] sm:$0xff] %v2490
    %s2492 = scalar_lea.vmem %s13, 8
    %2493 = vst [vmem:[%s2492] sm:$0xff] %v2490
    %v2494 = vld [vmem:[#allocation4] sm:$0xff]
    %v2495 = vld [vmem:[#allocation4 + $0x8] sm:$0xff]
    %v2496 = vld [vmem:[#allocation4 + $0x10] sm:$0xff]
    %v2497 = vld [vmem:[#allocation4 + $0x18] sm:$0xff]
    %v2498 = vld [vmem:[#allocation4 + $0x20] sm:$0xff]
    %v2499 = vld [vmem:[#allocation4 + $0x28] sm:$0xff]
    %v2500 = vld [vmem:[#allocation4 + $0x30] sm:$0xff]
    %v2501 = vld [vmem:[#allocation4 + $0x38] sm:$0xff]
    %v2502 = vpack.c.bf16 %v2495, %v2494
    %v2503 = vpack.c.bf16 %v2497, %v2496
    %v2504 = vpack.c.bf16 %v2499, %v2498
    %v2505 = vpack.c.bf16 %v2501, %v2500
    %v2506 = vld [vmem:[%s10] sm:$0xf]
    %v2507 = vld [vmem:[%s10 + $0x4] sm:$0xf]
    %v2508 = vld [vmem:[%s10 + $0x8] sm:$0xf]
    %v2509 = vld [vmem:[%s10 + $0xc] sm:$0xf]
    %v2510 = vld [vmem:[%s10 + $0x10] sm:$0xf]
    %v2511 = vld [vmem:[%s10 + $0x14] sm:$0xf]
    %v2512 = vld [vmem:[%s10 + $0x18] sm:$0xf]
    %v2513 = vld [vmem:[%s10 + $0x1c] sm:$0xf]
    %v2514 = vld [vmem:[%s10 + $0x20] sm:$0xf]
    %v2515 = vld [vmem:[%s10 + $0x24] sm:$0xf]
    %v2516 = vld [vmem:[%s10 + $0x28] sm:$0xf]
    %v2517 = vld [vmem:[%s10 + $0x2c] sm:$0xf]
    %v2518 = vld [vmem:[%s10 + $0x30] sm:$0xf]
    %v2519 = vld [vmem:[%s10 + $0x34] sm:$0xf]
    %v2520 = vld [vmem:[%s10 + $0x38] sm:$0xf]
    %v2521 = vld [vmem:[%s10 + $0x3c] sm:$0xf]
    %v2522 = vld [vmem:[%s11] sm:$0x1]
    %v2524 = vperm.slane %v2522, 0
    %v2542 = vunpack.c.l.b16 %v2506
    %v2543 = vunpack.c.l.b16 %v2507
    %v2544 = vunpack.c.l.b16 %v2508
    %v2545 = vunpack.c.l.b16 %v2509
    %v2546 = vunpack.c.l.b16 %v2510
    %v2547 = vunpack.c.l.b16 %v2511
    %v2548 = vunpack.c.l.b16 %v2512
    %v2549 = vunpack.c.l.b16 %v2513
    %v2550 = vunpack.c.l.b16 %v2514
    %v2551 = vunpack.c.l.b16 %v2515
    %v2552 = vunpack.c.l.b16 %v2516
    %v2553 = vunpack.c.l.b16 %v2517
    %v2554 = vunpack.c.l.b16 %v2518
    %v2555 = vunpack.c.l.b16 %v2519
    %v2556 = vunpack.c.l.b16 %v2520
    %v2557 = vunpack.c.l.b16 %v2521
    %v2558 = vpack.c.b16 %v2543, %v2542
    %v2559 = vpack.c.b16 %v2545, %v2544
    %v2560 = vpack.c.b16 %v2547, %v2546
    %v2561 = vpack.c.b16 %v2549, %v2548
    %v2562 = vpack.c.b16 %v2551, %v2550
    %v2563 = vpack.c.b16 %v2553, %v2552
    %v2564 = vpack.c.b16 %v2555, %v2554
    %v2565 = vpack.c.b16 %v2557, %v2556
    %2574 = vmatpush.bf16.msra.mxu0 %v2565
    %2575 = vmatpush.bf16.msra.mxu0 %v2564
    %2576 = vmatpush.bf16.msra.mxu0 %v2563
    %2577 = vmatpush.bf16.msra.mxu0 %v2562
    %2578 = vmatpush.bf16.msra.mxu0 %v2561
    %2579 = vmatpush.bf16.msra.mxu0 %v2560
    %2580 = vmatpush.bf16.msra.mxu0 %v2559
    %2581 = vmatpush.bf16.msra.mxu0 %v2558
    %2582 = vmatmul.bf16.gmra.mxu0 %v2502
    %v2583 = vpop.f32.mrf.mxu0
    %v2584 = vadd.f32 %v2524, %v2583
    %v2585 = vpop.f32.mrf.mxu0
    %v2586 = vadd.f32 %v2524, %v2585
    %2587 = vmatmul.bf16.gmra.mxu0 %v2503
    %v2588 = vpop.f32.mrf.mxu0
    %v2589 = vadd.f32 %v2524, %v2588
    %v2590 = vpop.f32.mrf.mxu0
    %v2591 = vadd.f32 %v2524, %v2590
    %2592 = vmatmul.bf16.gmra.mxu0 %v2504
    %v2593 = vpop.f32.mrf.mxu0
    %v2594 = vadd.f32 %v2524, %v2593
    %v2595 = vpop.f32.mrf.mxu0
    %v2596 = vadd.f32 %v2524, %v2595
    %2597 = vmatmul.bf16.gmra.mxu0 %v2505
    %v2598 = vpop.f32.mrf.mxu0
    %v2599 = vadd.f32 %v2524, %v2598
    %v2600 = vpop.f32.mrf.mxu0
    %v2601 = vadd.f32 %v2524, %v2600
    %2602 = vdwg.mxu0
    %2603 = vst [vmem:[%s12] sm:$0xff] %v2584
    %2604 = vst [vmem:[%s12 + $0x8] sm:$0xff] %v2586
    %2605 = vst [vmem:[%s12 + $0x10] sm:$0xff] %v2589
    %2606 = vst [vmem:[%s12 + $0x18] sm:$0xff] %v2591
    %2607 = vst [vmem:[%s12 + $0x20] sm:$0xff] %v2594
    %2608 = vst [vmem:[%s12 + $0x28] sm:$0xff] %v2596
    %2609 = vst [vmem:[%s12 + $0x30] sm:$0xff] %v2599
    %2610 = vst [vmem:[%s12 + $0x38] sm:$0xff] %v2601
    // Predicated region
    $region66: #{vae_decode_pallas.1} parent=1 // pred_check
      _
    $region67: #{vae_decode_pallas.1} parent=1 // pred_check_branch
      %2612 = sbr.rel (0) target = $region69
    $region68: #{vae_decode_pallas.1} parent=1 // pred_region
      _
    $region69: #{vae_decode_pallas.1} parent=1 // pred_fallthru
      _
    // Predicated region
    $region70: #{vae_decode_pallas.1} parent=1 // pred_check
      _
    $region71: #{vae_decode_pallas.1} parent=1 // pred_check_branch
      %2614 = sbr.rel (0) target = $region73
    $region72: #{vae_decode_pallas.1} parent=1 // pred_region
      _
    $region73: #{vae_decode_pallas.1} parent=1 // pred_fallthru
      _
    // Predicated region
    $region74: #{vae_decode_pallas.1} parent=1 // pred_check
      _
    $region75: #{vae_decode_pallas.1} parent=1 // pred_check_branch
      %2616 = sbr.rel (0) target = $region77
    $region76: #{vae_decode_pallas.1} parent=1 // pred_region
      _
    $region77: #{vae_decode_pallas.1} parent=1 // pred_fallthru
      _
    // Predicated region
    $region78: #{vae_decode_pallas.1} parent=1 // pred_check
      _
    $region79: #{vae_decode_pallas.1} parent=1 // pred_check_branch
      %2618 = sbr.rel (0) target = $region81
    $region80: #{vae_decode_pallas.1} parent=1 // pred_region
      _
    $region81: #{vae_decode_pallas.1} parent=1 // pred_fallthru
      _
    %2619 = vsyncpa [#allocation6], 1
    %2620 = vsyncpa [#allocation8], 1
    %2621 = vsyncpa [#allocation11], 1

</llo_original>
